<compile_context>
chip_gen: v6e
topology: v6e:2x2x1
jax: 0.10.0
libtpu: 0.0.40
codegen_flags: <defaults>
</compile_context>

<pallas_src>
import functools
import math

import jax
import jax.numpy as jnp
import numpy as np
from jax.experimental import pallas as pl
from jax.experimental.pallas import tpu as pltpu

LANE = 128


# ----------------------------- in-kernel helpers ----------------------------

def _gelu_exact(x):
    """Exact (erf-based) GELU; erf via Abramowitz-Stegun 7.1.26 (|err| < 1.5e-7).
    Uses only mul/add/div/exp/abs/select, all of which lower on Mosaic."""
    z = x * (1.0 / math.sqrt(2.0))
    az = jnp.abs(z)
    t = 1.0 / (1.0 + 0.3275911 * az)
    poly = ((((1.061405429 * t - 1.453152027) * t + 1.421413741) * t
             - 0.284496736) * t + 0.254829592) * t
    erf_abs = 1.0 - poly * jnp.exp(-az * az)
    erf = jnp.where(z >= 0, erf_abs, -erf_abs)
    return 0.5 * x * (1.0 + erf)


# ----------------------------- Pallas kernels ------------------------------

def _pre_attn_kernel(x_ref, spe_ref, gamma_ref, beta_ref,
                     wq_ref, wk_ref, wv_ref, bq_ref, bk_ref, bv_ref,
                     xs_ref, q_ref, k_ref, v_ref, *, eps):
    """Per batch element: x+SPE -> AdaIN (instance norm over L, precomputed gamma/beta)
    -> separate q/k/v projections stored lane-dense in bf16."""
    H, W, C = x_ref.shape[1], x_ref.shape[2], x_ref.shape[3]
    L = H * W

    x = x_ref[0].reshape(L, C) + spe_ref[...]                     # (L, C) f32
    xs_ref[0] = x.reshape(H, W, C)                                # shortcut for residual

    mean = jnp.mean(x, axis=0, keepdims=True)                     # InstanceNorm1d: over L
    var = jnp.mean((x - mean) ** 2, axis=0, keepdims=True)        # biased variance
    xn = gamma_ref[0] * ((x - mean) * jax.lax.rsqrt(var + eps)) + beta_ref[0]
    xn16 = xn.astype(jnp.bfloat16)

    def proj(w_ref, b_ref):
        y = jnp.dot(xn16, w_ref[...], preferred_element_type=jnp.float32) + b_ref[...]
        return y.reshape(H, W, C).astype(jnp.bfloat16)            # bf16 inter-kernel traffic

    q_ref[0] = proj(wq_ref, bq_ref)
    k_ref[0] = proj(wk_ref, bk_ref)
    v_ref[0] = proj(wv_ref, bv_ref)


def _window_attn_kernel(*refs, scale, nh, ws, has_mask):
    """Per (batch, window-row): all windows in the row and all heads.  In-kernel window
    partition, per-head attention, fused head-merge + output projection, in-kernel window
    reverse, lane-dense store."""
    if has_mask:
        q_ref, k_ref, v_ref, bias_ref, wproj_ref, mask_ref, o_ref = refs
    else:
        q_ref, k_ref, v_ref, bias_ref, wproj_ref, o_ref = refs
        mask_ref = None

    _, _, Wfull, C = q_ref.shape                                  # block (1, ws, W, C)
    nww = Wfull // ws
    N = ws * ws
    hd = C // nh
    C_out = o_ref.shape[3]

    def windows(ref):
        # (ws, W, C) -> (nww, N, C); f32 reshapes/leading transposes are 8-sublane aligned.
        x = ref[0].astype(jnp.float32)
        x = x.reshape(ws, nww, ws, C)
        x = jnp.transpose(x, (1, 0, 2, 3))
        return x.reshape(nww, N, C).astype(jnp.bfloat16)

    qw, kw, vw = windows(q_ref), windows(k_ref), windows(v_ref)
    mask = mask_ref[...] if has_mask else None                    # (nww, N, N)

    outs = []
    for h in range(nh):                                           # per-head scores (K=hd is
        lo, hi = h * hd, (h + 1) * hd                             # inherent to the algorithm)
        s = jax.lax.dot_general(qw[:, :, lo:hi], kw[:, :, lo:hi],
                                (((2,), (2,)), ((0,), (0,))),
                                preferred_element_type=jnp.float32)    # (nww, N, N)
        s = s * scale + bias_ref[h]
        if has_mask:
            s = s + mask
        s = s - jnp.max(s, axis=-1, keepdims=True)
        p = jnp.exp(s)
        # approx reciprocal lives on the EUP (free slot); ~2^-12 rel-err vs exact softmax.
        p = p * pl.reciprocal(jnp.sum(p, axis=-1, keepdims=True), approx=True)
        outs.append(jax.lax.dot_general(p.astype(jnp.bfloat16), vw[:, :, lo:hi],
                                        (((2,), (1,)), ((0,), (0,))),
                                        preferred_element_type=jnp.float32))   # (nww, N, hd)

    # Head-merge + attention output projection as ONE matmul with K = C (not K = hd).
    o = jnp.concatenate(outs, axis=-1).reshape(nww * N, C).astype(jnp.bfloat16)
    out = jnp.dot(o, wproj_ref[...], preferred_element_type=jnp.float32)       # (nww*N, C_out)

    # In-kernel window reverse -> lane-dense (ws, W, C_out) store.
    out = out.reshape(nww, ws, ws, C_out)
    out = jnp.transpose(out, (1, 0, 2, 3)).reshape(ws, Wfull, C_out)
    o_ref[0] = out


def _post_attn_kernel(short_ref, attn_ref, gamma_ref, beta_ref, bproj_ref,
                      wfc1_ref, bfc1_ref, wfc2_ref, bfc2_ref,
                      lng_ref, lnb_ref, wout_ref, bout_ref, wrgb_ref, brgb_ref,
                      y_ref, rgb_ref, *, eps):
    """Per batch element: residual-1 -> AdaIN(norm2) -> MLP -> residual-2 -> tRGB
    and (LayerNorm + out-projection), the latter pre-upsample.  Outputs are 128-padded."""
    H, W, C = short_ref.shape[1], short_ref.shape[2], short_ref.shape[3]
    L = H * W

    x = short_ref[0].reshape(L, C) + attn_ref[0].reshape(L, C) + bproj_ref[...]

    mean = jnp.mean(x, axis=0, keepdims=True)
    var = jnp.mean((x - mean) ** 2, axis=0, keepdims=True)
    xn = gamma_ref[0] * ((x - mean) * jax.lax.rsqrt(var + eps)) + beta_ref[0]

    h = (jnp.dot(xn.astype(jnp.bfloat16), wfc1_ref[...],
                 preferred_element_type=jnp.float32) + bfc1_ref[...])
    h = _gelu_exact(h)
    h = (jnp.dot(h.astype(jnp.bfloat16), wfc2_ref[...],
                 preferred_element_type=jnp.float32) + bfc2_ref[...])
    x = x + h                                                     # swin-block output (L, C)

    xb = x.astype(jnp.bfloat16)
    # tRGB (1x1 conv C -> 3), weight zero-padded to 128 lanes for an unmasked store.
    rgb = jnp.dot(xb, wrgb_ref[...], preferred_element_type=jnp.float32) + brgb_ref[...]
    rgb_ref[0] = rgb.reshape(H, W, rgb.shape[-1])

    # LayerNorm + out-projection (applied pre-upsample; exact for nearest 2x).
    m2 = jnp.mean(x, axis=-1, keepdims=True)
    v2 = jnp.mean((x - m2) ** 2, axis=-1, keepdims=True)
    xl = (x - m2) * jax.lax.rsqrt(v2 + eps) * lng_ref[...] + lnb_ref[...]
    y = (jnp.dot(xl.astype(jnp.bfloat16), wout_ref[...],
                 preferred_element_type=jnp.float32) + bout_ref[...])
    y_ref[0] = y.reshape(H, W, y.shape[-1])


# ----------------------------- kernel wrappers ------------------------------

def _const_spec(a):
    return pl.BlockSpec(a.shape, lambda *_: (0,) * a.ndim)


def _tpu_params(semantics, vmem_bytes):
    # Raise the scoped-VMEM limit above the 16/32 MiB defaults (v5e/v6e) when the per-step
    # working set needs it; cap at 64 MiB so the same request is still valid on v7x.
    mib = (int(vmem_bytes) + (1 << 20) - 1) >> 20
    limit = min(64, max(32, mib)) << 20
    return pltpu.CompilerParams(dimension_semantics=semantics, vmem_limit_bytes=limit)


def pallas_pre_attention(x, spe, gamma, beta, w_q, w_k, w_v, b_q, b_k, b_v, eps=1e-5):
    B, H, W, C = x.shape
    L = H * W
    per_batch = pl.BlockSpec((1, H, W, C), lambda b: (b, 0, 0, 0))
    gb_spec = pl.BlockSpec((1, 1, C), lambda b: (b, 0, 0))
    # rough per-step working set: f32 x/shortcut/intermediates + bf16 q/k/v + weights
    est = 40 * L * C + 8 * C * C
    return pl.pallas_call(
        functools.partial(_pre_attn_kernel, eps=eps),
        out_shape=(jax.ShapeDtypeStruct((B, H, W, C), jnp.float32),
                   jax.ShapeDtypeStruct((B, H, W, C), jnp.bfloat16),
                   jax.ShapeDtypeStruct((B, H, W, C), jnp.bfloat16),
                   jax.ShapeDtypeStruct((B, H, W, C), jnp.bfloat16)),
        grid=(B,),
        in_specs=[per_batch, _const_spec(spe), gb_spec, gb_spec,
                  _const_spec(w_q), _const_spec(w_k), _const_spec(w_v),
                  _const_spec(b_q), _const_spec(b_k), _const_spec(b_v)],
        out_specs=(per_batch, per_batch, per_batch, per_batch),
        compiler_params=_tpu_params(("parallel",), est),
    )(x, spe, gamma, beta, w_q, w_k, w_v, b_q, b_k, b_v)


def pallas_window_attention(q, k, v, rel_bias, w_proj, mask, *, scale, ws, nh):
    """q/k/v: (B,H,W,C) bf16 lane-dense; rel_bias: (nh,N,N) f32; w_proj: (C,C_out) bf16;
    mask: None or (n_win,N,N) f32.  Returns (B,H,W,C_out) f32 (window-reversed)."""
    B, H, W, C = q.shape
    nwh, nww = H // ws, W // ws
    N = ws * ws
    C_out = w_proj.shape[-1]
    qkv_spec = pl.BlockSpec((1, ws, W, C), lambda b, i: (b, i, 0, 0))
    in_specs = [qkv_spec, qkv_spec, qkv_spec, _const_spec(rel_bias), _const_spec(w_proj)]
    args = [q, k, v, rel_bias, w_proj]
    if mask is not None:
        # full window-row of masks per step, resident alongside the batched windows
        in_specs.append(pl.BlockSpec((nww, N, N), lambda b, i: (i, 0, 0)))
        args.append(mask)
    est = (3 * ws * W * C * (2 * 2 + 4 + 2)      # bf16 dbl-buffered tiles + f32/bf16 copies
           + 2 * 2 * ws * W * C_out * 4          # output double buffer + f32 result
           + (nh + 4 * nww) * N * N * 4          # bias + live score/prob tiles
           + 2 * C * C_out)
    return pl.pallas_call(
        functools.partial(_window_attn_kernel, scale=scale, nh=nh, ws=ws,
                          has_mask=mask is not None),
        out_shape=jax.ShapeDtypeStruct((B, H, W, C_out), jnp.float32),
        grid=(B, nwh),
        in_specs=in_specs,
        out_specs=pl.BlockSpec((1, ws, W, C_out), lambda b, i: (b, i, 0, 0)),
        compiler_params=_tpu_params(("parallel", "parallel"), est),
    )(*args)


def pallas_post_attention(shortcut, attn, gamma, beta, b_proj,
                          w_fc1, b_fc1, w_fc2, b_fc2,
                          ln_g, ln_b, w_out, b_out, w_rgb, b_rgb, eps=1e-5):
    B, H, W, C = shortcut.shape
    L = H * W
    C_out = w_out.shape[-1]
    C_rgb = w_rgb.shape[-1]
    per_batch_c = pl.BlockSpec((1, H, W, C), lambda b: (b, 0, 0, 0))
    gb_spec = pl.BlockSpec((1, 1, C), lambda b: (b, 0, 0))
    # dominated by the (L, 4C) f32 MLP hidden + double-buffered residual inputs/outputs
    est = (2 * 2 * L * C * 4 + 2 * L * 4 * C * 4 + 8 * L * C
           + 2 * L * (C_out + C_rgb) * 4
           + 2 * (4 * C * C * 2 + C * (C_out + C_rgb)))
    return pl.pallas_call(
        functools.partial(_post_attn_kernel, eps=eps),
        out_shape=(jax.ShapeDtypeStruct((B, H, W, C_out), jnp.float32),
                   jax.ShapeDtypeStruct((B, H, W, C_rgb), jnp.float32)),
        grid=(B,),
        in_specs=[per_batch_c, per_batch_c, gb_spec, gb_spec,
                  _const_spec(b_proj),
                  _const_spec(w_fc1), _const_spec(b_fc1),
                  _const_spec(w_fc2), _const_spec(b_fc2),
                  _const_spec(ln_g), _const_spec(ln_b),
                  _const_spec(w_out), _const_spec(b_out),
                  _const_spec(w_rgb), _const_spec(b_rgb)],
        out_specs=(pl.BlockSpec((1, H, W, C_out), lambda b: (b, 0, 0, 0)),
                   pl.BlockSpec((1, H, W, C_rgb), lambda b: (b, 0, 0, 0))),
        compiler_params=_tpu_params(("parallel",), est),
    )(shortcut, attn, gamma, beta, b_proj, w_fc1, b_fc1, w_fc2, b_fc2,
      ln_g, ln_b, w_out, b_out, w_rgb, b_rgb)


# --------------------------------- glue ------------------------------------

def sinusoidal_table(num_pos, embedding_dim):
    """fairseq-style table; padding_idx=0 row zeroed, div_half_dim=False (host numpy)."""
    half = embedding_dim // 2
    factor = math.log(10000.0) / (half - 1)
    freqs = np.exp(np.arange(half, dtype=np.float32) * -factor)
    args = np.arange(num_pos, dtype=np.float32)[:, None] * freqs[None, :]
    emb = np.concatenate([np.sin(args), np.cos(args)], axis=1)
    emb[0, :] = 0.0
    return emb.astype(np.float32)


def make_spe_grid2d(H, W, channel_dim):
    """SinusoidalPositionalEmbedding.make_grid2d in HWC (batch-independent, host constant)."""
    D = channel_dim // 2
    table = sinusoidal_table(max(H, W) + 1, D)
    x_emb = table[1:W + 1]                                  # (W, D) column positions
    y_emb = table[1:H + 1]                                  # (H, D) row positions
    x_grid = np.broadcast_to(x_emb[None, :, :], (H, W, D))
    y_grid = np.broadcast_to(y_emb[:, None, :], (H, W, D))
    return np.concatenate([x_grid, y_grid], axis=-1).astype(np.float32)


def relative_position_index(ws):
    coords = np.stack(np.meshgrid(np.arange(ws), np.arange(ws), indexing="ij"))
    coords_flatten = coords.reshape(2, -1)
    rel = coords_flatten[:, :, None] - coords_flatten[:, None, :]
    rel = rel.transpose(1, 2, 0).astype(np.int64)
    rel[:, :, 0] += ws - 1
    rel[:, :, 1] += ws - 1
    rel[:, :, 0] *= 2 * ws - 1
    return rel.sum(-1)                                      # (N, N)


def compute_shift_attn_mask(H, W, ws, shift):
    if shift == 0:
        return None
    img_mask = np.zeros((1, H, W, 1), dtype=np.float32)
    cnt = 0
    for h in (slice(0, -ws), slice(-ws, -shift), slice(-shift, None)):
        for w in (slice(0, -ws), slice(-ws, -shift), slice(-shift, None)):
            img_mask[:, h, w, :] = cnt
            cnt += 1
    m = img_mask.reshape(1, H // ws, ws, W // ws, ws, 1).transpose(0, 1, 3, 2, 4, 5)
    mask_windows = m.reshape(-1, ws * ws)
    attn_mask = mask_windows[:, None, :] - mask_windows[:, :, None]
    return jnp.asarray(np.where(attn_mask != 0, -100.0, 0.0).astype(np.float32))


def _pad_cols(w, b, m=LANE):
    """Zero-pad a (C, n) weight / (n,) bias to n rounded up to a multiple of m lanes."""
    n = w.shape[1]
    n_pad = ((n + m - 1) // m) * m
    if n_pad == n:
        return w, b
    return (jnp.pad(w, ((0, 0), (0, n_pad - n))),
            jnp.pad(b, ((0, n_pad - n),)))


# ------------------------------ parameters ---------------------------------

def init_params(key, dim, channel_dim, channel_dim_out, style_dim, n_heads, window_size):
    C = channel_dim
    ws = min(window_size, dim)
    shift = (window_size // 2) if dim > window_size else 0
    nh_half = n_heads // 2
    keys = jax.random.split(key, 12)

    def nrm(k, shape, std=0.02):
        return std * jax.random.normal(k, shape, jnp.float32)

    def equal_linear_w(k):  # EqualLinear: randn weight, forward uses weight * 1/sqrt(in_dim)
        return (jax.random.normal(k, (2 * C, style_dim), jnp.float32)
                * (1.0 / math.sqrt(style_dim))).T            # stored (style_dim, 2C)

    adain_bias = jnp.concatenate([jnp.ones((C,), jnp.float32),
                                  jnp.zeros((C,), jnp.float32)])

    # Weights kept f32 (checkpoint-compatible); cast to bf16 only at the kernel boundary.
    params = dict(
        adain1_w=equal_linear_w(keys[0]), adain1_b=adain_bias,
        w_q=nrm(keys[1], (C, C)), w_k=nrm(keys[2], (C, C)), w_v=nrm(keys[3], (C, C)),
        b_q=jnp.zeros((C,), jnp.float32), b_k=jnp.zeros((C,), jnp.float32),
        b_v=jnp.zeros((C,), jnp.float32),
        rpb_table1=nrm(keys[4], ((2 * ws - 1) ** 2, nh_half)),
        rpb_table2=nrm(keys[5], ((2 * ws - 1) ** 2, nh_half)),
        attn_proj_w=nrm(keys[6], (C, C)), attn_proj_b=jnp.zeros((C,), jnp.float32),
        adain2_w=equal_linear_w(keys[7]), adain2_b=adain_bias,
        fc1_w=nrm(keys[8], (C, 4 * C)), fc1_b=jnp.zeros((4 * C,), jnp.float32),
        fc2_w=nrm(keys[9], (4 * C, C)), fc2_b=jnp.zeros((C,), jnp.float32),
        ln_g=jnp.ones((C,), jnp.float32), ln_b=jnp.zeros((C,), jnp.float32),
        out_proj_w=nrm(keys[10], (C, channel_dim_out)),
        out_proj_b=jnp.zeros((channel_dim_out,), jnp.float32),
        trgb_w=nrm(keys[11], (C, 3)), trgb_b=jnp.zeros((3,), jnp.float32),
    )
    meta = dict(ws=ws, shift=shift, nh_half=nh_half)
    return params, meta


# -------------------------------- forward ----------------------------------

def basic_block_forward(x, style, params, meta):
    B, H, W, C = x.shape
    ws, shift, nh_half = meta["ws"], meta["shift"], meta["nh_half"]
    nh = 2 * nh_half
    Ch = C // 2
    hd = Ch // nh_half
    N = ws * ws
    L = H * W
    scale = hd ** -0.5
    bf16 = lambda a: a.astype(jnp.bfloat16)

    spe = jnp.asarray(make_spe_grid2d(H, W, C).reshape(L, C))     # host constant (L, C)

    # AdaIN affine (EqualLinear on style) hoisted out of the kernels: tiny XLA matmuls.
    def adain_affine(w, b):
        gb = style @ w + b                                        # (B, 2C)
        return gb[:, :C].reshape(B, 1, C), gb[:, C:].reshape(B, 1, C)

    g1, b1 = adain_affine(params["adain1_w"], params["adain1_b"])
    g2, b2 = adain_affine(params["adain2_w"], params["adain2_b"])

    # ---- fused kernel 1: (x + spe) -> AdaIN(norm1) -> q/k/v (bf16, lane-dense NHWC) ----
    shortcut, q, k, v = pallas_pre_attention(
        x, spe, g1, b1,
        bf16(params["w_q"]), bf16(params["w_k"]), bf16(params["w_v"]),
        params["b_q"].reshape(1, C), params["b_k"].reshape(1, C),
        params["b_v"].reshape(1, C))

    rel_idx = relative_position_index(ws).reshape(-1)
    bias1 = jnp.transpose(params["rpb_table1"][rel_idx].reshape(N, N, nh_half), (2, 0, 1))
    bias2 = jnp.transpose(params["rpb_table2"][rel_idx].reshape(N, N, nh_half), (2, 0, 1))
    w_proj = bf16(params["attn_proj_w"])                          # (C, C)

    # ---- fused kernel 2: window attention (+ fused head-merge & output projection) ----
    if shift == 0:
        # Both half-channel branches share the same (un-shifted) windows -> one call over
        # all heads; no mask or window_partition/window_reverse glue at all.
        bias = jnp.concatenate([bias1, bias2], axis=0)            # (nh, N, N)
        a = pallas_window_attention(q, k, v, bias, w_proj, None,
                                    scale=scale, ws=ws, nh=nh)    # (B, H, W, C)
    else:
        mask2 = compute_shift_attn_mask(H, W, ws, shift)          # (n_win, N, N)
        roll = lambda t, s: jnp.roll(t, (s, s), axis=(1, 2))
        # attn_proj is per-token: cat([x1,x2]) @ W == x1 @ W[:Ch] + x2 @ W[Ch:], each half
        # applied inside its branch's attention kernel.
        a1 = pallas_window_attention(q[..., :Ch], k[..., :Ch], v[..., :Ch],
                                     bias1, w_proj[:Ch], None,
                                     scale=scale, ws=ws, nh=nh_half)
        a2 = pallas_window_attention(roll(q[..., Ch:], -shift), roll(k[..., Ch:], -shift),
                                     roll(v[..., Ch:], -shift),
                                     bias2, w_proj[Ch:], mask2,
                                     scale=scale, ws=ws, nh=nh_half)
        a = a1 + roll(a2, shift)

    # ---- fused kernel 3: residual + AdaIN(norm2) + MLP + residual + tRGB + LN/out-proj ----
    C_out = params["out_proj_w"].shape[1]
    w_out_p, b_out_p = _pad_cols(params["out_proj_w"], params["out_proj_b"])
    w_rgb_p, b_rgb_p = _pad_cols(params["trgb_w"], params["trgb_b"])

    y_p, rgb_p = pallas_post_attention(
        shortcut, a, g2, b2,
        params["attn_proj_b"].reshape(1, C),
        bf16(params["fc1_w"]), params["fc1_b"].reshape(1, -1),
        bf16(params["fc2_w"]), params["fc2_b"].reshape(1, -1),
        params["ln_g"].reshape(1, C), params["ln_b"].reshape(1, C),
        bf16(w_out_p), b_out_p.reshape(1, -1),
        bf16(w_rgb_p), b_rgb_p.reshape(1, -1))

    y = y_p[..., :C_out]                                          # drop lane padding
    # TODO(synk): Upsample source not provided; assumed nearest-neighbor 2x (nn.Upsample
    # default), which commutes exactly with the per-pixel LayerNorm + Linear fused
    # pre-upsample inside kernel 3; a bilinear upsample would not commute.
    x_up = jnp.repeat(jnp.repeat(y, 2, axis=1), 2, axis=2)        # (B, 2H, 2W, C_out)

    # TODO(synk): tRGB source not provided; assumed 1x1 conv (C -> 3 RGB), output NCHW.
    x_trgb = jnp.transpose(rgb_p[..., :3], (0, 3, 1, 2))          # (B, 3, H, W)

    return x_up, x_trgb


# ---------------------------------- main ------------------------------------

if __name__ == "__main__":
    B = 2
    dim = 8                 # H = W
    channel_dim = 32
    channel_dim_out = 16
    style_dim = 32
    n_heads = 4
    window_size = 8         # dim == window_size -> ws = 8, shift = 0 (as in the PyTorch module)

    key = jax.random.PRNGKey(0)
    kx, ks, kp = jax.random.split(key, 3)
    x = jax.random.normal(kx, (B, dim, dim, channel_dim), jnp.float32)
    style = jax.random.normal(ks, (B, style_dim), jnp.float32)

    params, meta = init_params(kp, dim, channel_dim, channel_dim_out,
                               style_dim, n_heads, window_size)

    fwd = jax.jit(lambda xx, ss: basic_block_forward(xx, ss, params, meta))
    x_up, x_trgb = fwd(x, style)
    jax.block_until_ready((x_up, x_trgb))

    assert x_up.shape == (B, 2 * dim, 2 * dim, channel_dim_out), x_up.shape
    assert x_trgb.shape == (B, 3, dim, dim), x_trgb.shape
    assert bool(jnp.all(jnp.isfinite(x_up))) and bool(jnp.all(jnp.isfinite(x_trgb)))
    print("KERNEL_OK")
</pallas_src>

<mosaic_0001>
module attributes {stable_mosaic.version = 11 : i64} {
  func.func @_window_attn_kernel(%arg0: i32, %arg1: i32, %arg2: memref<1x8x8x32xbf16, #tpu.memory_space<vmem>>, %arg3: memref<1x8x8x32xbf16, #tpu.memory_space<vmem>>, %arg4: memref<1x8x8x32xbf16, #tpu.memory_space<vmem>>, %arg5: memref<4x64x64xf32, #tpu.memory_space<vmem>>, %arg6: memref<32x32xbf16, #tpu.memory_space<vmem>>, %arg7: memref<1x8x8x32xf32, #tpu.memory_space<vmem>>) attributes {dimension_semantics = [#tpu.dimension_semantics<parallel>, #tpu.dimension_semantics<parallel>], iteration_bounds = array<i64: 2, 1>, scalar_prefetch = 0 : i64, scratch_operands = 0 : i64, tpu.core_type = #tpu.core_type<tc>, window_params = [{transform_indices = @transform_0, window_bounds = array<i64: 1, 8, 8, 32>}, {transform_indices = @transform_1, window_bounds = array<i64: 1, 8, 8, 32>}, {transform_indices = @transform_2, window_bounds = array<i64: 1, 8, 8, 32>}, {pipeline_mode = #tpu.pipeline_mode<synchronous>, transform_indices = @transform_3, window_bounds = array<i64: 4, 64, 64>}, {pipeline_mode = #tpu.pipeline_mode<synchronous>, transform_indices = @transform_4, window_bounds = array<i64: 32, 32>}, {transform_indices = @transform_5, window_bounds = array<i64: 1, 8, 8, 32>}]} {
    %c0 = arith.constant 0 : index
    %c0_0 = arith.constant 0 : index
    %c0_1 = arith.constant 0 : index
    %c0_2 = arith.constant 0 : index
    %0 = vector.load %arg2[%c0, %c0_0, %c0_1, %c0_2] : memref<1x8x8x32xbf16, #tpu.memory_space<vmem>>, vector<1x8x8x32xbf16>
    %1 = vector.shape_cast %0 : vector<1x8x8x32xbf16> to vector<8x8x32xbf16>
    %2 = arith.extf %1 : vector<8x8x32xbf16> to vector<8x8x32xf32>
    %3 = vector.shape_cast %2 : vector<8x8x32xf32> to vector<8x1x8x32xf32>
    %4 = tpu.transpose %3, [1, 0, 2, 3] : vector<8x1x8x32xf32> -> vector<1x8x8x32xf32>
    %5 = vector.shape_cast %4 : vector<1x8x8x32xf32> to vector<1x64x32xf32>
    %6 = arith.truncf %5 : vector<1x64x32xf32> to vector<1x64x32xbf16>
    %c0_3 = arith.constant 0 : index
    %c0_4 = arith.constant 0 : index
    %c0_5 = arith.constant 0 : index
    %c0_6 = arith.constant 0 : index
    %7 = vector.load %arg3[%c0_3, %c0_4, %c0_5, %c0_6] : memref<1x8x8x32xbf16, #tpu.memory_space<vmem>>, vector<1x8x8x32xbf16>
    %8 = vector.shape_cast %7 : vector<1x8x8x32xbf16> to vector<8x8x32xbf16>
    %9 = arith.extf %8 : vector<8x8x32xbf16> to vector<8x8x32xf32>
    %10 = vector.shape_cast %9 : vector<8x8x32xf32> to vector<8x1x8x32xf32>
    %11 = tpu.transpose %10, [1, 0, 2, 3] : vector<8x1x8x32xf32> -> vector<1x8x8x32xf32>
    %12 = vector.shape_cast %11 : vector<1x8x8x32xf32> to vector<1x64x32xf32>
    %13 = arith.truncf %12 : vector<1x64x32xf32> to vector<1x64x32xbf16>
    %c0_7 = arith.constant 0 : index
    %c0_8 = arith.constant 0 : index
    %c0_9 = arith.constant 0 : index
    %c0_10 = arith.constant 0 : index
    %14 = vector.load %arg4[%c0_7, %c0_8, %c0_9, %c0_10] : memref<1x8x8x32xbf16, #tpu.memory_space<vmem>>, vector<1x8x8x32xbf16>
    %15 = vector.shape_cast %14 : vector<1x8x8x32xbf16> to vector<8x8x32xbf16>
    %16 = arith.extf %15 : vector<8x8x32xbf16> to vector<8x8x32xf32>
    %17 = vector.shape_cast %16 : vector<8x8x32xf32> to vector<8x1x8x32xf32>
    %18 = tpu.transpose %17, [1, 0, 2, 3] : vector<8x1x8x32xf32> -> vector<1x8x8x32xf32>
    %19 = vector.shape_cast %18 : vector<1x8x8x32xf32> to vector<1x64x32xf32>
    %20 = arith.truncf %19 : vector<1x64x32xf32> to vector<1x64x32xbf16>
    %21 = vector.extract_strided_slice %6 {offsets = [0, 0, 0], sizes = [1, 64, 8], strides = [1, 1, 1]} : vector<1x64x32xbf16> to vector<1x64x8xbf16>
    %22 = vector.extract_strided_slice %13 {offsets = [0, 0, 0], sizes = [1, 64, 8], strides = [1, 1, 1]} : vector<1x64x32xbf16> to vector<1x64x8xbf16>
    %cst = arith.constant dense<0.000000e+00> : vector<1x64x64xf32>
    %23 = tpu.matmul %21, %22, %cst {dimension_numbers = #tpu.dot_dimension_numbers<[2], [2], [1], [1], [0, 0, 0, 1, 1, 1], [0], [0]>} : vector<1x64x8xbf16>, vector<1x64x8xbf16>, vector<1x64x64xf32> -> vector<1x64x64xf32>
    %cst_11 = arith.constant 0.353553385 : f32
    %24 = vector.broadcast %cst_11 : f32 to vector<1x64x64xf32>
    %25 = arith.mulf %23, %24 : vector<1x64x64xf32>
    %c0_12 = arith.constant 0 : index
    %c0_13 = arith.constant 0 : index
    %c0_14 = arith.constant 0 : index
    %26 = vector.load %arg5[%c0_12, %c0_13, %c0_14] : memref<4x64x64xf32, #tpu.memory_space<vmem>>, vector<1x64x64xf32>
    %27 = vector.shape_cast %26 : vector<1x64x64xf32> to vector<64x64xf32>
    %28 = vector.shape_cast %27 : vector<64x64xf32> to vector<1x64x64xf32>
    %29 = arith.addf %25, %28 : vector<1x64x64xf32>
    %cst_15 = arith.constant dense<0xFF800000> : vector<1x64xf32>
    %30 = vector.multi_reduction <maximumf>, %29, %cst_15 [2] : vector<1x64x64xf32> to vector<1x64xf32>
    %31 = vector.shape_cast %30 : vector<1x64xf32> to vector<1x64x1xf32>
    %32 = vector.broadcast %31 : vector<1x64x1xf32> to vector<1x64x64xf32>
    %33 = arith.subf %29, %32 : vector<1x64x64xf32>
    %34 = math.exp %33 : vector<1x64x64xf32>
    %cst_16 = arith.constant dense<0.000000e+00> : vector<1x64xf32>
    %35 = vector.multi_reduction <add>, %34, %cst_16 [2] : vector<1x64x64xf32> to vector<1x64xf32>
    %36 = vector.shape_cast %35 : vector<1x64xf32> to vector<1x64x1xf32>
    %37 = tpu.reciprocal %36 {approx = true} : vector<1x64x1xf32> -> vector<1x64x1xf32>
    %38 = vector.broadcast %37 : vector<1x64x1xf32> to vector<1x64x64xf32>
    %39 = arith.mulf %34, %38 : vector<1x64x64xf32>
    %40 = arith.truncf %39 : vector<1x64x64xf32> to vector<1x64x64xbf16>
    %41 = vector.extract_strided_slice %20 {offsets = [0, 0, 0], sizes = [1, 64, 8], strides = [1, 1, 1]} : vector<1x64x32xbf16> to vector<1x64x8xbf16>
    %cst_17 = arith.constant dense<0.000000e+00> : vector<1x64x8xf32>
    %42 = tpu.matmul %40, %41, %cst_17 {dimension_numbers = #tpu.dot_dimension_numbers<[2], [1], [1], [2], [0, 0, 0, 1, 1, 2], [0], [0]>} : vector<1x64x64xbf16>, vector<1x64x8xbf16>, vector<1x64x8xf32> -> vector<1x64x8xf32>
    %43 = vector.extract_strided_slice %6 {offsets = [0, 0, 8], sizes = [1, 64, 8], strides = [1, 1, 1]} : vector<1x64x32xbf16> to vector<1x64x8xbf16>
    %44 = vector.extract_strided_slice %13 {offsets = [0, 0, 8], sizes = [1, 64, 8], strides = [1, 1, 1]} : vector<1x64x32xbf16> to vector<1x64x8xbf16>
    %cst_18 = arith.constant dense<0.000000e+00> : vector<1x64x64xf32>
    %45 = tpu.matmul %43, %44, %cst_18 {dimension_numbers = #tpu.dot_dimension_numbers<[2], [2], [1], [1], [0, 0, 0, 1, 1, 1], [0], [0]>} : vector<1x64x8xbf16>, vector<1x64x8xbf16>, vector<1x64x64xf32> -> vector<1x64x64xf32>
    %cst_19 = arith.constant 0.353553385 : f32
    %46 = vector.broadcast %cst_19 : f32 to vector<1x64x64xf32>
    %47 = arith.mulf %45, %46 : vector<1x64x64xf32>
    %c1 = arith.constant 1 : index
    %c0_20 = arith.constant 0 : index
    %c0_21 = arith.constant 0 : index
    %48 = vector.load %arg5[%c1, %c0_20, %c0_21] : memref<4x64x64xf32, #tpu.memory_space<vmem>>, vector<1x64x64xf32>
    %49 = vector.shape_cast %48 : vector<1x64x64xf32> to vector<64x64xf32>
    %50 = vector.shape_cast %49 : vector<64x64xf32> to vector<1x64x64xf32>
    %51 = arith.addf %47, %50 : vector<1x64x64xf32>
    %cst_22 = arith.constant dense<0xFF800000> : vector<1x64xf32>
    %52 = vector.multi_reduction <maximumf>, %51, %cst_22 [2] : vector<1x64x64xf32> to vector<1x64xf32>
    %53 = vector.shape_cast %52 : vector<1x64xf32> to vector<1x64x1xf32>
    %54 = vector.broadcast %53 : vector<1x64x1xf32> to vector<1x64x64xf32>
    %55 = arith.subf %51, %54 : vector<1x64x64xf32>
    %56 = math.exp %55 : vector<1x64x64xf32>
    %cst_23 = arith.constant dense<0.000000e+00> : vector<1x64xf32>
    %57 = vector.multi_reduction <add>, %56, %cst_23 [2] : vector<1x64x64xf32> to vector<1x64xf32>
    %58 = vector.shape_cast %57 : vector<1x64xf32> to vector<1x64x1xf32>
    %59 = tpu.reciprocal %58 {approx = true} : vector<1x64x1xf32> -> vector<1x64x1xf32>
    %60 = vector.broadcast %59 : vector<1x64x1xf32> to vector<1x64x64xf32>
    %61 = arith.mulf %56, %60 : vector<1x64x64xf32>
    %62 = arith.truncf %61 : vector<1x64x64xf32> to vector<1x64x64xbf16>
    %63 = vector.extract_strided_slice %20 {offsets = [0, 0, 8], sizes = [1, 64, 8], strides = [1, 1, 1]} : vector<1x64x32xbf16> to vector<1x64x8xbf16>
    %cst_24 = arith.constant dense<0.000000e+00> : vector<1x64x8xf32>
    %64 = tpu.matmul %62, %63, %cst_24 {dimension_numbers = #tpu.dot_dimension_numbers<[2], [1], [1], [2], [0, 0, 0, 1, 1, 2], [0], [0]>} : vector<1x64x64xbf16>, vector<1x64x8xbf16>, vector<1x64x8xf32> -> vector<1x64x8xf32>
    %65 = vector.extract_strided_slice %6 {offsets = [0, 0, 16], sizes = [1, 64, 8], strides = [1, 1, 1]} : vector<1x64x32xbf16> to vector<1x64x8xbf16>
    %66 = vector.extract_strided_slice %13 {offsets = [0, 0, 16], sizes = [1, 64, 8], strides = [1, 1, 1]} : vector<1x64x32xbf16> to vector<1x64x8xbf16>
    %cst_25 = arith.constant dense<0.000000e+00> : vector<1x64x64xf32>
    %67 = tpu.matmul %65, %66, %cst_25 {dimension_numbers = #tpu.dot_dimension_numbers<[2], [2], [1], [1], [0, 0, 0, 1, 1, 1], [0], [0]>} : vector<1x64x8xbf16>, vector<1x64x8xbf16>, vector<1x64x64xf32> -> vector<1x64x64xf32>
    %cst_26 = arith.constant 0.353553385 : f32
    %68 = vector.broadcast %cst_26 : f32 to vector<1x64x64xf32>
    %69 = arith.mulf %67, %68 : vector<1x64x64xf32>
    %c2 = arith.constant 2 : index
    %c0_27 = arith.constant 0 : index
    %c0_28 = arith.constant 0 : index
    %70 = vector.load %arg5[%c2, %c0_27, %c0_28] : memref<4x64x64xf32, #tpu.memory_space<vmem>>, vector<1x64x64xf32>
    %71 = vector.shape_cast %70 : vector<1x64x64xf32> to vector<64x64xf32>
    %72 = vector.shape_cast %71 : vector<64x64xf32> to vector<1x64x64xf32>
    %73 = arith.addf %69, %72 : vector<1x64x64xf32>
    %cst_29 = arith.constant dense<0xFF800000> : vector<1x64xf32>
    %74 = vector.multi_reduction <maximumf>, %73, %cst_29 [2] : vector<1x64x64xf32> to vector<1x64xf32>
    %75 = vector.shape_cast %74 : vector<1x64xf32> to vector<1x64x1xf32>
    %76 = vector.broadcast %75 : vector<1x64x1xf32> to vector<1x64x64xf32>
    %77 = arith.subf %73, %76 : vector<1x64x64xf32>
    %78 = math.exp %77 : vector<1x64x64xf32>
    %cst_30 = arith.constant dense<0.000000e+00> : vector<1x64xf32>
    %79 = vector.multi_reduction <add>, %78, %cst_30 [2] : vector<1x64x64xf32> to vector<1x64xf32>
    %80 = vector.shape_cast %79 : vector<1x64xf32> to vector<1x64x1xf32>
    %81 = tpu.reciprocal %80 {approx = true} : vector<1x64x1xf32> -> vector<1x64x1xf32>
    %82 = vector.broadcast %81 : vector<1x64x1xf32> to vector<1x64x64xf32>
    %83 = arith.mulf %78, %82 : vector<1x64x64xf32>
    %84 = arith.truncf %83 : vector<1x64x64xf32> to vector<1x64x64xbf16>
    %85 = vector.extract_strided_slice %20 {offsets = [0, 0, 16], sizes = [1, 64, 8], strides = [1, 1, 1]} : vector<1x64x32xbf16> to vector<1x64x8xbf16>
    %cst_31 = arith.constant dense<0.000000e+00> : vector<1x64x8xf32>
    %86 = tpu.matmul %84, %85, %cst_31 {dimension_numbers = #tpu.dot_dimension_numbers<[2], [1], [1], [2], [0, 0, 0, 1, 1, 2], [0], [0]>} : vector<1x64x64xbf16>, vector<1x64x8xbf16>, vector<1x64x8xf32> -> vector<1x64x8xf32>
    %87 = vector.extract_strided_slice %6 {offsets = [0, 0, 24], sizes = [1, 64, 8], strides = [1, 1, 1]} : vector<1x64x32xbf16> to vector<1x64x8xbf16>
    %88 = vector.extract_strided_slice %13 {offsets = [0, 0, 24], sizes = [1, 64, 8], strides = [1, 1, 1]} : vector<1x64x32xbf16> to vector<1x64x8xbf16>
    %cst_32 = arith.constant dense<0.000000e+00> : vector<1x64x64xf32>
    %89 = tpu.matmul %87, %88, %cst_32 {dimension_numbers = #tpu.dot_dimension_numbers<[2], [2], [1], [1], [0, 0, 0, 1, 1, 1], [0], [0]>} : vector<1x64x8xbf16>, vector<1x64x8xbf16>, vector<1x64x64xf32> -> vector<1x64x64xf32>
    %cst_33 = arith.constant 0.353553385 : f32
    %90 = vector.broadcast %cst_33 : f32 to vector<1x64x64xf32>
    %91 = arith.mulf %89, %90 : vector<1x64x64xf32>
    %c3 = arith.constant 3 : index
    %c0_34 = arith.constant 0 : index
    %c0_35 = arith.constant 0 : index
    %92 = vector.load %arg5[%c3, %c0_34, %c0_35] : memref<4x64x64xf32, #tpu.memory_space<vmem>>, vector<1x64x64xf32>
    %93 = vector.shape_cast %92 : vector<1x64x64xf32> to vector<64x64xf32>
    %94 = vector.shape_cast %93 : vector<64x64xf32> to vector<1x64x64xf32>
    %95 = arith.addf %91, %94 : vector<1x64x64xf32>
    %cst_36 = arith.constant dense<0xFF800000> : vector<1x64xf32>
    %96 = vector.multi_reduction <maximumf>, %95, %cst_36 [2] : vector<1x64x64xf32> to vector<1x64xf32>
    %97 = vector.shape_cast %96 : vector<1x64xf32> to vector<1x64x1xf32>
    %98 = vector.broadcast %97 : vector<1x64x1xf32> to vector<1x64x64xf32>
    %99 = arith.subf %95, %98 : vector<1x64x64xf32>
    %100 = math.exp %99 : vector<1x64x64xf32>
    %cst_37 = arith.constant dense<0.000000e+00> : vector<1x64xf32>
    %101 = vector.multi_reduction <add>, %100, %cst_37 [2] : vector<1x64x64xf32> to vector<1x64xf32>
    %102 = vector.shape_cast %101 : vector<1x64xf32> to vector<1x64x1xf32>
    %103 = tpu.reciprocal %102 {approx = true} : vector<1x64x1xf32> -> vector<1x64x1xf32>
    %104 = vector.broadcast %103 : vector<1x64x1xf32> to vector<1x64x64xf32>
    %105 = arith.mulf %100, %104 : vector<1x64x64xf32>
    %106 = arith.truncf %105 : vector<1x64x64xf32> to vector<1x64x64xbf16>
    %107 = vector.extract_strided_slice %20 {offsets = [0, 0, 24], sizes = [1, 64, 8], strides = [1, 1, 1]} : vector<1x64x32xbf16> to vector<1x64x8xbf16>
    %cst_38 = arith.constant dense<0.000000e+00> : vector<1x64x8xf32>
    %108 = tpu.matmul %106, %107, %cst_38 {dimension_numbers = #tpu.dot_dimension_numbers<[2], [1], [1], [2], [0, 0, 0, 1, 1, 2], [0], [0]>} : vector<1x64x64xbf16>, vector<1x64x8xbf16>, vector<1x64x8xf32> -> vector<1x64x8xf32>
    %109 = tpu.concatenate %42, %64, %86, %108 in 2 : vector<1x64x8xf32>, vector<1x64x8xf32>, vector<1x64x8xf32>, vector<1x64x8xf32> -> vector<1x64x32xf32>
    %110 = vector.shape_cast %109 : vector<1x64x32xf32> to vector<64x32xf32>
    %111 = arith.truncf %110 : vector<64x32xf32> to vector<64x32xbf16>
    %c0_39 = arith.constant 0 : index
    %c0_40 = arith.constant 0 : index
    %112 = vector.load %arg6[%c0_39, %c0_40] : memref<32x32xbf16, #tpu.memory_space<vmem>>, vector<32x32xbf16>
    %cst_41 = arith.constant dense<0.000000e+00> : vector<64x32xf32>
    %113 = tpu.matmul %111, %112, %cst_41 {dimension_numbers = #tpu.dot_dimension_numbers<[1], [0], [0], [1], [0, 0, 1, 1], [], []>} : vector<64x32xbf16>, vector<32x32xbf16>, vector<64x32xf32> -> vector<64x32xf32>
    %114 = vector.shape_cast %113 : vector<64x32xf32> to vector<1x8x8x32xf32>
    %115 = tpu.transpose %114, [1, 0, 2, 3] : vector<1x8x8x32xf32> -> vector<8x1x8x32xf32>
    %116 = vector.shape_cast %115 : vector<8x1x8x32xf32> to vector<8x8x32xf32>
    %c0_42 = arith.constant 0 : index
    %c0_43 = arith.constant 0 : index
    %c0_44 = arith.constant 0 : index
    %c0_45 = arith.constant 0 : index
    %117 = vector.load %arg7[%c0_42, %c0_43, %c0_44, %c0_45] : memref<1x8x8x32xf32, #tpu.memory_space<vmem>>, vector<1x8x8x32xf32>
    %118 = vector.shape_cast %117 : vector<1x8x8x32xf32> to vector<8x8x32xf32>
    %119 = vector.shape_cast %116 : vector<8x8x32xf32> to vector<1x8x8x32xf32>
    tpu.vector_store %arg7[%c0_42, %c0_43, %c0_44, %c0_45], %119 {strides = array<i32>} : memref<1x8x8x32xf32, #tpu.memory_space<vmem>>, vector<1x8x8x32xf32>,
    return
  }
  func.func @transform_0(%arg0: i32, %arg1: i32) -> (i32, i32, i32, i32) {
    %c0_i32 = arith.constant 0 : i32
    %c0_i32_0 = arith.constant 0 : i32
    %c0_i32_1 = arith.constant 0 : i32
    return %arg0, %arg1, %c0_i32, %c0_i32_0 : i32, i32, i32, i32
  }
  func.func @transform_1(%arg0: i32, %arg1: i32) -> (i32, i32, i32, i32) {
    %c0_i32 = arith.constant 0 : i32
    %c0_i32_0 = arith.constant 0 : i32
    %c0_i32_1 = arith.constant 0 : i32
    return %arg0, %arg1, %c0_i32, %c0_i32_0 : i32, i32, i32, i32
  }
  func.func @transform_2(%arg0: i32, %arg1: i32) -> (i32, i32, i32, i32) {
    %c0_i32 = arith.constant 0 : i32
    %c0_i32_0 = arith.constant 0 : i32
    %c0_i32_1 = arith.constant 0 : i32
    return %arg0, %arg1, %c0_i32, %c0_i32_0 : i32, i32, i32, i32
  }
  func.func @transform_3(%arg0: i32, %arg1: i32) -> (i32, i32, i32) {
    %c0_i32 = arith.constant 0 : i32
    %c0_i32_0 = arith.constant 0 : i32
    %c0_i32_1 = arith.constant 0 : i32
    %c0_i32_2 = arith.constant 0 : i32
    return %c0_i32, %c0_i32_0, %c0_i32_1 : i32, i32, i32
  }
  func.func @transform_4(%arg0: i32, %arg1: i32) -> (i32, i32) {
    %c0_i32 = arith.constant 0 : i32
    %c0_i32_0 = arith.constant 0 : i32
    %c0_i32_1 = arith.constant 0 : i32
    return %c0_i32, %c0_i32_0 : i32, i32
  }
  func.func @transform_5(%arg0: i32, %arg1: i32) -> (i32, i32, i32, i32) {
    %c0_i32 = arith.constant 0 : i32
    %c0_i32_0 = arith.constant 0 : i32
    %c0_i32_1 = arith.constant 0 : i32
    return %arg0, %arg1, %c0_i32, %c0_i32_0 : i32, i32, i32, i32
  }
}

module attributes {stable_mosaic.version = 11 : i64} {
  func.func @_post_attn_kernel(%arg0: i32, %arg1: memref<1x8x8x32xf32, #tpu.memory_space<vmem>>, %arg2: memref<1x8x8x32xf32, #tpu.memory_space<vmem>>, %arg3: memref<1x1x32xf32, #tpu.memory_space<vmem>>, %arg4: memref<1x1x32xf32, #tpu.memory_space<vmem>>, %arg5: memref<1x32xf32, #tpu.memory_space<vmem>>, %arg6: memref<32x128xbf16, #tpu.memory_space<vmem>>, %arg7: memref<1x128xf32, #tpu.memory_space<vmem>>, %arg8: memref<128x32xbf16, #tpu.memory_space<vmem>>, %arg9: memref<1x32xf32, #tpu.memory_space<vmem>>, %arg10: memref<1x32xf32, #tpu.memory_space<vmem>>, %arg11: memref<1x32xf32, #tpu.memory_space<vmem>>, %arg12: memref<32x128xbf16, #tpu.memory_space<vmem>>, %arg13: memref<1x128xf32, #tpu.memory_space<vmem>>, %arg14: memref<32x128xbf16, #tpu.memory_space<vmem>>, %arg15: memref<1x128xf32, #tpu.memory_space<vmem>>, %arg16: memref<1x8x8x128xf32, #tpu.memory_space<vmem>>, %arg17: memref<1x8x8x128xf32, #tpu.memory_space<vmem>>) attributes {dimension_semantics = [#tpu.dimension_semantics<parallel>], iteration_bounds = array<i64: 2>, scalar_prefetch = 0 : i64, scratch_operands = 0 : i64, tpu.core_type = #tpu.core_type<tc>, window_params = [{transform_indices = @transform_0, window_bounds = array<i64: 1, 8, 8, 32>}, {transform_indices = @transform_1, window_bounds = array<i64: 1, 8, 8, 32>}, {transform_indices = @transform_2, window_bounds = array<i64: 1, 1, 32>}, {transform_indices = @transform_3, window_bounds = array<i64: 1, 1, 32>}, {pipeline_mode = #tpu.pipeline_mode<synchronous>, transform_indices = @transform_4, window_bounds = array<i64: 1, 32>}, {pipeline_mode = #tpu.pipeline_mode<synchronous>, transform_indices = @transform_5, window_bounds = array<i64: 32, 128>}, {pipeline_mode = #tpu.pipeline_mode<synchronous>, transform_indices = @transform_6, window_bounds = array<i64: 1, 128>}, {pipeline_mode = #tpu.pipeline_mode<synchronous>, transform_indices = @transform_7, window_bounds = array<i64: 128, 32>}, {pipeline_mode = #tpu.pipeline_mode<synchronous>, transform_indices = @transform_8, window_bounds = array<i64: 1, 32>}, {pipeline_mode = #tpu.pipeline_mode<synchronous>, transform_indices = @transform_9, window_bounds = array<i64: 1, 32>}, {pipeline_mode = #tpu.pipeline_mode<synchronous>, transform_indices = @transform_10, window_bounds = array<i64: 1, 32>}, {pipeline_mode = #tpu.pipeline_mode<synchronous>, transform_indices = @transform_11, window_bounds = array<i64: 32, 128>}, {pipeline_mode = #tpu.pipeline_mode<synchronous>, transform_indices = @transform_12, window_bounds = array<i64: 1, 128>}, {pipeline_mode = #tpu.pipeline_mode<synchronous>, transform_indices = @transform_13, window_bounds = array<i64: 32, 128>}, {pipeline_mode = #tpu.pipeline_mode<synchronous>, transform_indices = @transform_14, window_bounds = array<i64: 1, 128>}, {transform_indices = @transform_15, window_bounds = array<i64: 1, 8, 8, 128>}, {transform_indices = @transform_16, window_bounds = array<i64: 1, 8, 8, 128>}]} {
    %c0 = arith.constant 0 : index
    %c0_0 = arith.constant 0 : index
    %c0_1 = arith.constant 0 : index
    %c0_2 = arith.constant 0 : index
    %0 = vector.load %arg1[%c0, %c0_0, %c0_1, %c0_2] : memref<1x8x8x32xf32, #tpu.memory_space<vmem>>, vector<1x8x8x32xf32>
    %1 = vector.shape_cast %0 : vector<1x8x8x32xf32> to vector<8x8x32xf32>
    %2 = vector.shape_cast %1 : vector<8x8x32xf32> to vector<64x32xf32>
    %c0_3 = arith.constant 0 : index
    %c0_4 = arith.constant 0 : index
    %c0_5 = arith.constant 0 : index
    %c0_6 = arith.constant 0 : index
    %3 = vector.load %arg2[%c0_3, %c0_4, %c0_5, %c0_6] : memref<1x8x8x32xf32, #tpu.memory_space<vmem>>, vector<1x8x8x32xf32>
    %4 = vector.shape_cast %3 : vector<1x8x8x32xf32> to vector<8x8x32xf32>
    %5 = vector.shape_cast %4 : vector<8x8x32xf32> to vector<64x32xf32>
    %6 = arith.addf %2, %5 : vector<64x32xf32>
    %c0_7 = arith.constant 0 : index
    %c0_8 = arith.constant 0 : index
    %7 = vector.load %arg5[%c0_7, %c0_8] : memref<1x32xf32, #tpu.memory_space<vmem>>, vector<1x32xf32>
    %8 = vector.broadcast %7 : vector<1x32xf32> to vector<64x32xf32>
    %9 = arith.addf %6, %8 : vector<64x32xf32>
    %cst = arith.constant dense<0.000000e+00> : vector<32xf32>
    %10 = vector.multi_reduction <add>, %9, %cst [0] : vector<64x32xf32> to vector<32xf32>
    %11 = vector.shape_cast %10 : vector<32xf32> to vector<1x32xf32>
    %cst_9 = arith.constant 6.400000e+01 : f32
    %12 = vector.broadcast %cst_9 : f32 to vector<1x32xf32>
    %13 = arith.divf %11, %12 : vector<1x32xf32>
    %14 = vector.broadcast %13 : vector<1x32xf32> to vector<64x32xf32>
    %15 = arith.subf %9, %14 : vector<64x32xf32>
    %16 = arith.mulf %15, %15 : vector<64x32xf32>
    %cst_10 = arith.constant dense<0.000000e+00> : vector<32xf32>
    %17 = vector.multi_reduction <add>, %16, %cst_10 [0] : vector<64x32xf32> to vector<32xf32>
    %18 = vector.shape_cast %17 : vector<32xf32> to vector<1x32xf32>
    %cst_11 = arith.constant 6.400000e+01 : f32
    %19 = vector.broadcast %cst_11 : f32 to vector<1x32xf32>
    %20 = arith.divf %18, %19 : vector<1x32xf32>
    %c0_12 = arith.constant 0 : index
    %c0_13 = arith.constant 0 : index
    %c0_14 = arith.constant 0 : index
    %21 = vector.load %arg3[%c0_12, %c0_13, %c0_14] : memref<1x1x32xf32, #tpu.memory_space<vmem>>, vector<1x1x32xf32>
    %22 = vector.shape_cast %21 : vector<1x1x32xf32> to vector<1x32xf32>
    %23 = vector.broadcast %13 : vector<1x32xf32> to vector<64x32xf32>
    %24 = arith.subf %9, %23 : vector<64x32xf32>
    %cst_15 = arith.constant 9.99999974E-6 : f32
    %25 = vector.broadcast %cst_15 : f32 to vector<1x32xf32>
    %26 = arith.addf %20, %25 : vector<1x32xf32>
    %27 = math.rsqrt %26 : vector<1x32xf32>
    %28 = vector.broadcast %27 : vector<1x32xf32> to vector<64x32xf32>
    %29 = arith.mulf %24, %28 : vector<64x32xf32>
    %30 = vector.broadcast %22 : vector<1x32xf32> to vector<64x32xf32>
    %31 = arith.mulf %30, %29 : vector<64x32xf32>
    %c0_16 = arith.constant 0 : index
    %c0_17 = arith.constant 0 : index
    %c0_18 = arith.constant 0 : index
    %32 = vector.load %arg4[%c0_16, %c0_17, %c0_18] : memref<1x1x32xf32, #tpu.memory_space<vmem>>, vector<1x1x32xf32>
    %33 = vector.shape_cast %32 : vector<1x1x32xf32> to vector<1x32xf32>
    %34 = vector.broadcast %33 : vector<1x32xf32> to vector<64x32xf32>
    %35 = arith.addf %31, %34 : vector<64x32xf32>
    %36 = arith.truncf %35 : vector<64x32xf32> to vector<64x32xbf16>
    %c0_19 = arith.constant 0 : index
    %c0_20 = arith.constant 0 : index
    %37 = vector.load %arg6[%c0_19, %c0_20] : memref<32x128xbf16, #tpu.memory_space<vmem>>, vector<32x128xbf16>
    %cst_21 = arith.constant dense<0.000000e+00> : vector<64x128xf32>
    %38 = tpu.matmul %36, %37, %cst_21 {dimension_numbers = #tpu.dot_dimension_numbers<[1], [0], [0], [1], [0, 0, 1, 1], [], []>} : vector<64x32xbf16>, vector<32x128xbf16>, vector<64x128xf32> -> vector<64x128xf32>
    %c0_22 = arith.constant 0 : index
    %c0_23 = arith.constant 0 : index
    %39 = vector.load %arg7[%c0_22, %c0_23] : memref<1x128xf32, #tpu.memory_space<vmem>>, vector<1x128xf32>
    %40 = vector.broadcast %39 : vector<1x128xf32> to vector<64x128xf32>
    %41 = arith.addf %38, %40 : vector<64x128xf32>
    %cst_24 = arith.constant 0.707106769 : f32
    %42 = vector.broadcast %cst_24 : f32 to vector<64x128xf32>
    %43 = arith.mulf %41, %42 : vector<64x128xf32>
    %44 = math.absf %43 : vector<64x128xf32>
    %cst_25 = arith.constant 0.327591091 : f32
    %45 = vector.broadcast %cst_25 : f32 to vector<64x128xf32>
    %46 = arith.mulf %45, %44 : vector<64x128xf32>
    %cst_26 = arith.constant 1.000000e+00 : f32
    %47 = vector.broadcast %cst_26 : f32 to vector<64x128xf32>
    %48 = arith.addf %47, %46 : vector<64x128xf32>
    %cst_27 = arith.constant 1.000000e+00 : f32
    %49 = vector.broadcast %cst_27 : f32 to vector<64x128xf32>
    %50 = arith.divf %49, %48 : vector<64x128xf32>
    %cst_28 = arith.constant 1.06140542 : f32
    %51 = vector.broadcast %cst_28 : f32 to vector<64x128xf32>
    %52 = arith.mulf %51, %50 : vector<64x128xf32>
    %cst_29 = arith.constant 1.45315206 : f32
    %53 = vector.broadcast %cst_29 : f32 to vector<64x128xf32>
    %54 = arith.subf %52, %53 : vector<64x128xf32>
    %55 = arith.mulf %54, %50 : vector<64x128xf32>
    %cst_30 = arith.constant 1.42141378 : f32
    %56 = vector.broadcast %cst_30 : f32 to vector<64x128xf32>
    %57 = arith.addf %55, %56 : vector<64x128xf32>
    %58 = arith.mulf %57, %50 : vector<64x128xf32>
    %cst_31 = arith.constant 0.284496725 : f32
    %59 = vector.broadcast %cst_31 : f32 to vector<64x128xf32>
    %60 = arith.subf %58, %59 : vector<64x128xf32>
    %61 = arith.mulf %60, %50 : vector<64x128xf32>
    %cst_32 = arith.constant 0.254829586 : f32
    %62 = vector.broadcast %cst_32 : f32 to vector<64x128xf32>
    %63 = arith.addf %61, %62 : vector<64x128xf32>
    %64 = arith.mulf %63, %50 : vector<64x128xf32>
    %cst_33 = arith.constant 0.000000e+00 : f32
    %65 = vector.broadcast %cst_33 : f32 to vector<64x128xf32>
    %66 = arith.subf %65, %44 : vector<64x128xf32>
    %67 = arith.mulf %66, %44 : vector<64x128xf32>
    %68 = math.exp %67 : vector<64x128xf32>
    %69 = arith.mulf %64, %68 : vector<64x128xf32>
    %cst_34 = arith.constant 1.000000e+00 : f32
    %70 = vector.broadcast %cst_34 : f32 to vector<64x128xf32>
    %71 = arith.subf %70, %69 : vector<64x128xf32>
    %cst_35 = arith.constant 0.000000e+00 : f32
    %72 = vector.broadcast %cst_35 : f32 to vector<64x128xf32>
    %73 = arith.cmpf oge, %43, %72 : vector<64x128xf32>
    %cst_36 = arith.constant 0.000000e+00 : f32
    %74 = vector.broadcast %cst_36 : f32 to vector<64x128xf32>
    %75 = arith.subf %74, %71 : vector<64x128xf32>
    %76 = arith.select %73, %71, %75 : vector<64x128xi1>, vector<64x128xf32>
    %cst_37 = arith.constant 5.000000e-01 : f32
    %77 = vector.broadcast %cst_37 : f32 to vector<64x128xf32>
    %78 = arith.mulf %77, %41 : vector<64x128xf32>
    %cst_38 = arith.constant 1.000000e+00 : f32
    %79 = vector.broadcast %cst_38 : f32 to vector<64x128xf32>
    %80 = arith.addf %79, %76 : vector<64x128xf32>
    %81 = arith.mulf %78, %80 : vector<64x128xf32>
    %82 = arith.truncf %81 : vector<64x128xf32> to vector<64x128xbf16>
    %c0_39 = arith.constant 0 : index
    %c0_40 = arith.constant 0 : index
    %83 = vector.load %arg8[%c0_39, %c0_40] : memref<128x32xbf16, #tpu.memory_space<vmem>>, vector<128x32xbf16>
    %cst_41 = arith.constant dense<0.000000e+00> : vector<64x32xf32>
    %84 = tpu.matmul %82, %83, %cst_41 {dimension_numbers = #tpu.dot_dimension_numbers<[1], [0], [0], [1], [0, 0, 1, 1], [], []>} : vector<64x128xbf16>, vector<128x32xbf16>, vector<64x32xf32> -> vector<64x32xf32>
    %c0_42 = arith.constant 0 : index
    %c0_43 = arith.constant 0 : index
    %85 = vector.load %arg9[%c0_42, %c0_43] : memref<1x32xf32, #tpu.memory_space<vmem>>, vector<1x32xf32>
    %86 = vector.broadcast %85 : vector<1x32xf32> to vector<64x32xf32>
    %87 = arith.addf %84, %86 : vector<64x32xf32>
    %88 = arith.addf %9, %87 : vector<64x32xf32>
    %89 = arith.truncf %88 : vector<64x32xf32> to vector<64x32xbf16>
    %c0_44 = arith.constant 0 : index
    %c0_45 = arith.constant 0 : index
    %90 = vector.load %arg14[%c0_44, %c0_45] : memref<32x128xbf16, #tpu.memory_space<vmem>>, vector<32x128xbf16>
    %cst_46 = arith.constant dense<0.000000e+00> : vector<64x128xf32>
    %91 = tpu.matmul %89, %90, %cst_46 {dimension_numbers = #tpu.dot_dimension_numbers<[1], [0], [0], [1], [0, 0, 1, 1], [], []>} : vector<64x32xbf16>, vector<32x128xbf16>, vector<64x128xf32> -> vector<64x128xf32>
    %c0_47 = arith.constant 0 : index
    %c0_48 = arith.constant 0 : index
    %92 = vector.load %arg15[%c0_47, %c0_48] : memref<1x128xf32, #tpu.memory_space<vmem>>, vector<1x128xf32>
    %93 = vector.broadcast %92 : vector<1x128xf32> to vector<64x128xf32>
    %94 = arith.addf %91, %93 : vector<64x128xf32>
    %95 = vector.shape_cast %94 : vector<64x128xf32> to vector<8x8x128xf32>
    %c0_49 = arith.constant 0 : index
    %c0_50 = arith.constant 0 : index
    %c0_51 = arith.constant 0 : index
    %c0_52 = arith.constant 0 : index
    %96 = vector.load %arg17[%c0_49, %c0_50, %c0_51, %c0_52] : memref<1x8x8x128xf32, #tpu.memory_space<vmem>>, vector<1x8x8x128xf32>
    %97 = vector.shape_cast %96 : vector<1x8x8x128xf32> to vector<8x8x128xf32>
    %98 = vector.shape_cast %95 : vector<8x8x128xf32> to vector<1x8x8x128xf32>
    tpu.vector_store %arg17[%c0_49, %c0_50, %c0_51, %c0_52], %98 {strides = array<i32>} : memref<1x8x8x128xf32, #tpu.memory_space<vmem>>, vector<1x8x8x128xf32>,
    %cst_53 = arith.constant dense<0.000000e+00> : vector<64xf32>
    %99 = vector.multi_reduction <add>, %88, %cst_53 [1] : vector<64x32xf32> to vector<64xf32>
    %100 = vector.shape_cast %99 : vector<64xf32> to vector<64x1xf32>
    %cst_54 = arith.constant 3.200000e+01 : f32
    %101 = vector.broadcast %cst_54 : f32 to vector<64x1xf32>
    %102 = arith.divf %100, %101 : vector<64x1xf32>
    %103 = vector.broadcast %102 : vector<64x1xf32> to vector<64x32xf32>
    %104 = arith.subf %88, %103 : vector<64x32xf32>
    %105 = arith.mulf %104, %104 : vector<64x32xf32>
    %cst_55 = arith.constant dense<0.000000e+00> : vector<64xf32>
    %106 = vector.multi_reduction <add>, %105, %cst_55 [1] : vector<64x32xf32> to vector<64xf32>
    %107 = vector.shape_cast %106 : vector<64xf32> to vector<64x1xf32>
    %cst_56 = arith.constant 3.200000e+01 : f32
    %108 = vector.broadcast %cst_56 : f32 to vector<64x1xf32>
    %109 = arith.divf %107, %108 : vector<64x1xf32>
    %110 = vector.broadcast %102 : vector<64x1xf32> to vector<64x32xf32>
    %111 = arith.subf %88, %110 : vector<64x32xf32>
    %cst_57 = arith.constant 9.99999974E-6 : f32
    %112 = vector.broadcast %cst_57 : f32 to vector<64x1xf32>
    %113 = arith.addf %109, %112 : vector<64x1xf32>
    %114 = math.rsqrt %113 : vector<64x1xf32>
    %115 = vector.broadcast %114 : vector<64x1xf32> to vector<64x32xf32>
    %116 = arith.mulf %111, %115 : vector<64x32xf32>
    %c0_58 = arith.constant 0 : index
    %c0_59 = arith.constant 0 : index
    %117 = vector.load %arg10[%c0_58, %c0_59] : memref<1x32xf32, #tpu.memory_space<vmem>>, vector<1x32xf32>
    %118 = vector.broadcast %117 : vector<1x32xf32> to vector<64x32xf32>
    %119 = arith.mulf %116, %118 : vector<64x32xf32>
    %c0_60 = arith.constant 0 : index
    %c0_61 = arith.constant 0 : index
    %120 = vector.load %arg11[%c0_60, %c0_61] : memref<1x32xf32, #tpu.memory_space<vmem>>, vector<1x32xf32>
    %121 = vector.broadcast %120 : vector<1x32xf32> to vector<64x32xf32>
    %122 = arith.addf %119, %121 : vector<64x32xf32>
    %123 = arith.truncf %122 : vector<64x32xf32> to vector<64x32xbf16>
    %c0_62 = arith.constant 0 : index
    %c0_63 = arith.constant 0 : index
    %124 = vector.load %arg12[%c0_62, %c0_63] : memref<32x128xbf16, #tpu.memory_space<vmem>>, vector<32x128xbf16>
    %cst_64 = arith.constant dense<0.000000e+00> : vector<64x128xf32>
    %125 = tpu.matmul %123, %124, %cst_64 {dimension_numbers = #tpu.dot_dimension_numbers<[1], [0], [0], [1], [0, 0, 1, 1], [], []>} : vector<64x32xbf16>, vector<32x128xbf16>, vector<64x128xf32> -> vector<64x128xf32>
    %c0_65 = arith.constant 0 : index
    %c0_66 = arith.constant 0 : index
    %126 = vector.load %arg13[%c0_65, %c0_66] : memref<1x128xf32, #tpu.memory_space<vmem>>, vector<1x128xf32>
    %127 = vector.broadcast %126 : vector<1x128xf32> to vector<64x128xf32>
    %128 = arith.addf %125, %127 : vector<64x128xf32>
    %129 = vector.shape_cast %128 : vector<64x128xf32> to vector<8x8x128xf32>
    %c0_67 = arith.constant 0 : index
    %c0_68 = arith.constant 0 : index
    %c0_69 = arith.constant 0 : index
    %c0_70 = arith.constant 0 : index
    %130 = vector.load %arg16[%c0_67, %c0_68, %c0_69, %c0_70] : memref<1x8x8x128xf32, #tpu.memory_space<vmem>>, vector<1x8x8x128xf32>
    %131 = vector.shape_cast %130 : vector<1x8x8x128xf32> to vector<8x8x128xf32>
    %132 = vector.shape_cast %129 : vector<8x8x128xf32> to vector<1x8x8x128xf32>
    tpu.vector_store %arg16[%c0_67, %c0_68, %c0_69, %c0_70], %132 {strides = array<i32>} : memref<1x8x8x128xf32, #tpu.memory_space<vmem>>, vector<1x8x8x128xf32>,
    return
  }
  func.func @transform_0(%arg0: i32) -> (i32, i32, i32, i32) {
    %c0_i32 = arith.constant 0 : i32
    %c0_i32_0 = arith.constant 0 : i32
    %c0_i32_1 = arith.constant 0 : i32
    %c0_i32_2 = arith.constant 0 : i32
    return %arg0, %c0_i32, %c0_i32_0, %c0_i32_1 : i32, i32, i32, i32
  }
  func.func @transform_1(%arg0: i32) -> (i32, i32, i32, i32) {
    %c0_i32 = arith.constant 0 : i32
    %c0_i32_0 = arith.constant 0 : i32
    %c0_i32_1 = arith.constant 0 : i32
    %c0_i32_2 = arith.constant 0 : i32
    return %arg0, %c0_i32, %c0_i32_0, %c0_i32_1 : i32, i32, i32, i32
  }
  func.func @transform_2(%arg0: i32) -> (i32, i32, i32) {
    %c0_i32 = arith.constant 0 : i32
    %c0_i32_0 = arith.constant 0 : i32
    %c0_i32_1 = arith.constant 0 : i32
    return %arg0, %c0_i32, %c0_i32_0 : i32, i32, i32
  }
  func.func @transform_3(%arg0: i32) -> (i32, i32, i32) {
    %c0_i32 = arith.constant 0 : i32
    %c0_i32_0 = arith.constant 0 : i32
    %c0_i32_1 = arith.constant 0 : i32
    return %arg0, %c0_i32, %c0_i32_0 : i32, i32, i32
  }
  func.func @transform_4(%arg0: i32) -> (i32, i32) {
    %c0_i32 = arith.constant 0 : i32
    %c0_i32_0 = arith.constant 0 : i32
    %c0_i32_1 = arith.constant 0 : i32
    return %c0_i32, %c0_i32_0 : i32, i32
  }
  func.func @transform_5(%arg0: i32) -> (i32, i32) {
    %c0_i32 = arith.constant 0 : i32
    %c0_i32_0 = arith.constant 0 : i32
    %c0_i32_1 = arith.constant 0 : i32
    return %c0_i32, %c0_i32_0 : i32, i32
  }
  func.func @transform_6(%arg0: i32) -> (i32, i32) {
    %c0_i32 = arith.constant 0 : i32
    %c0_i32_0 = arith.constant 0 : i32
    %c0_i32_1 = arith.constant 0 : i32
    return %c0_i32, %c0_i32_0 : i32, i32
  }
  func.func @transform_7(%arg0: i32) -> (i32, i32) {
    %c0_i32 = arith.constant 0 : i32
    %c0_i32_0 = arith.constant 0 : i32
    %c0_i32_1 = arith.constant 0 : i32
    return %c0_i32, %c0_i32_0 : i32, i32
  }
  func.func @transform_8(%arg0: i32) -> (i32, i32) {
    %c0_i32 = arith.constant 0 : i32
    %c0_i32_0 = arith.constant 0 : i32
    %c0_i32_1 = arith.constant 0 : i32
    return %c0_i32, %c0_i32_0 : i32, i32
  }
  func.func @transform_9(%arg0: i32) -> (i32, i32) {
    %c0_i32 = arith.constant 0 : i32
    %c0_i32_0 = arith.constant 0 : i32
    %c0_i32_1 = arith.constant 0 : i32
    return %c0_i32, %c0_i32_0 : i32, i32
  }
  func.func @transform_10(%arg0: i32) -> (i32, i32) {
    %c0_i32 = arith.constant 0 : i32
    %c0_i32_0 = arith.constant 0 : i32
    %c0_i32_1 = arith.constant 0 : i32
    return %c0_i32, %c0_i32_0 : i32, i32
  }
  func.func @transform_11(%arg0: i32) -> (i32, i32) {
    %c0_i32 = arith.constant 0 : i32
    %c0_i32_0 = arith.constant 0 : i32
    %c0_i32_1 = arith.constant 0 : i32
    return %c0_i32, %c0_i32_0 : i32, i32
  }
  func.func @transform_12(%arg0: i32) -> (i32, i32) {
    %c0_i32 = arith.constant 0 : i32
    %c0_i32_0 = arith.constant 0 : i32
    %c0_i32_1 = arith.constant 0 : i32
    return %c0_i32, %c0_i32_0 : i32, i32
  }
  func.func @transform_13(%arg0: i32) -> (i32, i32) {
    %c0_i32 = arith.constant 0 : i32
    %c0_i32_0 = arith.constant 0 : i32
    %c0_i32_1 = arith.constant 0 : i32
    return %c0_i32, %c0_i32_0 : i32, i32
  }
  func.func @transform_14(%arg0: i32) -> (i32, i32) {
    %c0_i32 = arith.constant 0 : i32
    %c0_i32_0 = arith.constant 0 : i32
    %c0_i32_1 = arith.constant 0 : i32
    return %c0_i32, %c0_i32_0 : i32, i32
  }
  func.func @transform_15(%arg0: i32) -> (i32, i32, i32, i32) {
    %c0_i32 = arith.constant 0 : i32
    %c0_i32_0 = arith.constant 0 : i32
    %c0_i32_1 = arith.constant 0 : i32
    %c0_i32_2 = arith.constant 0 : i32
    return %arg0, %c0_i32, %c0_i32_0, %c0_i32_1 : i32, i32, i32, i32
  }
  func.func @transform_16(%arg0: i32) -> (i32, i32, i32, i32) {
    %c0_i32 = arith.constant 0 : i32
    %c0_i32_0 = arith.constant 0 : i32
    %c0_i32_1 = arith.constant 0 : i32
    %c0_i32_2 = arith.constant 0 : i32
    return %arg0, %c0_i32, %c0_i32_0, %c0_i32_1 : i32, i32, i32, i32
  }
}

module attributes {stable_mosaic.version = 11 : i64} {
  func.func @_pre_attn_kernel(%arg0: i32, %arg1: memref<1x8x8x32xf32, #tpu.memory_space<vmem>>, %arg2: memref<64x32xf32, #tpu.memory_space<vmem>>, %arg3: memref<1x1x32xf32, #tpu.memory_space<vmem>>, %arg4: memref<1x1x32xf32, #tpu.memory_space<vmem>>, %arg5: memref<32x32xbf16, #tpu.memory_space<vmem>>, %arg6: memref<32x32xbf16, #tpu.memory_space<vmem>>, %arg7: memref<32x32xbf16, #tpu.memory_space<vmem>>, %arg8: memref<1x32xf32, #tpu.memory_space<vmem>>, %arg9: memref<1x32xf32, #tpu.memory_space<vmem>>, %arg10: memref<1x32xf32, #tpu.memory_space<vmem>>, %arg11: memref<1x8x8x32xf32, #tpu.memory_space<vmem>>, %arg12: memref<1x8x8x32xbf16, #tpu.memory_space<vmem>>, %arg13: memref<1x8x8x32xbf16, #tpu.memory_space<vmem>>, %arg14: memref<1x8x8x32xbf16, #tpu.memory_space<vmem>>) attributes {dimension_semantics = [#tpu.dimension_semantics<parallel>], iteration_bounds = array<i64: 2>, scalar_prefetch = 0 : i64, scratch_operands = 0 : i64, tpu.core_type = #tpu.core_type<tc>, window_params = [{transform_indices = @transform_0, window_bounds = array<i64: 1, 8, 8, 32>}, {pipeline_mode = #tpu.pipeline_mode<synchronous>, transform_indices = @transform_1, window_bounds = array<i64: 64, 32>}, {transform_indices = @transform_2, window_bounds = array<i64: 1, 1, 32>}, {transform_indices = @transform_3, window_bounds = array<i64: 1, 1, 32>}, {pipeline_mode = #tpu.pipeline_mode<synchronous>, transform_indices = @transform_4, window_bounds = array<i64: 32, 32>}, {pipeline_mode = #tpu.pipeline_mode<synchronous>, transform_indices = @transform_5, window_bounds = array<i64: 32, 32>}, {pipeline_mode = #tpu.pipeline_mode<synchronous>, transform_indices = @transform_6, window_bounds = array<i64: 32, 32>}, {pipeline_mode = #tpu.pipeline_mode<synchronous>, transform_indices = @transform_7, window_bounds = array<i64: 1, 32>}, {pipeline_mode = #tpu.pipeline_mode<synchronous>, transform_indices = @transform_8, window_bounds = array<i64: 1, 32>}, {pipeline_mode = #tpu.pipeline_mode<synchronous>, transform_indices = @transform_9, window_bounds = array<i64: 1, 32>}, {transform_indices = @transform_10, window_bounds = array<i64: 1, 8, 8, 32>}, {transform_indices = @transform_11, window_bounds = array<i64: 1, 8, 8, 32>}, {transform_indices = @transform_12, window_bounds = array<i64: 1, 8, 8, 32>}, {transform_indices = @transform_13, window_bounds = array<i64: 1, 8, 8, 32>}]} {
    %c0 = arith.constant 0 : index
    %c0_0 = arith.constant 0 : index
    %c0_1 = arith.constant 0 : index
    %c0_2 = arith.constant 0 : index
    %0 = vector.load %arg1[%c0, %c0_0, %c0_1, %c0_2] : memref<1x8x8x32xf32, #tpu.memory_space<vmem>>, vector<1x8x8x32xf32>
    %1 = vector.shape_cast %0 : vector<1x8x8x32xf32> to vector<8x8x32xf32>
    %2 = vector.shape_cast %1 : vector<8x8x32xf32> to vector<64x32xf32>
    %c0_3 = arith.constant 0 : index
    %c0_4 = arith.constant 0 : index
    %3 = vector.load %arg2[%c0_3, %c0_4] : memref<64x32xf32, #tpu.memory_space<vmem>>, vector<64x32xf32>
    %4 = arith.addf %2, %3 : vector<64x32xf32>
    %5 = vector.shape_cast %4 : vector<64x32xf32> to vector<8x8x32xf32>
    %c0_5 = arith.constant 0 : index
    %c0_6 = arith.constant 0 : index
    %c0_7 = arith.constant 0 : index
    %c0_8 = arith.constant 0 : index
    %6 = vector.load %arg11[%c0_5, %c0_6, %c0_7, %c0_8] : memref<1x8x8x32xf32, #tpu.memory_space<vmem>>, vector<1x8x8x32xf32>
    %7 = vector.shape_cast %6 : vector<1x8x8x32xf32> to vector<8x8x32xf32>
    %8 = vector.shape_cast %5 : vector<8x8x32xf32> to vector<1x8x8x32xf32>
    tpu.vector_store %arg11[%c0_5, %c0_6, %c0_7, %c0_8], %8 {strides = array<i32>} : memref<1x8x8x32xf32, #tpu.memory_space<vmem>>, vector<1x8x8x32xf32>,
    %cst = arith.constant dense<0.000000e+00> : vector<32xf32>
    %9 = vector.multi_reduction <add>, %4, %cst [0] : vector<64x32xf32> to vector<32xf32>
    %10 = vector.shape_cast %9 : vector<32xf32> to vector<1x32xf32>
    %cst_9 = arith.constant 6.400000e+01 : f32
    %11 = vector.broadcast %cst_9 : f32 to vector<1x32xf32>
    %12 = arith.divf %10, %11 : vector<1x32xf32>
    %13 = vector.broadcast %12 : vector<1x32xf32> to vector<64x32xf32>
    %14 = arith.subf %4, %13 : vector<64x32xf32>
    %15 = arith.mulf %14, %14 : vector<64x32xf32>
    %cst_10 = arith.constant dense<0.000000e+00> : vector<32xf32>
    %16 = vector.multi_reduction <add>, %15, %cst_10 [0] : vector<64x32xf32> to vector<32xf32>
    %17 = vector.shape_cast %16 : vector<32xf32> to vector<1x32xf32>
    %cst_11 = arith.constant 6.400000e+01 : f32
    %18 = vector.broadcast %cst_11 : f32 to vector<1x32xf32>
    %19 = arith.divf %17, %18 : vector<1x32xf32>
    %c0_12 = arith.constant 0 : index
    %c0_13 = arith.constant 0 : index
    %c0_14 = arith.constant 0 : index
    %20 = vector.load %arg3[%c0_12, %c0_13, %c0_14] : memref<1x1x32xf32, #tpu.memory_space<vmem>>, vector<1x1x32xf32>
    %21 = vector.shape_cast %20 : vector<1x1x32xf32> to vector<1x32xf32>
    %22 = vector.broadcast %12 : vector<1x32xf32> to vector<64x32xf32>
    %23 = arith.subf %4, %22 : vector<64x32xf32>
    %cst_15 = arith.constant 9.99999974E-6 : f32
    %24 = vector.broadcast %cst_15 : f32 to vector<1x32xf32>
    %25 = arith.addf %19, %24 : vector<1x32xf32>
    %26 = math.rsqrt %25 : vector<1x32xf32>
    %27 = vector.broadcast %26 : vector<1x32xf32> to vector<64x32xf32>
    %28 = arith.mulf %23, %27 : vector<64x32xf32>
    %29 = vector.broadcast %21 : vector<1x32xf32> to vector<64x32xf32>
    %30 = arith.mulf %29, %28 : vector<64x32xf32>
    %c0_16 = arith.constant 0 : index
    %c0_17 = arith.constant 0 : index
    %c0_18 = arith.constant 0 : index
    %31 = vector.load %arg4[%c0_16, %c0_17, %c0_18] : memref<1x1x32xf32, #tpu.memory_space<vmem>>, vector<1x1x32xf32>
    %32 = vector.shape_cast %31 : vector<1x1x32xf32> to vector<1x32xf32>
    %33 = vector.broadcast %32 : vector<1x32xf32> to vector<64x32xf32>
    %34 = arith.addf %30, %33 : vector<64x32xf32>
    %35 = arith.truncf %34 : vector<64x32xf32> to vector<64x32xbf16>
    %c0_19 = arith.constant 0 : index
    %c0_20 = arith.constant 0 : index
    %36 = vector.load %arg5[%c0_19, %c0_20] : memref<32x32xbf16, #tpu.memory_space<vmem>>, vector<32x32xbf16>
    %cst_21 = arith.constant dense<0.000000e+00> : vector<64x32xf32>
    %37 = tpu.matmul %35, %36, %cst_21 {dimension_numbers = #tpu.dot_dimension_numbers<[1], [0], [0], [1], [0, 0, 1, 1], [], []>} : vector<64x32xbf16>, vector<32x32xbf16>, vector<64x32xf32> -> vector<64x32xf32>
    %c0_22 = arith.constant 0 : index
    %c0_23 = arith.constant 0 : index
    %38 = vector.load %arg8[%c0_22, %c0_23] : memref<1x32xf32, #tpu.memory_space<vmem>>, vector<1x32xf32>
    %39 = vector.broadcast %38 : vector<1x32xf32> to vector<64x32xf32>
    %40 = arith.addf %37, %39 : vector<64x32xf32>
    %41 = vector.shape_cast %40 : vector<64x32xf32> to vector<8x8x32xf32>
    %42 = arith.truncf %41 : vector<8x8x32xf32> to vector<8x8x32xbf16>
    %c0_24 = arith.constant 0 : index
    %c0_25 = arith.constant 0 : index
    %c0_26 = arith.constant 0 : index
    %c0_27 = arith.constant 0 : index
    %43 = vector.load %arg12[%c0_24, %c0_25, %c0_26, %c0_27] : memref<1x8x8x32xbf16, #tpu.memory_space<vmem>>, vector<1x8x8x32xbf16>
    %44 = vector.shape_cast %43 : vector<1x8x8x32xbf16> to vector<8x8x32xbf16>
    %45 = vector.shape_cast %42 : vector<8x8x32xbf16> to vector<1x8x8x32xbf16>
    tpu.vector_store %arg12[%c0_24, %c0_25, %c0_26, %c0_27], %45 {strides = array<i32>} : memref<1x8x8x32xbf16, #tpu.memory_space<vmem>>, vector<1x8x8x32xbf16>,
    %c0_28 = arith.constant 0 : index
    %c0_29 = arith.constant 0 : index
    %46 = vector.load %arg6[%c0_28, %c0_29] : memref<32x32xbf16, #tpu.memory_space<vmem>>, vector<32x32xbf16>
    %cst_30 = arith.constant dense<0.000000e+00> : vector<64x32xf32>
    %47 = tpu.matmul %35, %46, %cst_30 {dimension_numbers = #tpu.dot_dimension_numbers<[1], [0], [0], [1], [0, 0, 1, 1], [], []>} : vector<64x32xbf16>, vector<32x32xbf16>, vector<64x32xf32> -> vector<64x32xf32>
    %c0_31 = arith.constant 0 : index
    %c0_32 = arith.constant 0 : index
    %48 = vector.load %arg9[%c0_31, %c0_32] : memref<1x32xf32, #tpu.memory_space<vmem>>, vector<1x32xf32>
    %49 = vector.broadcast %48 : vector<1x32xf32> to vector<64x32xf32>
    %50 = arith.addf %47, %49 : vector<64x32xf32>
    %51 = vector.shape_cast %50 : vector<64x32xf32> to vector<8x8x32xf32>
    %52 = arith.truncf %51 : vector<8x8x32xf32> to vector<8x8x32xbf16>
    %c0_33 = arith.constant 0 : index
    %c0_34 = arith.constant 0 : index
    %c0_35 = arith.constant 0 : index
    %c0_36 = arith.constant 0 : index
    %53 = vector.load %arg13[%c0_33, %c0_34, %c0_35, %c0_36] : memref<1x8x8x32xbf16, #tpu.memory_space<vmem>>, vector<1x8x8x32xbf16>
    %54 = vector.shape_cast %53 : vector<1x8x8x32xbf16> to vector<8x8x32xbf16>
    %55 = vector.shape_cast %52 : vector<8x8x32xbf16> to vector<1x8x8x32xbf16>
    tpu.vector_store %arg13[%c0_33, %c0_34, %c0_35, %c0_36], %55 {strides = array<i32>} : memref<1x8x8x32xbf16, #tpu.memory_space<vmem>>, vector<1x8x8x32xbf16>,
    %c0_37 = arith.constant 0 : index
    %c0_38 = arith.constant 0 : index
    %56 = vector.load %arg7[%c0_37, %c0_38] : memref<32x32xbf16, #tpu.memory_space<vmem>>, vector<32x32xbf16>
    %cst_39 = arith.constant dense<0.000000e+00> : vector<64x32xf32>
    %57 = tpu.matmul %35, %56, %cst_39 {dimension_numbers = #tpu.dot_dimension_numbers<[1], [0], [0], [1], [0, 0, 1, 1], [], []>} : vector<64x32xbf16>, vector<32x32xbf16>, vector<64x32xf32> -> vector<64x32xf32>
    %c0_40 = arith.constant 0 : index
    %c0_41 = arith.constant 0 : index
    %58 = vector.load %arg10[%c0_40, %c0_41] : memref<1x32xf32, #tpu.memory_space<vmem>>, vector<1x32xf32>
    %59 = vector.broadcast %58 : vector<1x32xf32> to vector<64x32xf32>
    %60 = arith.addf %57, %59 : vector<64x32xf32>
    %61 = vector.shape_cast %60 : vector<64x32xf32> to vector<8x8x32xf32>
    %62 = arith.truncf %61 : vector<8x8x32xf32> to vector<8x8x32xbf16>
    %c0_42 = arith.constant 0 : index
    %c0_43 = arith.constant 0 : index
    %c0_44 = arith.constant 0 : index
    %c0_45 = arith.constant 0 : index
    %63 = vector.load %arg14[%c0_42, %c0_43, %c0_44, %c0_45] : memref<1x8x8x32xbf16, #tpu.memory_space<vmem>>, vector<1x8x8x32xbf16>
    %64 = vector.shape_cast %63 : vector<1x8x8x32xbf16> to vector<8x8x32xbf16>
    %65 = vector.shape_cast %62 : vector<8x8x32xbf16> to vector<1x8x8x32xbf16>
    tpu.vector_store %arg14[%c0_42, %c0_43, %c0_44, %c0_45], %65 {strides = array<i32>} : memref<1x8x8x32xbf16, #tpu.memory_space<vmem>>, vector<1x8x8x32xbf16>,
    return
  }
  func.func @transform_0(%arg0: i32) -> (i32, i32, i32, i32) {
    %c0_i32 = arith.constant 0 : i32
    %c0_i32_0 = arith.constant 0 : i32
    %c0_i32_1 = arith.constant 0 : i32
    %c0_i32_2 = arith.constant 0 : i32
    return %arg0, %c0_i32, %c0_i32_0, %c0_i32_1 : i32, i32, i32, i32
  }
  func.func @transform_1(%arg0: i32) -> (i32, i32) {
    %c0_i32 = arith.constant 0 : i32
    %c0_i32_0 = arith.constant 0 : i32
    %c0_i32_1 = arith.constant 0 : i32
    return %c0_i32, %c0_i32_0 : i32, i32
  }
  func.func @transform_2(%arg0: i32) -> (i32, i32, i32) {
    %c0_i32 = arith.constant 0 : i32
    %c0_i32_0 = arith.constant 0 : i32
    %c0_i32_1 = arith.constant 0 : i32
    return %arg0, %c0_i32, %c0_i32_0 : i32, i32, i32
  }
  func.func @transform_3(%arg0: i32) -> (i32, i32, i32) {
    %c0_i32 = arith.constant 0 : i32
    %c0_i32_0 = arith.constant 0 : i32
    %c0_i32_1 = arith.constant 0 : i32
    return %arg0, %c0_i32, %c0_i32_0 : i32, i32, i32
  }
  func.func @transform_4(%arg0: i32) -> (i32, i32) {
    %c0_i32 = arith.constant 0 : i32
    %c0_i32_0 = arith.constant 0 : i32
    %c0_i32_1 = arith.constant 0 : i32
    return %c0_i32, %c0_i32_0 : i32, i32
  }
  func.func @transform_5(%arg0: i32) -> (i32, i32) {
    %c0_i32 = arith.constant 0 : i32
    %c0_i32_0 = arith.constant 0 : i32
    %c0_i32_1 = arith.constant 0 : i32
    return %c0_i32, %c0_i32_0 : i32, i32
  }
  func.func @transform_6(%arg0: i32) -> (i32, i32) {
    %c0_i32 = arith.constant 0 : i32
    %c0_i32_0 = arith.constant 0 : i32
    %c0_i32_1 = arith.constant 0 : i32
    return %c0_i32, %c0_i32_0 : i32, i32
  }
  func.func @transform_7(%arg0: i32) -> (i32, i32) {
    %c0_i32 = arith.constant 0 : i32
    %c0_i32_0 = arith.constant 0 : i32
    %c0_i32_1 = arith.constant 0 : i32
    return %c0_i32, %c0_i32_0 : i32, i32
  }
  func.func @transform_8(%arg0: i32) -> (i32, i32) {
    %c0_i32 = arith.constant 0 : i32
    %c0_i32_0 = arith.constant 0 : i32
    %c0_i32_1 = arith.constant 0 : i32
    return %c0_i32, %c0_i32_0 : i32, i32
  }
  func.func @transform_9(%arg0: i32) -> (i32, i32) {
    %c0_i32 = arith.constant 0 : i32
    %c0_i32_0 = arith.constant 0 : i32
    %c0_i32_1 = arith.constant 0 : i32
    return %c0_i32, %c0_i32_0 : i32, i32
  }
  func.func @transform_10(%arg0: i32) -> (i32, i32, i32, i32) {
    %c0_i32 = arith.constant 0 : i32
    %c0_i32_0 = arith.constant 0 : i32
    %c0_i32_1 = arith.constant 0 : i32
    %c0_i32_2 = arith.constant 0 : i32
    return %arg0, %c0_i32, %c0_i32_0, %c0_i32_1 : i32, i32, i32, i32
  }
  func.func @transform_11(%arg0: i32) -> (i32, i32, i32, i32) {
    %c0_i32 = arith.constant 0 : i32
    %c0_i32_0 = arith.constant 0 : i32
    %c0_i32_1 = arith.constant 0 : i32
    %c0_i32_2 = arith.constant 0 : i32
    return %arg0, %c0_i32, %c0_i32_0, %c0_i32_1 : i32, i32, i32, i32
  }
  func.func @transform_12(%arg0: i32) -> (i32, i32, i32, i32) {
    %c0_i32 = arith.constant 0 : i32
    %c0_i32_0 = arith.constant 0 : i32
    %c0_i32_1 = arith.constant 0 : i32
    %c0_i32_2 = arith.constant 0 : i32
    return %arg0, %c0_i32, %c0_i32_0, %c0_i32_1 : i32, i32, i32, i32
  }
  func.func @transform_13(%arg0: i32) -> (i32, i32, i32, i32) {
    %c0_i32 = arith.constant 0 : i32
    %c0_i32_0 = arith.constant 0 : i32
    %c0_i32_1 = arith.constant 0 : i32
    %c0_i32_2 = arith.constant 0 : i32
    return %arg0, %c0_i32, %c0_i32_0, %c0_i32_1 : i32, i32, i32, i32
  }
}

</mosaic_0001>

<llo_original>
// kernel: _lambda_.3
$region0: #{_lambda_.3}
  #allocation0 [shape = 'u32[]', space=smem, size = 0x4, offset = 0x4, fixed_abs, tag = 'smem constant byte address 0x4 - core index']
  #allocation1 [shape = 'u32[144,128]{1,0:T(1,128)}', space=vmem, size = 0x12000, scoped, tag = 'internal scratch']
  %s0 = inlined_call_operand.hbm [shape: f32[2,8,8,32], index: 0, kind: input, shape index: {}]
  %s1 = inlined_call_operand.vmem [shape: f32[64,32], index: 1, kind: input, shape index: {}]
  %s2 = inlined_call_operand.vmem [shape: f32[2,1,32], index: 2, kind: input, shape index: {}]
  %s3 = inlined_call_operand.vmem [shape: f32[2,1,32], index: 3, kind: input, shape index: {}]
  %s4 = inlined_call_operand.vmem [shape: bf16[32,32], index: 4, kind: input, shape index: {}]
  %s5 = inlined_call_operand.vmem [shape: bf16[32,32], index: 5, kind: input, shape index: {}]
  %s6 = inlined_call_operand.hbm [shape: bf16[32,32], index: 6, kind: input, shape index: {}]
  %s7 = inlined_call_operand.vmem [shape: f32[1,32], index: 7, kind: input, shape index: {}, may-alias: {7,8,9}]
  %s8 = inlined_call_operand.vmem [shape: f32[1,32], index: 8, kind: input, shape index: {}, may-alias: {7,8,9}]
  %s9 = inlined_call_operand.vmem [shape: f32[1,32], index: 9, kind: input, shape index: {}, may-alias: {7,8,9}]
  %s10 = inlined_call_operand.vmem [shape: f32[2,8,8,32], index: 10, kind: output, shape index: {0}]
  %s11 = inlined_call_operand.vmem [shape: bf16[2,8,8,32], index: 11, kind: output, shape index: {1}]
  %s12 = inlined_call_operand.vmem [shape: bf16[2,8,8,32], index: 12, kind: output, shape index: {2}]
  %s13 = inlined_call_operand.vmem [shape: bf16[2,8,8,32], index: 13, kind: output, shape index: {3}]
  %14 = xla_tuple %s10, %s11, %s12, %s13
  %s15 = sld [smem:[#allocation0]]
  $region105: #{_lambda_.3} parent=0
    _
  %s17 = ssub.s32 1, %s15
  %s18 = scalar_select 0, %s17, %s15
  $region1: #{_lambda_.3} parent=0
    #allocation2 [shape = 'u8[65536]{0}', space=vmem, size = 0x10000, scoped, tag = 'input window, operand 0']
    #allocation3 [shape = 's32[2]{0}', space=sflag, size = 0x8, scoped, tag = 'scoped memory for _lambda_.3']
    #allocation4 [shape = 'u8[8192]{0}', space=vmem, size = 0x2000, scoped, tag = 'input window, operand 6, single buffered']
    #allocation5 [shape = 's32[1]{0}', space=sflag, size = 0x4, scoped, tag = 'scoped memory for _lambda_.3']
    %19 = vsyncpa [#allocation3], 0
    %s20 = scalar_lea.sflag [#allocation3], 1
    %21 = vsyncpa %s20, 0
    %22 = vsyncpa [#allocation5], 0
    loop: start=0, step=1, limit=4
    $region2: #{_lambda_.3} parent=1 // loop_pre_header
      _
    $region3: #{_lambda_.3} parent=1 // loop_header
      %s24 = sphi 0, %s28
      %p25 = scmp.ge.s32.totalorder %s24, 4
      %s34 = sphi 0, %s36
      %s37 = sphi 0, %s34
      %s38 = sphi 0, %s37
      %s54 = sphi 0, %s38
      %s58 = sphi 0, %s58
      %s60 = sphi 0, %s58
      %s61 = sphi 0, %s60
      %s75 = sphi 0, %s61
      %s81 = sphi 0, %s83
      %s84 = sphi 0, %s81
      %s85 = sphi 0, %s84
      %s101 = sphi 0, %s85
      %s107 = sphi 0, %s109
      %s110 = sphi 0, %s107
      %s111 = sphi 0, %s110
      %s127 = sphi 0, %s111
      %s131 = sphi 0, %s131
      %s133 = sphi 0, %s131
      %s134 = sphi 0, %s133
      %s148 = sphi 0, %s134
      %s152 = sphi 0, %s152
      %s154 = sphi 0, %s152
      %s155 = sphi 0, %s154
      %s169 = sphi 0, %s155
      %s173 = sphi 0, %s173
      %s175 = sphi 0, %s173
      %s176 = sphi 0, %s175
      %s190 = sphi 0, %s176
      %s194 = sphi 0, %s194
      %s196 = sphi 0, %s194
      %s197 = sphi 0, %s196
      %s211 = sphi 0, %s197
      %s215 = sphi 0, %s215
      %s217 = sphi 0, %s215
      %s218 = sphi 0, %s217
      %s232 = sphi 0, %s218
      %s236 = sphi 0, %s236
      %s238 = sphi 0, %s236
      %s239 = sphi 0, %s238
      %s253 = sphi 0, %s239
      %s259 = sphi 0, %s261
      %s262 = sphi 0, %s259
      %s263 = sphi 0, %s262
      %s279 = sphi 0, %s263
      %s285 = sphi 0, %s287
      %s288 = sphi 0, %s285
      %s289 = sphi 0, %s288
      %s305 = sphi 0, %s289
      %s311 = sphi 0, %s313
      %s314 = sphi 0, %s311
      %s315 = sphi 0, %s314
      %s331 = sphi 0, %s315
      %s337 = sphi 0, %s339
      %s340 = sphi 0, %s337
      %s341 = sphi 0, %s340
      %s357 = sphi 0, %s341
    $region4: #{_lambda_.3} parent=1 // loop_header_branch
      %27 = sbr.rel (%p25) target = $region8
    $region5: #{_lambda_.3} parent=1 // loop_body
      %s29 = ssub.s32 %s24, 1
      %s30 = ssub.s32 %s24, 2
      %s31 = sadd.s32 %s24, 1
      %s32 = ssub.s32 %s24, %s31
      %p33 = scmp.eq.s32.totalorder %s32, 0
      %s35 = sadd.s32 %s34, 1
      %s36 = scalar_select %p33, %s34, %s35
      %p39 = pneg %p33
      %p40 = scmp.eq.s32.totalorder %s24, 1
      %p41 = por %p39, %p40
      %p42 = scmp.ne.s32.totalorder %s34, %s37
      %p43 = scmp.eq.s32.totalorder %s24, 0
      %p44 = por %p42, %p43
      %p45 = scmp.ne.s32.totalorder %s34, %s37
      %p46 = scmp.eq.s32.totalorder %s29, 1
      %p47 = por %p45, %p46
      %p48 = scmp.ne.s32.totalorder %s37, %s38
      %p49 = scmp.eq.s32.totalorder %s29, 0
      %p50 = por %p48, %p49
      %p51 = scmp.ne.s32.totalorder %s37, %s38
      %p52 = scmp.eq.s32.totalorder %s30, 1
      %p53 = por %p51, %p52
      %p55 = scmp.ne.s32.totalorder %s38, %s54
      %p56 = scmp.eq.s32.totalorder %s30, 0
      %p57 = por %p55, %p56
      %s59 = sadd.s32 %s58, 1
      %p62 = scmp.eq.s32.totalorder %s24, 1
      %p63 = scmp.ne.s32.totalorder %s58, %s60
      %p64 = scmp.eq.s32.totalorder %s24, 0
      %p65 = por %p63, %p64
      %p66 = scmp.ne.s32.totalorder %s58, %s60
      %p67 = scmp.eq.s32.totalorder %s29, 1
      %p68 = por %p66, %p67
      %p69 = scmp.ne.s32.totalorder %s60, %s61
      %p70 = scmp.eq.s32.totalorder %s29, 0
      %p71 = por %p69, %p70
      %p72 = scmp.ne.s32.totalorder %s60, %s61
      %p73 = scmp.eq.s32.totalorder %s30, 1
      %p74 = por %p72, %p73
      %p76 = scmp.ne.s32.totalorder %s61, %s75
      %p77 = scmp.eq.s32.totalorder %s30, 0
      %p78 = por %p76, %p77
      %s79 = ssub.s32 %s24, %s31
      %p80 = scmp.eq.s32.totalorder %s79, 0
      %s82 = sadd.s32 %s81, 1
      %s83 = scalar_select %p80, %s81, %s82
      %p86 = pneg %p80
      %p87 = scmp.eq.s32.totalorder %s24, 1
      %p88 = por %p86, %p87
      %p89 = scmp.ne.s32.totalorder %s81, %s84
      %p90 = scmp.eq.s32.totalorder %s24, 0
      %p91 = por %p89, %p90
      %p92 = scmp.ne.s32.totalorder %s81, %s84
      %p93 = scmp.eq.s32.totalorder %s29, 1
      %p94 = por %p92, %p93
      %p95 = scmp.ne.s32.totalorder %s84, %s85
      %p96 = scmp.eq.s32.totalorder %s29, 0
      %p97 = por %p95, %p96
      %p98 = scmp.ne.s32.totalorder %s84, %s85
      %p99 = scmp.eq.s32.totalorder %s30, 1
      %p100 = por %p98, %p99
      %p102 = scmp.ne.s32.totalorder %s85, %s101
      %p103 = scmp.eq.s32.totalorder %s30, 0
      %p104 = por %p102, %p103
      %s105 = ssub.s32 %s24, %s31
      %p106 = scmp.eq.s32.totalorder %s105, 0
      %s108 = sadd.s32 %s107, 1
      %s109 = scalar_select %p106, %s107, %s108
      %p112 = pneg %p106
      %p113 = scmp.eq.s32.totalorder %s24, 1
      %p114 = por %p112, %p113
      %p115 = scmp.ne.s32.totalorder %s107, %s110
      %p116 = scmp.eq.s32.totalorder %s24, 0
      %p117 = por %p115, %p116
      %p118 = scmp.ne.s32.totalorder %s107, %s110
      %p119 = scmp.eq.s32.totalorder %s29, 1
      %p120 = por %p118, %p119
      %p121 = scmp.ne.s32.totalorder %s110, %s111
      %p122 = scmp.eq.s32.totalorder %s29, 0
      %p123 = por %p121, %p122
      %p124 = scmp.ne.s32.totalorder %s110, %s111
      %p125 = scmp.eq.s32.totalorder %s30, 1
      %p126 = por %p124, %p125
      %p128 = scmp.ne.s32.totalorder %s111, %s127
      %p129 = scmp.eq.s32.totalorder %s30, 0
      %p130 = por %p128, %p129
      %s132 = sadd.s32 %s131, 1
      %p135 = scmp.eq.s32.totalorder %s24, 1
      %p136 = scmp.ne.s32.totalorder %s131, %s133
      %p137 = scmp.eq.s32.totalorder %s24, 0
      %p138 = por %p136, %p137
      %p139 = scmp.ne.s32.totalorder %s131, %s133
      %p140 = scmp.eq.s32.totalorder %s29, 1
      %p141 = por %p139, %p140
      %p142 = scmp.ne.s32.totalorder %s133, %s134
      %p143 = scmp.eq.s32.totalorder %s29, 0
      %p144 = por %p142, %p143
      %p145 = scmp.ne.s32.totalorder %s133, %s134
      %p146 = scmp.eq.s32.totalorder %s30, 1
      %p147 = por %p145, %p146
      %p149 = scmp.ne.s32.totalorder %s134, %s148
      %p150 = scmp.eq.s32.totalorder %s30, 0
      %p151 = por %p149, %p150
      %s153 = sadd.s32 %s152, 1
      %p156 = scmp.eq.s32.totalorder %s24, 1
      %p157 = scmp.ne.s32.totalorder %s152, %s154
      %p158 = scmp.eq.s32.totalorder %s24, 0
      %p159 = por %p157, %p158
      %p160 = scmp.ne.s32.totalorder %s152, %s154
      %p161 = scmp.eq.s32.totalorder %s29, 1
      %p162 = por %p160, %p161
      %p163 = scmp.ne.s32.totalorder %s154, %s155
      %p164 = scmp.eq.s32.totalorder %s29, 0
      %p165 = por %p163, %p164
      %p166 = scmp.ne.s32.totalorder %s154, %s155
      %p167 = scmp.eq.s32.totalorder %s30, 1
      %p168 = por %p166, %p167
      %p170 = scmp.ne.s32.totalorder %s155, %s169
      %p171 = scmp.eq.s32.totalorder %s30, 0
      %p172 = por %p170, %p171
      %s174 = sadd.s32 %s173, 1
      %p177 = scmp.eq.s32.totalorder %s24, 1
      %p178 = scmp.ne.s32.totalorder %s173, %s175
      %p179 = scmp.eq.s32.totalorder %s24, 0
      %p180 = por %p178, %p179
      %p181 = scmp.ne.s32.totalorder %s173, %s175
      %p182 = scmp.eq.s32.totalorder %s29, 1
      %p183 = por %p181, %p182
      %p184 = scmp.ne.s32.totalorder %s175, %s176
      %p185 = scmp.eq.s32.totalorder %s29, 0
      %p186 = por %p184, %p185
      %p187 = scmp.ne.s32.totalorder %s175, %s176
      %p188 = scmp.eq.s32.totalorder %s30, 1
      %p189 = por %p187, %p188
      %p191 = scmp.ne.s32.totalorder %s176, %s190
      %p192 = scmp.eq.s32.totalorder %s30, 0
      %p193 = por %p191, %p192
      %s195 = sadd.s32 %s194, 1
      %p198 = scmp.eq.s32.totalorder %s24, 1
      %p199 = scmp.ne.s32.totalorder %s194, %s196
      %p200 = scmp.eq.s32.totalorder %s24, 0
      %p201 = por %p199, %p200
      %p202 = scmp.ne.s32.totalorder %s194, %s196
      %p203 = scmp.eq.s32.totalorder %s29, 1
      %p204 = por %p202, %p203
      %p205 = scmp.ne.s32.totalorder %s196, %s197
      %p206 = scmp.eq.s32.totalorder %s29, 0
      %p207 = por %p205, %p206
      %p208 = scmp.ne.s32.totalorder %s196, %s197
      %p209 = scmp.eq.s32.totalorder %s30, 1
      %p210 = por %p208, %p209
      %p212 = scmp.ne.s32.totalorder %s197, %s211
      %p213 = scmp.eq.s32.totalorder %s30, 0
      %p214 = por %p212, %p213
      %s216 = sadd.s32 %s215, 1
      %p219 = scmp.eq.s32.totalorder %s24, 1
      %p220 = scmp.ne.s32.totalorder %s215, %s217
      %p221 = scmp.eq.s32.totalorder %s24, 0
      %p222 = por %p220, %p221
      %p223 = scmp.ne.s32.totalorder %s215, %s217
      %p224 = scmp.eq.s32.totalorder %s29, 1
      %p225 = por %p223, %p224
      %p226 = scmp.ne.s32.totalorder %s217, %s218
      %p227 = scmp.eq.s32.totalorder %s29, 0
      %p228 = por %p226, %p227
      %p229 = scmp.ne.s32.totalorder %s217, %s218
      %p230 = scmp.eq.s32.totalorder %s30, 1
      %p231 = por %p229, %p230
      %p233 = scmp.ne.s32.totalorder %s218, %s232
      %p234 = scmp.eq.s32.totalorder %s30, 0
      %p235 = por %p233, %p234
      %s237 = sadd.s32 %s236, 1
      %p240 = scmp.eq.s32.totalorder %s24, 1
      %p241 = scmp.ne.s32.totalorder %s236, %s238
      %p242 = scmp.eq.s32.totalorder %s24, 0
      %p243 = por %p241, %p242
      %p244 = scmp.ne.s32.totalorder %s236, %s238
      %p245 = scmp.eq.s32.totalorder %s29, 1
      %p246 = por %p244, %p245
      %p247 = scmp.ne.s32.totalorder %s238, %s239
      %p248 = scmp.eq.s32.totalorder %s29, 0
      %p249 = por %p247, %p248
      %p250 = scmp.ne.s32.totalorder %s238, %s239
      %p251 = scmp.eq.s32.totalorder %s30, 1
      %p252 = por %p250, %p251
      %p254 = scmp.ne.s32.totalorder %s239, %s253
      %p255 = scmp.eq.s32.totalorder %s30, 0
      %p256 = por %p254, %p255
      %s257 = ssub.s32 %s24, %s31
      %p258 = scmp.eq.s32.totalorder %s257, 0
      %s260 = sadd.s32 %s259, 1
      %s261 = scalar_select %p258, %s259, %s260
      %p264 = pneg %p258
      %p265 = scmp.eq.s32.totalorder %s24, 1
      %p266 = por %p264, %p265
      %p267 = scmp.ne.s32.totalorder %s259, %s262
      %p268 = scmp.eq.s32.totalorder %s24, 0
      %p269 = por %p267, %p268
      %p270 = scmp.ne.s32.totalorder %s259, %s262
      %p271 = scmp.eq.s32.totalorder %s29, 1
      %p272 = por %p270, %p271
      %p273 = scmp.ne.s32.totalorder %s262, %s263
      %p274 = scmp.eq.s32.totalorder %s29, 0
      %p275 = por %p273, %p274
      %p276 = scmp.ne.s32.totalorder %s262, %s263
      %p277 = scmp.eq.s32.totalorder %s30, 1
      %p278 = por %p276, %p277
      %p280 = scmp.ne.s32.totalorder %s263, %s279
      %p281 = scmp.eq.s32.totalorder %s30, 0
      %p282 = por %p280, %p281
      %s283 = ssub.s32 %s24, %s31
      %p284 = scmp.eq.s32.totalorder %s283, 0
      %s286 = sadd.s32 %s285, 1
      %s287 = scalar_select %p284, %s285, %s286
      %p290 = pneg %p284
      %p291 = scmp.eq.s32.totalorder %s24, 1
      %p292 = por %p290, %p291
      %p293 = scmp.ne.s32.totalorder %s285, %s288
      %p294 = scmp.eq.s32.totalorder %s24, 0
      %p295 = por %p293, %p294
      %p296 = scmp.ne.s32.totalorder %s285, %s288
      %p297 = scmp.eq.s32.totalorder %s29, 1
      %p298 = por %p296, %p297
      %p299 = scmp.ne.s32.totalorder %s288, %s289
      %p300 = scmp.eq.s32.totalorder %s29, 0
      %p301 = por %p299, %p300
      %p302 = scmp.ne.s32.totalorder %s288, %s289
      %p303 = scmp.eq.s32.totalorder %s30, 1
      %p304 = por %p302, %p303
      %p306 = scmp.ne.s32.totalorder %s289, %s305
      %p307 = scmp.eq.s32.totalorder %s30, 0
      %p308 = por %p306, %p307
      %s309 = ssub.s32 %s24, %s31
      %p310 = scmp.eq.s32.totalorder %s309, 0
      %s312 = sadd.s32 %s311, 1
      %s313 = scalar_select %p310, %s311, %s312
      %p316 = pneg %p310
      %p317 = scmp.eq.s32.totalorder %s24, 1
      %p318 = por %p316, %p317
      %p319 = scmp.ne.s32.totalorder %s311, %s314
      %p320 = scmp.eq.s32.totalorder %s24, 0
      %p321 = por %p319, %p320
      %p322 = scmp.ne.s32.totalorder %s311, %s314
      %p323 = scmp.eq.s32.totalorder %s29, 1
      %p324 = por %p322, %p323
      %p325 = scmp.ne.s32.totalorder %s314, %s315
      %p326 = scmp.eq.s32.totalorder %s29, 0
      %p327 = por %p325, %p326
      %p328 = scmp.ne.s32.totalorder %s314, %s315
      %p329 = scmp.eq.s32.totalorder %s30, 1
      %p330 = por %p328, %p329
      %p332 = scmp.ne.s32.totalorder %s315, %s331
      %p333 = scmp.eq.s32.totalorder %s30, 0
      %p334 = por %p332, %p333
      %s335 = ssub.s32 %s24, %s31
      %p336 = scmp.eq.s32.totalorder %s335, 0
      %s338 = sadd.s32 %s337, 1
      %s339 = scalar_select %p336, %s337, %s338
      %p342 = pneg %p336
      %p343 = scmp.eq.s32.totalorder %s24, 1
      %p344 = por %p342, %p343
      %p345 = scmp.ne.s32.totalorder %s337, %s340
      %p346 = scmp.eq.s32.totalorder %s24, 0
      %p347 = por %p345, %p346
      %p348 = scmp.ne.s32.totalorder %s337, %s340
      %p349 = scmp.eq.s32.totalorder %s29, 1
      %p350 = por %p348, %p349
      %p351 = scmp.ne.s32.totalorder %s340, %s341
      %p352 = scmp.eq.s32.totalorder %s29, 0
      %p353 = por %p351, %p352
      %p354 = scmp.ne.s32.totalorder %s340, %s341
      %p355 = scmp.eq.s32.totalorder %s30, 1
      %p356 = por %p354, %p355
      %p358 = scmp.ne.s32.totalorder %s341, %s357
      %p359 = scmp.eq.s32.totalorder %s30, 0
      %p360 = por %p358, %p359
      %p361 = scmp.le.s32.totalorder 1, %s24
      %p362 = scmp.lt.s32.totalorder %s24, 3
      %p363 = pnand %p361, %p362
      %p364 = pneg %p363
      // Predicated region
      $region9: #{_lambda_.3} parent=5 // pred_check
        _
      $region10: #{_lambda_.3} parent=5 // pred_check_branch
        %366 = sbr.rel (%p363) target = $region12
      $region11: #{_lambda_.3} parent=5 // pred_region
        %s367 = ssub.s32 %s24, 1
        // Predicated region
        $region13: #{_lambda_.3} parent=11 // pred_check
          %p368 = pneg %p71
        $region14: #{_lambda_.3} parent=11 // pred_check_branch
          %370 = sbr.rel (%p368) target = $region16
        $region15: #{_lambda_.3} parent=11 // pred_region
          _
        $region16: #{_lambda_.3} parent=11 // pred_fallthru
          _
        // Predicated region
        $region17: #{_lambda_.3} parent=11 // pred_check
          %p371 = pneg %p144
        $region18: #{_lambda_.3} parent=11 // pred_check_branch
          %373 = sbr.rel (%p371) target = $region20
        $region19: #{_lambda_.3} parent=11 // pred_region
          _
        $region20: #{_lambda_.3} parent=11 // pred_fallthru
          _
        // Predicated region
        $region21: #{_lambda_.3} parent=11 // pred_check
          %p374 = pneg %p165
        $region22: #{_lambda_.3} parent=11 // pred_check_branch
          %376 = sbr.rel (%p374) target = $region24
        $region23: #{_lambda_.3} parent=11 // pred_region
          _
        $region24: #{_lambda_.3} parent=11 // pred_fallthru
          _
        // Predicated region
        $region25: #{_lambda_.3} parent=11 // pred_check
          %p377 = pneg %p186
        $region26: #{_lambda_.3} parent=11 // pred_check_branch
          %379 = sbr.rel (%p377) target = $region28
        $region27: #{_lambda_.3} parent=11 // pred_region
          %s381 = ssub.s32 256, 256
          %382 = vsyncadd [#allocation5], %s381
          %s383 = sshll.u32 [#allocation4], 4
          %s384 = int_to_ptr.vmem [resolvable:$true] %s383
          %389 = dma.hbm_to_vmem [thread:$0]  %s6, 256, %s384, [#allocation5], 64, 64, 4
        $region28: #{_lambda_.3} parent=11 // pred_fallthru
          _
        // Predicated region
        $region29: #{_lambda_.3} parent=11 // pred_check
          %p390 = pneg %p207
        $region30: #{_lambda_.3} parent=11 // pred_check_branch
          %392 = sbr.rel (%p390) target = $region32
        $region31: #{_lambda_.3} parent=11 // pred_region
          _
        $region32: #{_lambda_.3} parent=11 // pred_fallthru
          _
        // Predicated region
        $region33: #{_lambda_.3} parent=11 // pred_check
          %p393 = pneg %p228
        $region34: #{_lambda_.3} parent=11 // pred_check_branch
          %395 = sbr.rel (%p393) target = $region36
        $region35: #{_lambda_.3} parent=11 // pred_region
          _
        $region36: #{_lambda_.3} parent=11 // pred_fallthru
          _
        // Predicated region
        $region37: #{_lambda_.3} parent=11 // pred_check
          %p396 = pneg %p249
        $region38: #{_lambda_.3} parent=11 // pred_check_branch
          %398 = sbr.rel (%p396) target = $region40
        $region39: #{_lambda_.3} parent=11 // pred_region
          _
        $region40: #{_lambda_.3} parent=11 // pred_fallthru
          _
      $region12: #{_lambda_.3} parent=5 // pred_fallthru
        _
      %p399 = scmp.lt.s32.totalorder %s24, 2
      // Predicated region
      $region41: #{_lambda_.3} parent=5 // pred_check
        %p400 = pneg %p399
      $region42: #{_lambda_.3} parent=5 // pred_check_branch
        %402 = sbr.rel (%p400) target = $region44
      $region43: #{_lambda_.3} parent=5 // pred_region
        // Predicated region
        $region45: #{_lambda_.3} parent=43 // pred_check
          %p403 = pneg %p44
        $region46: #{_lambda_.3} parent=43 // pred_check_branch
          %405 = sbr.rel (%p403) target = $region48
        $region47: #{_lambda_.3} parent=43 // pred_region
          %s406 = sand.u32 %s34, 1
          %s407 = scalar_lea.sflag [#allocation3], %s406
          %s408 = sand.u32 %s34, 1
          %s409 = smul.addr %s408, 64
          %s410 = scalar_lea.vmem [#allocation2], %s409
          %s412 = ssub.s32 1024, 1024
          %413 = vsyncadd %s407, %s412
          %s414 = smul.addr %s24, 8
          %s415 = smul.addr %s414, 128
          %s416 = scalar_lea.hbm %s0, %s415
          %s417 = sshll.u32 %s410, 4
          %s418 = int_to_ptr.vmem [resolvable:$true] %s417
          %423 = dma.hbm_to_vmem [thread:$0]  %s416, 1024, %s418, %s407, 128, 128, 8
        $region48: #{_lambda_.3} parent=43 // pred_fallthru
          _
        // Predicated region
        $region49: #{_lambda_.3} parent=43 // pred_check
          %p424 = pneg %p91
        $region50: #{_lambda_.3} parent=43 // pred_check_branch
          %426 = sbr.rel (%p424) target = $region52
        $region51: #{_lambda_.3} parent=43 // pred_region
          %p427 = scmp.lt.s32.totalorder %s24, 1
          %s428 = scalar_select %p427, %s24, 1
          %s429 = scalar_lea.vmem %s2, %s428
        $region52: #{_lambda_.3} parent=43 // pred_fallthru
          _
        // Predicated region
        $region53: #{_lambda_.3} parent=43 // pred_check
          %p430 = pneg %p117
        $region54: #{_lambda_.3} parent=43 // pred_check_branch
          %432 = sbr.rel (%p430) target = $region56
        $region55: #{_lambda_.3} parent=43 // pred_region
          %p433 = scmp.lt.s32.totalorder %s24, 1
          %s434 = scalar_select %p433, %s24, 1
          %s435 = scalar_lea.vmem %s3, %s434
        $region56: #{_lambda_.3} parent=43 // pred_fallthru
          _
      $region44: #{_lambda_.3} parent=5 // pred_fallthru
        _
      %p436 = scmp.le.s32.totalorder 1, %s24
      %p437 = scmp.lt.s32.totalorder %s24, 3
      %p438 = pnand %p436, %p437
      %p439 = pneg %p438
      // Predicated region
      $region57: #{_lambda_.3} parent=5 // pred_check
        _
      $region58: #{_lambda_.3} parent=5 // pred_check_branch
        %441 = sbr.rel (%p438) target = $region60
      $region59: #{_lambda_.3} parent=5 // pred_region
        %s442 = ssub.s32 %s24, 1
        %s443 = sand.u32 %s37, 1
        %s444 = scalar_lea.sflag [#allocation3], %s443
        %s445 = sand.u32 %s37, 1
        %s446 = smul.addr %s445, 64
        %s447 = scalar_lea.vmem [#allocation2], %s446
        // Predicated region
        $region61: #{_lambda_.3} parent=59 // pred_check
          %p448 = pneg %p50
        $region62: #{_lambda_.3} parent=59 // pred_check_branch
          %450 = sbr.rel (%p448) target = $region64
        $region63: #{_lambda_.3} parent=59 // pred_region
          %451 = dma.done %s444, 1024
        $region64: #{_lambda_.3} parent=59 // pred_fallthru
          _
        // Predicated region
        $region65: #{_lambda_.3} parent=59 // pred_check
          %p452 = pneg %p186
        $region66: #{_lambda_.3} parent=59 // pred_check_branch
          %454 = sbr.rel (%p452) target = $region68
        $region67: #{_lambda_.3} parent=59 // pred_region
          %455 = dma.done [#allocation5], 256
        $region68: #{_lambda_.3} parent=59 // pred_fallthru
          _
        %s456 = sand.u32 %s37, 1
        %s457 = scalar_lea.sflag [#allocation3], %s456
        %s458 = sand.u32 %s37, 1
        %s459 = smul.addr %s458, 64
        %s460 = scalar_lea.vmem [#allocation2], %s459
        %p461 = pneg %p50
        %p462 = pneg %p47
        %p463 = pneg %p71
        %p464 = pneg %p68
        %p465 = scmp.lt.s32.totalorder %s29, 1
        %s466 = scalar_select %p465, %s29, 1
        %s467 = scalar_lea.vmem %s2, %s466
        %p468 = pneg %p97
        %p469 = pneg %p94
        %p470 = scmp.lt.s32.totalorder %s29, 1
        %s471 = scalar_select %p470, %s29, 1
        %s472 = scalar_lea.vmem %s3, %s471
        %p473 = pneg %p123
        %p474 = pneg %p120
        %p475 = pneg %p144
        %p476 = pneg %p141
        %p477 = pneg %p165
        %p478 = pneg %p162
        %p479 = pneg %p186
        %p480 = pneg %p183
        %p481 = pneg %p207
        %p482 = pneg %p204
        %p483 = pneg %p228
        %p484 = pneg %p225
        %p485 = pneg %p249
        %p486 = pneg %p246
        %p487 = pneg %p275
        %p488 = pneg %p272
        %p489 = scmp.lt.s32.totalorder %s29, 1
        %s490 = scalar_select %p489, %s29, 1
        %s491 = smul.addr %s490, 8
        %s492 = smul.addr %s491, 8
        %s493 = scalar_lea.vmem %s10, %s492
        %p494 = pneg %p301
        %p495 = pneg %p298
        %p496 = scmp.lt.s32.totalorder %s29, 1
        %s497 = scalar_select %p496, %s29, 1
        %s498 = smul.addr %s497, 8
        %s499 = smul.addr %s498, 4
        %s500 = scalar_lea.vmem %s11, %s499
        %p501 = pneg %p327
        %p502 = pneg %p324
        %p503 = scmp.lt.s32.totalorder %s29, 1
        %s504 = scalar_select %p503, %s29, 1
        %s505 = smul.addr %s504, 8
        %s506 = smul.addr %s505, 4
        %s507 = scalar_lea.vmem %s12, %s506
        %p508 = pneg %p353
        %p509 = pneg %p350
        %p510 = scmp.lt.s32.totalorder %s29, 1
        %s511 = scalar_select %p510, %s29, 1
        %s512 = smul.addr %s511, 8
        %s513 = smul.addr %s512, 4
        %s514 = scalar_lea.vmem %s13, %s513
        %p515 = scmp.lt.s32.totalorder %s29, 1
        %s516 = scalar_select %p515, %s29, 1
        %s517 = scalar_lea.vmem %s2, %s516
        %p518 = scmp.lt.s32.totalorder %s29, 1
        %s519 = scalar_select %p518, %s29, 1
        %s520 = scalar_lea.vmem %s3, %s519
        %p521 = scmp.lt.s32.totalorder %s29, 1
        %s522 = scalar_select %p521, %s29, 1
        %s523 = smul.addr %s522, 8
        %s524 = smul.addr %s523, 8
        %s525 = scalar_lea.vmem %s10, %s524
        %p526 = scmp.lt.s32.totalorder %s29, 1
        %s527 = scalar_select %p526, %s29, 1
        %s528 = smul.addr %s527, 8
        %s529 = smul.addr %s528, 4
        %s530 = scalar_lea.vmem %s11, %s529
        %p531 = scmp.lt.s32.totalorder %s29, 1
        %s532 = scalar_select %p531, %s29, 1
        %s533 = smul.addr %s532, 8
        %s534 = smul.addr %s533, 4
        %s535 = scalar_lea.vmem %s12, %s534
        %p536 = scmp.lt.s32.totalorder %s29, 1
        %s537 = scalar_select %p536, %s29, 1
        %s538 = smul.addr %s537, 8
        %s539 = smul.addr %s538, 4
        %s540 = scalar_lea.vmem %s13, %s539
        %v542 = vld [vmem:[%s447] sm:$0xff]
        %v543 = vld [vmem:[%s447 + $0x8] sm:$0xff]
        %v544 = vld [vmem:[%s447 + $0x10] sm:$0xff]
        %v545 = vld [vmem:[%s447 + $0x18] sm:$0xff]
        %v546 = vld [vmem:[%s447 + $0x20] sm:$0xff]
        %v547 = vld [vmem:[%s447 + $0x28] sm:$0xff]
        %v548 = vld [vmem:[%s447 + $0x30] sm:$0xff]
        %v549 = vld [vmem:[%s447 + $0x38] sm:$0xff]
        %v550 = vld [vmem:[%s1] sm:$0xff]
        %v551 = vld [vmem:[%s1 + $0x8] sm:$0xff]
        %v552 = vld [vmem:[%s1 + $0x10] sm:$0xff]
        %v553 = vld [vmem:[%s1 + $0x18] sm:$0xff]
        %v554 = vld [vmem:[%s1 + $0x20] sm:$0xff]
        %v555 = vld [vmem:[%s1 + $0x28] sm:$0xff]
        %v556 = vld [vmem:[%s1 + $0x30] sm:$0xff]
        %v557 = vld [vmem:[%s1 + $0x38] sm:$0xff]
        %v558 = vadd.f32 %v542, %v550
        %v559 = vadd.f32 %v543, %v551
        %v560 = vadd.f32 %v544, %v552
        %v561 = vadd.f32 %v545, %v553
        %v562 = vadd.f32 %v546, %v554
        %v563 = vadd.f32 %v547, %v555
        %v564 = vadd.f32 %v548, %v556
        %v565 = vadd.f32 %v549, %v557
        %vm566 = vcmask 261120
        %567 = vst.msk [vmem:[%s525] sm:$0xff] %vm566, %v558
        %568 = vst.msk [vmem:[%s525 + $0x8] sm:$0xff] %vm566, %v559
        %569 = vst.msk [vmem:[%s525 + $0x10] sm:$0xff] %vm566, %v560
        %570 = vst.msk [vmem:[%s525 + $0x18] sm:$0xff] %vm566, %v561
        %571 = vst.msk [vmem:[%s525 + $0x20] sm:$0xff] %vm566, %v562
        %572 = vst.msk [vmem:[%s525 + $0x28] sm:$0xff] %vm566, %v563
        %573 = vst.msk [vmem:[%s525 + $0x30] sm:$0xff] %vm566, %v564
        %574 = vst.msk [vmem:[%s525 + $0x38] sm:$0xff] %vm566, %v565
        %v575 = vsel %vm566, %v558, 0.0
        %v576 = vsel %vm566, %v559, 0.0
        %v577 = vadd.f32 %v575, %v576
        %v578 = vsel %vm566, %v560, 0.0
        %v579 = vadd.f32 %v577, %v578
        %v580 = vsel %vm566, %v561, 0.0
        %v581 = vadd.f32 %v579, %v580
        %v582 = vsel %vm566, %v562, 0.0
        %v583 = vadd.f32 %v581, %v582
        %v584 = vsel %vm566, %v563, 0.0
        %v585 = vadd.f32 %v583, %v584
        %v586 = vsel %vm566, %v564, 0.0
        %v587 = vadd.f32 %v585, %v586
        %v588 = vsel %vm566, %v565, 0.0
        %v589 = vadd.f32 %v587, %v588
        %v590 = vrot.slane %v589, 4
        %v591 = vadd.f32 %v589, %v590
        %v592 = vrot.slane %v591, 2
        %v593 = vadd.f32 %v591, %v592
        %v594 = vrot.slane %v593, 1
        %v595 = vadd.f32 %v593, %v594
        %v596 = vrcp.pop 64.0
        %v597 = vmul.f32 %v595, %v596
        %v598 = vsub.f32 %v558, %v597
        %v599 = vsub.f32 %v559, %v597
        %v600 = vsub.f32 %v560, %v597
        %v601 = vsub.f32 %v561, %v597
        %v602 = vsub.f32 %v562, %v597
        %v603 = vsub.f32 %v563, %v597
        %v604 = vsub.f32 %v564, %v597
        %v605 = vsub.f32 %v565, %v597
        %v606 = vmul.f32 %v598, %v598
        %v607 = vmul.f32 %v599, %v599
        %v608 = vmul.f32 %v600, %v600
        %v609 = vmul.f32 %v601, %v601
        %v610 = vmul.f32 %v602, %v602
        %v611 = vmul.f32 %v603, %v603
        %v612 = vmul.f32 %v604, %v604
        %v613 = vmul.f32 %v605, %v605
        %v614 = vsel %vm566, %v606, 0.0
        %v615 = vsel %vm566, %v607, 0.0
        %v616 = vadd.f32 %v614, %v615
        %v617 = vsel %vm566, %v608, 0.0
        %v618 = vadd.f32 %v616, %v617
        %v619 = vsel %vm566, %v609, 0.0
        %v620 = vadd.f32 %v618, %v619
        %v621 = vsel %vm566, %v610, 0.0
        %v622 = vadd.f32 %v620, %v621
        %v623 = vsel %vm566, %v611, 0.0
        %v624 = vadd.f32 %v622, %v623
        %v625 = vsel %vm566, %v612, 0.0
        %v626 = vadd.f32 %v624, %v625
        %v627 = vsel %vm566, %v613, 0.0
        %v628 = vadd.f32 %v626, %v627
        %v629 = vrot.slane %v628, 4
        %v630 = vadd.f32 %v628, %v629
        %v631 = vrot.slane %v630, 2
        %v632 = vadd.f32 %v630, %v631
        %v633 = vrot.slane %v632, 1
        %v634 = vadd.f32 %v632, %v633
        %v635 = vmul.f32 %v634, %v596
        %v636 = vld [vmem:[%s517] sm:$0x1]
        %v637 = vadd.f32 %v635, 1e-05
        %v638 = vrsqrt.pop %v637
        %v639 = vmul.f32 %v598, %v638
        %v640 = vmul.f32 %v599, %v638
        %v641 = vmul.f32 %v600, %v638
        %v642 = vmul.f32 %v601, %v638
        %v643 = vmul.f32 %v602, %v638
        %v644 = vmul.f32 %v603, %v638
        %v645 = vmul.f32 %v604, %v638
        %v646 = vmul.f32 %v605, %v638
        %v648 = vlaneseq
        %v649 = vshrl.u32 %v648, 7
        %v650 = vsub.s32 0, %v649
        %v651 = vrot.slane %v636, %v650
        %v653 = vmul.f32 %v651, %v639
        %v654 = vmul.f32 %v651, %v640
        %v655 = vmul.f32 %v651, %v641
        %v656 = vmul.f32 %v651, %v642
        %v657 = vmul.f32 %v651, %v643
        %v658 = vmul.f32 %v651, %v644
        %v659 = vmul.f32 %v651, %v645
        %v660 = vmul.f32 %v651, %v646
        %v661 = vld [vmem:[%s520] sm:$0x1]
        %v663 = vlaneseq
        %v664 = vshrl.u32 %v663, 7
        %v665 = vsub.s32 0, %v664
        %v666 = vrot.slane %v661, %v665
        %v668 = vadd.f32 %v653, %v666
        %v669 = vadd.f32 %v654, %v666
        %v670 = vadd.f32 %v655, %v666
        %v671 = vadd.f32 %v656, %v666
        %v672 = vadd.f32 %v657, %v666
        %v673 = vadd.f32 %v658, %v666
        %v674 = vadd.f32 %v659, %v666
        %v675 = vadd.f32 %v660, %v666
        %v676 = vpack.c.bf16 %v669, %v668
        %v677 = vpack.c.bf16 %v671, %v670
        %v678 = vpack.c.bf16 %v673, %v672
        %v679 = vpack.c.bf16 %v675, %v674
        %v680 = vld [vmem:[%s4] sm:$0xf]
        %v681 = vld [vmem:[%s4 + $0x4] sm:$0xf]
        %v682 = vld [vmem:[%s4 + $0x8] sm:$0xf]
        %v683 = vld [vmem:[%s4 + $0xc] sm:$0xf]
        %v684 = vld [vmem:[%s7] sm:$0x1]
        %v686 = vlaneseq
        %v687 = vshrl.u32 %v686, 7
        %v688 = vsub.s32 0, %v687
        %v689 = vrot.slane %v684, %v688
        %v695 = vunpack.c.l.b16 %v680
        %v696 = vunpack.c.l.b16 %v681
        %v697 = vunpack.c.l.b16 %v682
        %v698 = vunpack.c.l.b16 %v683
        %v699 = vpack.c.b16 %v696, %v695
        %v700 = vpack.c.b16 %v698, %v697
        %v704 = vsel %vm566, %v676, 0
        %v707 = vsel %vm566, %v677, 0
        %v710 = vsel %vm566, %v678, 0
        %v713 = vsel %vm566, %v679, 0
        %715 = vmatprep.subr.bf16.mxu0 0
        %716 = vmatpush1.bf16.msra.mxu0 0
        %717 = vmatprep.subr.bf16.mxu0 0
        %718 = vmatpush1.bf16.msra.mxu0 0
        %719 = vmatprep.subr.bf16.mxu0 0
        %720 = vmatpush1.bf16.msra.mxu0 0
        %721 = vmatprep.subr.bf16.mxu0 0
        %722 = vmatpush1.bf16.msra.mxu0 0
        %723 = vmatprep.subr.bf16.mxu0 0
        %724 = vmatpush1.bf16.msra.mxu0 0
        %725 = vmatprep.subr.bf16.mxu0 0
        %726 = vmatpush1.bf16.msra.mxu0 0
        %727 = vmatprep.subr.bf16.mxu0 0
        %728 = vmatpush1.bf16.msra.mxu0 %v700
        %729 = vmatprep.subr.bf16.mxu0 0
        %730 = vmatpush1.bf16.msra.mxu0 %v699
        %731 = vmatprep.subr.bf16.mxu0 0
        %732 = vmatpush2.bf16.msra.mxu0 0
        %733 = vmatprep.subr.bf16.mxu0 0
        %734 = vmatpush2.bf16.msra.mxu0 0
        %735 = vmatprep.subr.bf16.mxu0 0
        %736 = vmatpush2.bf16.msra.mxu0 0
        %737 = vmatprep.subr.bf16.mxu0 0
        %738 = vmatpush2.bf16.msra.mxu0 0
        %739 = vmatprep.subr.bf16.mxu0 0
        %740 = vmatpush2.bf16.msra.mxu0 0
        %741 = vmatprep.subr.bf16.mxu0 0
        %742 = vmatpush2.bf16.msra.mxu0 0
        %743 = vmatprep.subr.bf16.mxu0 0
        %744 = vmatpush2.bf16.msra.mxu0 0
        %745 = vmatprep.subr.bf16.mxu0 0
        %746 = vmatpush2.bf16.msra.mxu0 0
        %747 = vmatprep.mubr.bf16.mxu0 0
        %748 = vmatmul.mubr.bf16.gmra.mxu0 %v704
        %v749 = vpop.f32.mrf.mxu0
        %v750 = vadd.f32 %v689, %v749
        %v751 = vpop.f32.mrf.mxu0
        %v752 = vpop.f32.mrf.mxu0
        %v753 = vadd.f32 %v689, %v752
        %v754 = vpop.f32.mrf.mxu0
        %755 = vmatprep.mubr.bf16.mxu0 0
        %756 = vmatmul.mubr.bf16.gmra.mxu0 %v707
        %v757 = vpop.f32.mrf.mxu0
        %v758 = vadd.f32 %v689, %v757
        %v759 = vpop.f32.mrf.mxu0
        %v760 = vpop.f32.mrf.mxu0
        %v761 = vadd.f32 %v689, %v760
        %v762 = vpop.f32.mrf.mxu0
        %763 = vmatprep.mubr.bf16.mxu0 0
        %764 = vmatmul.mubr.bf16.gmra.mxu0 %v710
        %v765 = vpop.f32.mrf.mxu0
        %v766 = vadd.f32 %v689, %v765
        %v767 = vpop.f32.mrf.mxu0
        %v768 = vpop.f32.mrf.mxu0
        %v769 = vadd.f32 %v689, %v768
        %v770 = vpop.f32.mrf.mxu0
        %771 = vmatprep.mubr.bf16.mxu0 0
        %772 = vmatmul.mubr.bf16.gmra.mxu0 %v713
        %v773 = vpop.f32.mrf.mxu0
        %v774 = vadd.f32 %v689, %v773
        %v775 = vpop.f32.mrf.mxu0
        %v776 = vpop.f32.mrf.mxu0
        %v777 = vadd.f32 %v689, %v776
        %v778 = vpop.f32.mrf.mxu0
        %779 = vdwg.mxu0
        %v780 = vpack.c.bf16 %v750, %v750
        %v781 = vpack.c.bf16 %v753, %v753
        %v782 = vpack.c.bf16 %v758, %v758
        %v783 = vpack.c.bf16 %v761, %v761
        %v784 = vpack.c.bf16 %v766, %v766
        %v785 = vpack.c.bf16 %v769, %v769
        %v786 = vpack.c.bf16 %v774, %v774
        %v787 = vpack.c.bf16 %v777, %v777
        %vm788 = vcmask 257024
        %789 = vst.msk [vmem:[%s530] sm:$0xf] %vm788, %v780
        %790 = vst.msk [vmem:[%s530 + $0x4] sm:$0xf] %vm788, %v781
        %791 = vst.msk [vmem:[%s530 + $0x8] sm:$0xf] %vm788, %v782
        %792 = vst.msk [vmem:[%s530 + $0xc] sm:$0xf] %vm788, %v783
        %793 = vst.msk [vmem:[%s530 + $0x10] sm:$0xf] %vm788, %v784
        %794 = vst.msk [vmem:[%s530 + $0x14] sm:$0xf] %vm788, %v785
        %795 = vst.msk [vmem:[%s530 + $0x18] sm:$0xf] %vm788, %v786
        %796 = vst.msk [vmem:[%s530 + $0x1c] sm:$0xf] %vm788, %v787
        %v797 = vld [vmem:[%s5] sm:$0xf]
        %v798 = vld [vmem:[%s5 + $0x4] sm:$0xf]
        %v799 = vld [vmem:[%s5 + $0x8] sm:$0xf]
        %v800 = vld [vmem:[%s5 + $0xc] sm:$0xf]
        %v801 = vld [vmem:[%s8] sm:$0x1]
        %v803 = vlaneseq
        %v804 = vshrl.u32 %v803, 7
        %v805 = vsub.s32 0, %v804
        %v806 = vrot.slane %v801, %v805
        %v812 = vunpack.c.l.b16 %v797
        %v813 = vunpack.c.l.b16 %v798
        %v814 = vunpack.c.l.b16 %v799
        %v815 = vunpack.c.l.b16 %v800
        %v816 = vpack.c.b16 %v813, %v812
        %v817 = vpack.c.b16 %v815, %v814
        %820 = vmatprep.subr.bf16.mxu0 0
        %821 = vmatpush1.bf16.msra.mxu0 0
        %822 = vmatprep.subr.bf16.mxu0 0
        %823 = vmatpush1.bf16.msra.mxu0 0
        %824 = vmatprep.subr.bf16.mxu0 0
        %825 = vmatpush1.bf16.msra.mxu0 0
        %826 = vmatprep.subr.bf16.mxu0 0
        %827 = vmatpush1.bf16.msra.mxu0 0
        %828 = vmatprep.subr.bf16.mxu0 0
        %829 = vmatpush1.bf16.msra.mxu0 0
        %830 = vmatprep.subr.bf16.mxu0 0
        %831 = vmatpush1.bf16.msra.mxu0 0
        %832 = vmatprep.subr.bf16.mxu0 0
        %833 = vmatpush1.bf16.msra.mxu0 %v817
        %834 = vmatprep.subr.bf16.mxu0 0
        %835 = vmatpush1.bf16.msra.mxu0 %v816
        %836 = vmatprep.subr.bf16.mxu0 0
        %837 = vmatpush2.bf16.msra.mxu0 0
        %838 = vmatprep.subr.bf16.mxu0 0
        %839 = vmatpush2.bf16.msra.mxu0 0
        %840 = vmatprep.subr.bf16.mxu0 0
        %841 = vmatpush2.bf16.msra.mxu0 0
        %842 = vmatprep.subr.bf16.mxu0 0
        %843 = vmatpush2.bf16.msra.mxu0 0
        %844 = vmatprep.subr.bf16.mxu0 0
        %845 = vmatpush2.bf16.msra.mxu0 0
        %846 = vmatprep.subr.bf16.mxu0 0
        %847 = vmatpush2.bf16.msra.mxu0 0
        %848 = vmatprep.subr.bf16.mxu0 0
        %849 = vmatpush2.bf16.msra.mxu0 0
        %850 = vmatprep.subr.bf16.mxu0 0
        %851 = vmatpush2.bf16.msra.mxu0 0
        %852 = vmatprep.mubr.bf16.mxu0 0
        %853 = vmatmul.mubr.bf16.gmra.mxu0 %v704
        %v854 = vpop.f32.mrf.mxu0
        %v855 = vadd.f32 %v806, %v854
        %v856 = vpop.f32.mrf.mxu0
        %v857 = vpop.f32.mrf.mxu0
        %v858 = vadd.f32 %v806, %v857
        %v859 = vpop.f32.mrf.mxu0
        %860 = vmatprep.mubr.bf16.mxu0 0
        %861 = vmatmul.mubr.bf16.gmra.mxu0 %v707
        %v862 = vpop.f32.mrf.mxu0
        %v863 = vadd.f32 %v806, %v862
        %v864 = vpop.f32.mrf.mxu0
        %v865 = vpop.f32.mrf.mxu0
        %v866 = vadd.f32 %v806, %v865
        %v867 = vpop.f32.mrf.mxu0
        %868 = vmatprep.mubr.bf16.mxu0 0
        %869 = vmatmul.mubr.bf16.gmra.mxu0 %v710
        %v870 = vpop.f32.mrf.mxu0
        %v871 = vadd.f32 %v806, %v870
        %v872 = vpop.f32.mrf.mxu0
        %v873 = vpop.f32.mrf.mxu0
        %v874 = vadd.f32 %v806, %v873
        %v875 = vpop.f32.mrf.mxu0
        %876 = vmatprep.mubr.bf16.mxu0 0
        %877 = vmatmul.mubr.bf16.gmra.mxu0 %v713
        %v878 = vpop.f32.mrf.mxu0
        %v879 = vadd.f32 %v806, %v878
        %v880 = vpop.f32.mrf.mxu0
        %v881 = vpop.f32.mrf.mxu0
        %v882 = vadd.f32 %v806, %v881
        %v883 = vpop.f32.mrf.mxu0
        %884 = vdwg.mxu0
        %v885 = vpack.c.bf16 %v855, %v855
        %v886 = vpack.c.bf16 %v858, %v858
        %v887 = vpack.c.bf16 %v863, %v863
        %v888 = vpack.c.bf16 %v866, %v866
        %v889 = vpack.c.bf16 %v871, %v871
        %v890 = vpack.c.bf16 %v874, %v874
        %v891 = vpack.c.bf16 %v879, %v879
        %v892 = vpack.c.bf16 %v882, %v882
        %893 = vst.msk [vmem:[%s535] sm:$0xf] %vm788, %v885
        %894 = vst.msk [vmem:[%s535 + $0x4] sm:$0xf] %vm788, %v886
        %895 = vst.msk [vmem:[%s535 + $0x8] sm:$0xf] %vm788, %v887
        %896 = vst.msk [vmem:[%s535 + $0xc] sm:$0xf] %vm788, %v888
        %897 = vst.msk [vmem:[%s535 + $0x10] sm:$0xf] %vm788, %v889
        %898 = vst.msk [vmem:[%s535 + $0x14] sm:$0xf] %vm788, %v890
        %899 = vst.msk [vmem:[%s535 + $0x18] sm:$0xf] %vm788, %v891
        %900 = vst.msk [vmem:[%s535 + $0x1c] sm:$0xf] %vm788, %v892
        %v901 = vld [vmem:[#allocation4] sm:$0xf]
        %v902 = vld [vmem:[#allocation4 + $0x4] sm:$0xf]
        %v903 = vld [vmem:[#allocation4 + $0x8] sm:$0xf]
        %v904 = vld [vmem:[#allocation4 + $0xc] sm:$0xf]
        %v905 = vld [vmem:[%s9] sm:$0x1]
        %v907 = vlaneseq
        %v908 = vshrl.u32 %v907, 7
        %v909 = vsub.s32 0, %v908
        %v910 = vrot.slane %v905, %v909
        %v916 = vunpack.c.l.b16 %v901
        %v917 = vunpack.c.l.b16 %v902
        %v918 = vunpack.c.l.b16 %v903
        %v919 = vunpack.c.l.b16 %v904
        %v920 = vpack.c.b16 %v917, %v916
        %v921 = vpack.c.b16 %v919, %v918
        %924 = vmatprep.subr.bf16.mxu0 0
        %925 = vmatpush1.bf16.msra.mxu0 0
        %926 = vmatprep.subr.bf16.mxu0 0
        %927 = vmatpush1.bf16.msra.mxu0 0
        %928 = vmatprep.subr.bf16.mxu0 0
        %929 = vmatpush1.bf16.msra.mxu0 0
        %930 = vmatprep.subr.bf16.mxu0 0
        %931 = vmatpush1.bf16.msra.mxu0 0
        %932 = vmatprep.subr.bf16.mxu0 0
        %933 = vmatpush1.bf16.msra.mxu0 0
        %934 = vmatprep.subr.bf16.mxu0 0
        %935 = vmatpush1.bf16.msra.mxu0 0
        %936 = vmatprep.subr.bf16.mxu0 0
        %937 = vmatpush1.bf16.msra.mxu0 %v921
        %938 = vmatprep.subr.bf16.mxu0 0
        %939 = vmatpush1.bf16.msra.mxu0 %v920
        %940 = vmatprep.subr.bf16.mxu0 0
        %941 = vmatpush2.bf16.msra.mxu0 0
        %942 = vmatprep.subr.bf16.mxu0 0
        %943 = vmatpush2.bf16.msra.mxu0 0
        %944 = vmatprep.subr.bf16.mxu0 0
        %945 = vmatpush2.bf16.msra.mxu0 0
        %946 = vmatprep.subr.bf16.mxu0 0
        %947 = vmatpush2.bf16.msra.mxu0 0
        %948 = vmatprep.subr.bf16.mxu0 0
        %949 = vmatpush2.bf16.msra.mxu0 0
        %950 = vmatprep.subr.bf16.mxu0 0
        %951 = vmatpush2.bf16.msra.mxu0 0
        %952 = vmatprep.subr.bf16.mxu0 0
        %953 = vmatpush2.bf16.msra.mxu0 0
        %954 = vmatprep.subr.bf16.mxu0 0
        %955 = vmatpush2.bf16.msra.mxu0 0
        %956 = vmatprep.mubr.bf16.mxu0 0
        %957 = vmatmul.mubr.bf16.gmra.mxu0 %v704
        %v958 = vpop.f32.mrf.mxu0
        %v959 = vadd.f32 %v910, %v958
        %v960 = vpop.f32.mrf.mxu0
        %v961 = vpop.f32.mrf.mxu0
        %v962 = vadd.f32 %v910, %v961
        %v963 = vpop.f32.mrf.mxu0
        %964 = vmatprep.mubr.bf16.mxu0 0
        %965 = vmatmul.mubr.bf16.gmra.mxu0 %v707
        %v966 = vpop.f32.mrf.mxu0
        %v967 = vadd.f32 %v910, %v966
        %v968 = vpop.f32.mrf.mxu0
        %v969 = vpop.f32.mrf.mxu0
        %v970 = vadd.f32 %v910, %v969
        %v971 = vpop.f32.mrf.mxu0
        %972 = vmatprep.mubr.bf16.mxu0 0
        %973 = vmatmul.mubr.bf16.gmra.mxu0 %v710
        %v974 = vpop.f32.mrf.mxu0
        %v975 = vadd.f32 %v910, %v974
        %v976 = vpop.f32.mrf.mxu0
        %v977 = vpop.f32.mrf.mxu0
        %v978 = vadd.f32 %v910, %v977
        %v979 = vpop.f32.mrf.mxu0
        %980 = vmatprep.mubr.bf16.mxu0 0
        %981 = vmatmul.mubr.bf16.gmra.mxu0 %v713
        %v982 = vpop.f32.mrf.mxu0
        %v983 = vadd.f32 %v910, %v982
        %v984 = vpop.f32.mrf.mxu0
        %v985 = vpop.f32.mrf.mxu0
        %v986 = vadd.f32 %v910, %v985
        %v987 = vpop.f32.mrf.mxu0
        %988 = vdwg.mxu0
        %v989 = vpack.c.bf16 %v959, %v959
        %v990 = vpack.c.bf16 %v962, %v962
        %v991 = vpack.c.bf16 %v967, %v967
        %v992 = vpack.c.bf16 %v970, %v970
        %v993 = vpack.c.bf16 %v975, %v975
        %v994 = vpack.c.bf16 %v978, %v978
        %v995 = vpack.c.bf16 %v983, %v983
        %v996 = vpack.c.bf16 %v986, %v986
        %997 = vst.msk [vmem:[%s540] sm:$0xf] %vm788, %v989
        %998 = vst.msk [vmem:[%s540 + $0x4] sm:$0xf] %vm788, %v990
        %999 = vst.msk [vmem:[%s540 + $0x8] sm:$0xf] %vm788, %v991
        %1000 = vst.msk [vmem:[%s540 + $0xc] sm:$0xf] %vm788, %v992
        %1001 = vst.msk [vmem:[%s540 + $0x10] sm:$0xf] %vm788, %v993
        %1002 = vst.msk [vmem:[%s540 + $0x14] sm:$0xf] %vm788, %v994
        %1003 = vst.msk [vmem:[%s540 + $0x18] sm:$0xf] %vm788, %v995
        %1004 = vst.msk [vmem:[%s540 + $0x1c] sm:$0xf] %vm788, %v996
        %p1005 = scmp.lt.s32.totalorder %s29, 1
        %s1006 = scalar_select %p1005, %s29, 1
        %s1007 = smul.addr %s1006, 8
        %s1008 = smul.addr %s1007, 8
        %s1009 = scalar_lea.vmem %s10, %s1008
        %p1010 = scmp.lt.s32.totalorder %s29, 1
        %s1011 = scalar_select %p1010, %s29, 1
        %s1012 = smul.addr %s1011, 8
        %s1013 = smul.addr %s1012, 4
        %s1014 = scalar_lea.vmem %s11, %s1013
        %p1015 = scmp.lt.s32.totalorder %s29, 1
        %s1016 = scalar_select %p1015, %s29, 1
        %s1017 = smul.addr %s1016, 8
        %s1018 = smul.addr %s1017, 4
        %s1019 = scalar_lea.vmem %s12, %s1018
        %p1020 = scmp.lt.s32.totalorder %s29, 1
        %s1021 = scalar_select %p1020, %s29, 1
        %s1022 = smul.addr %s1021, 8
        %s1023 = smul.addr %s1022, 4
        %s1024 = scalar_lea.vmem %s13, %s1023
        // Predicated region
        $region69: #{_lambda_.3} parent=59 // pred_check
          %p1025 = pneg %p272
        $region70: #{_lambda_.3} parent=59 // pred_check_branch
          %1027 = sbr.rel (%p1025) target = $region72
        $region71: #{_lambda_.3} parent=59 // pred_region
          _
        $region72: #{_lambda_.3} parent=59 // pred_fallthru
          _
        // Predicated region
        $region73: #{_lambda_.3} parent=59 // pred_check
          %p1028 = pneg %p298
        $region74: #{_lambda_.3} parent=59 // pred_check_branch
          %1030 = sbr.rel (%p1028) target = $region76
        $region75: #{_lambda_.3} parent=59 // pred_region
          _
        $region76: #{_lambda_.3} parent=59 // pred_fallthru
          _
        // Predicated region
        $region77: #{_lambda_.3} parent=59 // pred_check
          %p1031 = pneg %p324
        $region78: #{_lambda_.3} parent=59 // pred_check_branch
          %1033 = sbr.rel (%p1031) target = $region80
        $region79: #{_lambda_.3} parent=59 // pred_region
          _
        $region80: #{_lambda_.3} parent=59 // pred_fallthru
          _
        // Predicated region
        $region81: #{_lambda_.3} parent=59 // pred_check
          %p1034 = pneg %p350
        $region82: #{_lambda_.3} parent=59 // pred_check_branch
          %1036 = sbr.rel (%p1034) target = $region84
        $region83: #{_lambda_.3} parent=59 // pred_region
          _
        $region84: #{_lambda_.3} parent=59 // pred_fallthru
          _
      $region60: #{_lambda_.3} parent=5 // pred_fallthru
        _
      %p1037 = scmp.le.s32.totalorder 2, %s24
      // Predicated region
      $region85: #{_lambda_.3} parent=5 // pred_check
        %p1038 = pneg %p1037
      $region86: #{_lambda_.3} parent=5 // pred_check_branch
        %1040 = sbr.rel (%p1038) target = $region88
      $region87: #{_lambda_.3} parent=5 // pred_region
        %s1041 = ssub.s32 %s24, 2
        // Predicated region
        $region89: #{_lambda_.3} parent=87 // pred_check
          %p1042 = pneg %p278
        $region90: #{_lambda_.3} parent=87 // pred_check_branch
          %1044 = sbr.rel (%p1042) target = $region92
        $region91: #{_lambda_.3} parent=87 // pred_region
          %p1045 = scmp.lt.s32.totalorder %s30, 1
          %s1046 = scalar_select %p1045, %s30, 1
          %s1047 = smul.addr %s1046, 8
          %s1048 = smul.addr %s1047, 8
          %s1049 = scalar_lea.vmem %s10, %s1048
        $region92: #{_lambda_.3} parent=87 // pred_fallthru
          _
        // Predicated region
        $region93: #{_lambda_.3} parent=87 // pred_check
          %p1050 = pneg %p304
        $region94: #{_lambda_.3} parent=87 // pred_check_branch
          %1052 = sbr.rel (%p1050) target = $region96
        $region95: #{_lambda_.3} parent=87 // pred_region
          %p1053 = scmp.lt.s32.totalorder %s30, 1
          %s1054 = scalar_select %p1053, %s30, 1
          %s1055 = smul.addr %s1054, 8
          %s1056 = smul.addr %s1055, 4
          %s1057 = scalar_lea.vmem %s11, %s1056
        $region96: #{_lambda_.3} parent=87 // pred_fallthru
          _
        // Predicated region
        $region97: #{_lambda_.3} parent=87 // pred_check
          %p1058 = pneg %p330
        $region98: #{_lambda_.3} parent=87 // pred_check_branch
          %1060 = sbr.rel (%p1058) target = $region100
        $region99: #{_lambda_.3} parent=87 // pred_region
          %p1061 = scmp.lt.s32.totalorder %s30, 1
          %s1062 = scalar_select %p1061, %s30, 1
          %s1063 = smul.addr %s1062, 8
          %s1064 = smul.addr %s1063, 4
          %s1065 = scalar_lea.vmem %s12, %s1064
        $region100: #{_lambda_.3} parent=87 // pred_fallthru
          _
        // Predicated region
        $region101: #{_lambda_.3} parent=87 // pred_check
          %p1066 = pneg %p356
        $region102: #{_lambda_.3} parent=87 // pred_check_branch
          %1068 = sbr.rel (%p1066) target = $region104
        $region103: #{_lambda_.3} parent=87 // pred_region
          %p1069 = scmp.lt.s32.totalorder %s30, 1
          %s1070 = scalar_select %p1069, %s30, 1
          %s1071 = smul.addr %s1070, 8
          %s1072 = smul.addr %s1071, 4
          %s1073 = scalar_lea.vmem %s13, %s1072
        $region104: #{_lambda_.3} parent=87 // pred_fallthru
          _
      $region88: #{_lambda_.3} parent=5 // pred_fallthru
        _
    $region6: #{_lambda_.3} parent=1 // loop_footer
      %s28 = sadd.s32 1, %s24
    $region7: #{_lambda_.3} parent=1 // loop_footer_branch
      %23 = sbr.rel target = $region3
    $region8: #{_lambda_.3} parent=1 // loop_exit
      _
    %1074 = vsyncpa [#allocation3], 1
    %s1075 = scalar_lea.sflag [#allocation3], 1
    %1076 = vsyncpa %s1075, 1
    %1077 = vsyncpa [#allocation5], 1

// kernel: _lambda_.5
$region0: #{_lambda_.5}
  #allocation0 [shape = 'u32[]', space=smem, size = 0x4, offset = 0x4, fixed_abs, tag = 'smem constant byte address 0x4 - core index']
  #allocation1 [shape = 'u32[144,128]{1,0:T(1,128)}', space=vmem, size = 0x12000, scoped, tag = 'internal scratch']
  %s0 = inlined_call_operand.vmem [shape: f32[2,8,8,32], index: 0, kind: input, shape index: {}]
  %s1 = inlined_call_operand.vmem [shape: f32[2,8,8,32], index: 1, kind: input, shape index: {}]
  %s2 = inlined_call_operand.vmem [shape: f32[2,1,32], index: 2, kind: input, shape index: {}]
  %s3 = inlined_call_operand.vmem [shape: f32[2,1,32], index: 3, kind: input, shape index: {}]
  %s4 = inlined_call_operand.vmem [shape: f32[1,32], index: 4, kind: input, shape index: {}, may-alias: {4,8,10}]
  %s5 = inlined_call_operand.vmem [shape: bf16[32,128], index: 5, kind: input, shape index: {}]
  %s6 = inlined_call_operand.vmem [shape: f32[1,128], index: 6, kind: input, shape index: {}]
  %s7 = inlined_call_operand.vmem [shape: bf16[128,32], index: 7, kind: input, shape index: {}]
  %s8 = inlined_call_operand.vmem [shape: f32[1,32], index: 8, kind: input, shape index: {}, may-alias: {4,8,10}]
  %s9 = inlined_call_operand.vmem [shape: f32[1,32], index: 9, kind: input, shape index: {}]
  %s10 = inlined_call_operand.vmem [shape: f32[1,32], index: 10, kind: input, shape index: {}, may-alias: {4,8,10}]
  %s11 = inlined_call_operand.vmem [shape: bf16[32,128], index: 11, kind: input, shape index: {}]
  %s12 = inlined_call_operand.vmem [shape: f32[1,128], index: 12, kind: input, shape index: {}]
  %s13 = inlined_call_operand.vmem [shape: bf16[32,128], index: 13, kind: input, shape index: {}]
  %s14 = inlined_call_operand.vmem [shape: f32[1,128], index: 14, kind: input, shape index: {}]
  %s15 = inlined_call_operand.vmem [shape: f32[2,8,8,128], index: 15, kind: output, shape index: {0}]
  %s16 = inlined_call_operand.vmem [shape: f32[2,8,8,128], index: 16, kind: output, shape index: {1}]
  %17 = xla_tuple %s15, %s16
  %s18 = sld [smem:[#allocation0]]
  $region101: #{_lambda_.5} parent=0
    _
  %s20 = ssub.s32 1, %s18
  %s21 = scalar_select 0, %s20, %s18
  loop: start=0, step=1, limit=4
  $region2: #{_lambda_.5} parent=0 // loop_pre_header
    _
  $region3: #{_lambda_.5} parent=0 // loop_header
    %s23 = sphi 0, %s27
    %p24 = scmp.ge.s32.totalorder %s23, 4
    %s33 = sphi 0, %s35
    %s36 = sphi 0, %s33
    %s37 = sphi 0, %s36
    %s53 = sphi 0, %s37
    %s59 = sphi 0, %s61
    %s62 = sphi 0, %s59
    %s63 = sphi 0, %s62
    %s79 = sphi 0, %s63
    %s85 = sphi 0, %s87
    %s88 = sphi 0, %s85
    %s89 = sphi 0, %s88
    %s105 = sphi 0, %s89
    %s111 = sphi 0, %s113
    %s114 = sphi 0, %s111
    %s115 = sphi 0, %s114
    %s131 = sphi 0, %s115
    %s135 = sphi 0, %s135
    %s137 = sphi 0, %s135
    %s138 = sphi 0, %s137
    %s152 = sphi 0, %s138
    %s156 = sphi 0, %s156
    %s158 = sphi 0, %s156
    %s159 = sphi 0, %s158
    %s173 = sphi 0, %s159
    %s177 = sphi 0, %s177
    %s179 = sphi 0, %s177
    %s180 = sphi 0, %s179
    %s194 = sphi 0, %s180
    %s198 = sphi 0, %s198
    %s200 = sphi 0, %s198
    %s201 = sphi 0, %s200
    %s215 = sphi 0, %s201
    %s219 = sphi 0, %s219
    %s221 = sphi 0, %s219
    %s222 = sphi 0, %s221
    %s236 = sphi 0, %s222
    %s240 = sphi 0, %s240
    %s242 = sphi 0, %s240
    %s243 = sphi 0, %s242
    %s257 = sphi 0, %s243
    %s261 = sphi 0, %s261
    %s263 = sphi 0, %s261
    %s264 = sphi 0, %s263
    %s278 = sphi 0, %s264
    %s282 = sphi 0, %s282
    %s284 = sphi 0, %s282
    %s285 = sphi 0, %s284
    %s299 = sphi 0, %s285
    %s303 = sphi 0, %s303
    %s305 = sphi 0, %s303
    %s306 = sphi 0, %s305
    %s320 = sphi 0, %s306
    %s324 = sphi 0, %s324
    %s326 = sphi 0, %s324
    %s327 = sphi 0, %s326
    %s341 = sphi 0, %s327
    %s345 = sphi 0, %s345
    %s347 = sphi 0, %s345
    %s348 = sphi 0, %s347
    %s362 = sphi 0, %s348
    %s368 = sphi 0, %s370
    %s371 = sphi 0, %s368
    %s372 = sphi 0, %s371
    %s388 = sphi 0, %s372
    %s394 = sphi 0, %s396
    %s397 = sphi 0, %s394
    %s398 = sphi 0, %s397
    %s414 = sphi 0, %s398
  $region4: #{_lambda_.5} parent=0 // loop_header_branch
    %26 = sbr.rel (%p24) target = $region8
  $region5: #{_lambda_.5} parent=0 // loop_body
    %s28 = ssub.s32 %s23, 1
    %s29 = ssub.s32 %s23, 2
    %s30 = sadd.s32 %s23, 1
    %s31 = ssub.s32 %s23, %s30
    %p32 = scmp.eq.s32.totalorder %s31, 0
    %s34 = sadd.s32 %s33, 1
    %s35 = scalar_select %p32, %s33, %s34
    %p38 = pneg %p32
    %p39 = scmp.eq.s32.totalorder %s23, 1
    %p40 = por %p38, %p39
    %p41 = scmp.ne.s32.totalorder %s33, %s36
    %p42 = scmp.eq.s32.totalorder %s23, 0
    %p43 = por %p41, %p42
    %p44 = scmp.ne.s32.totalorder %s33, %s36
    %p45 = scmp.eq.s32.totalorder %s28, 1
    %p46 = por %p44, %p45
    %p47 = scmp.ne.s32.totalorder %s36, %s37
    %p48 = scmp.eq.s32.totalorder %s28, 0
    %p49 = por %p47, %p48
    %p50 = scmp.ne.s32.totalorder %s36, %s37
    %p51 = scmp.eq.s32.totalorder %s29, 1
    %p52 = por %p50, %p51
    %p54 = scmp.ne.s32.totalorder %s37, %s53
    %p55 = scmp.eq.s32.totalorder %s29, 0
    %p56 = por %p54, %p55
    %s57 = ssub.s32 %s23, %s30
    %p58 = scmp.eq.s32.totalorder %s57, 0
    %s60 = sadd.s32 %s59, 1
    %s61 = scalar_select %p58, %s59, %s60
    %p64 = pneg %p58
    %p65 = scmp.eq.s32.totalorder %s23, 1
    %p66 = por %p64, %p65
    %p67 = scmp.ne.s32.totalorder %s59, %s62
    %p68 = scmp.eq.s32.totalorder %s23, 0
    %p69 = por %p67, %p68
    %p70 = scmp.ne.s32.totalorder %s59, %s62
    %p71 = scmp.eq.s32.totalorder %s28, 1
    %p72 = por %p70, %p71
    %p73 = scmp.ne.s32.totalorder %s62, %s63
    %p74 = scmp.eq.s32.totalorder %s28, 0
    %p75 = por %p73, %p74
    %p76 = scmp.ne.s32.totalorder %s62, %s63
    %p77 = scmp.eq.s32.totalorder %s29, 1
    %p78 = por %p76, %p77
    %p80 = scmp.ne.s32.totalorder %s63, %s79
    %p81 = scmp.eq.s32.totalorder %s29, 0
    %p82 = por %p80, %p81
    %s83 = ssub.s32 %s23, %s30
    %p84 = scmp.eq.s32.totalorder %s83, 0
    %s86 = sadd.s32 %s85, 1
    %s87 = scalar_select %p84, %s85, %s86
    %p90 = pneg %p84
    %p91 = scmp.eq.s32.totalorder %s23, 1
    %p92 = por %p90, %p91
    %p93 = scmp.ne.s32.totalorder %s85, %s88
    %p94 = scmp.eq.s32.totalorder %s23, 0
    %p95 = por %p93, %p94
    %p96 = scmp.ne.s32.totalorder %s85, %s88
    %p97 = scmp.eq.s32.totalorder %s28, 1
    %p98 = por %p96, %p97
    %p99 = scmp.ne.s32.totalorder %s88, %s89
    %p100 = scmp.eq.s32.totalorder %s28, 0
    %p101 = por %p99, %p100
    %p102 = scmp.ne.s32.totalorder %s88, %s89
    %p103 = scmp.eq.s32.totalorder %s29, 1
    %p104 = por %p102, %p103
    %p106 = scmp.ne.s32.totalorder %s89, %s105
    %p107 = scmp.eq.s32.totalorder %s29, 0
    %p108 = por %p106, %p107
    %s109 = ssub.s32 %s23, %s30
    %p110 = scmp.eq.s32.totalorder %s109, 0
    %s112 = sadd.s32 %s111, 1
    %s113 = scalar_select %p110, %s111, %s112
    %p116 = pneg %p110
    %p117 = scmp.eq.s32.totalorder %s23, 1
    %p118 = por %p116, %p117
    %p119 = scmp.ne.s32.totalorder %s111, %s114
    %p120 = scmp.eq.s32.totalorder %s23, 0
    %p121 = por %p119, %p120
    %p122 = scmp.ne.s32.totalorder %s111, %s114
    %p123 = scmp.eq.s32.totalorder %s28, 1
    %p124 = por %p122, %p123
    %p125 = scmp.ne.s32.totalorder %s114, %s115
    %p126 = scmp.eq.s32.totalorder %s28, 0
    %p127 = por %p125, %p126
    %p128 = scmp.ne.s32.totalorder %s114, %s115
    %p129 = scmp.eq.s32.totalorder %s29, 1
    %p130 = por %p128, %p129
    %p132 = scmp.ne.s32.totalorder %s115, %s131
    %p133 = scmp.eq.s32.totalorder %s29, 0
    %p134 = por %p132, %p133
    %s136 = sadd.s32 %s135, 1
    %p139 = scmp.eq.s32.totalorder %s23, 1
    %p140 = scmp.ne.s32.totalorder %s135, %s137
    %p141 = scmp.eq.s32.totalorder %s23, 0
    %p142 = por %p140, %p141
    %p143 = scmp.ne.s32.totalorder %s135, %s137
    %p144 = scmp.eq.s32.totalorder %s28, 1
    %p145 = por %p143, %p144
    %p146 = scmp.ne.s32.totalorder %s137, %s138
    %p147 = scmp.eq.s32.totalorder %s28, 0
    %p148 = por %p146, %p147
    %p149 = scmp.ne.s32.totalorder %s137, %s138
    %p150 = scmp.eq.s32.totalorder %s29, 1
    %p151 = por %p149, %p150
    %p153 = scmp.ne.s32.totalorder %s138, %s152
    %p154 = scmp.eq.s32.totalorder %s29, 0
    %p155 = por %p153, %p154
    %s157 = sadd.s32 %s156, 1
    %p160 = scmp.eq.s32.totalorder %s23, 1
    %p161 = scmp.ne.s32.totalorder %s156, %s158
    %p162 = scmp.eq.s32.totalorder %s23, 0
    %p163 = por %p161, %p162
    %p164 = scmp.ne.s32.totalorder %s156, %s158
    %p165 = scmp.eq.s32.totalorder %s28, 1
    %p166 = por %p164, %p165
    %p167 = scmp.ne.s32.totalorder %s158, %s159
    %p168 = scmp.eq.s32.totalorder %s28, 0
    %p169 = por %p167, %p168
    %p170 = scmp.ne.s32.totalorder %s158, %s159
    %p171 = scmp.eq.s32.totalorder %s29, 1
    %p172 = por %p170, %p171
    %p174 = scmp.ne.s32.totalorder %s159, %s173
    %p175 = scmp.eq.s32.totalorder %s29, 0
    %p176 = por %p174, %p175
    %s178 = sadd.s32 %s177, 1
    %p181 = scmp.eq.s32.totalorder %s23, 1
    %p182 = scmp.ne.s32.totalorder %s177, %s179
    %p183 = scmp.eq.s32.totalorder %s23, 0
    %p184 = por %p182, %p183
    %p185 = scmp.ne.s32.totalorder %s177, %s179
    %p186 = scmp.eq.s32.totalorder %s28, 1
    %p187 = por %p185, %p186
    %p188 = scmp.ne.s32.totalorder %s179, %s180
    %p189 = scmp.eq.s32.totalorder %s28, 0
    %p190 = por %p188, %p189
    %p191 = scmp.ne.s32.totalorder %s179, %s180
    %p192 = scmp.eq.s32.totalorder %s29, 1
    %p193 = por %p191, %p192
    %p195 = scmp.ne.s32.totalorder %s180, %s194
    %p196 = scmp.eq.s32.totalorder %s29, 0
    %p197 = por %p195, %p196
    %s199 = sadd.s32 %s198, 1
    %p202 = scmp.eq.s32.totalorder %s23, 1
    %p203 = scmp.ne.s32.totalorder %s198, %s200
    %p204 = scmp.eq.s32.totalorder %s23, 0
    %p205 = por %p203, %p204
    %p206 = scmp.ne.s32.totalorder %s198, %s200
    %p207 = scmp.eq.s32.totalorder %s28, 1
    %p208 = por %p206, %p207
    %p209 = scmp.ne.s32.totalorder %s200, %s201
    %p210 = scmp.eq.s32.totalorder %s28, 0
    %p211 = por %p209, %p210
    %p212 = scmp.ne.s32.totalorder %s200, %s201
    %p213 = scmp.eq.s32.totalorder %s29, 1
    %p214 = por %p212, %p213
    %p216 = scmp.ne.s32.totalorder %s201, %s215
    %p217 = scmp.eq.s32.totalorder %s29, 0
    %p218 = por %p216, %p217
    %s220 = sadd.s32 %s219, 1
    %p223 = scmp.eq.s32.totalorder %s23, 1
    %p224 = scmp.ne.s32.totalorder %s219, %s221
    %p225 = scmp.eq.s32.totalorder %s23, 0
    %p226 = por %p224, %p225
    %p227 = scmp.ne.s32.totalorder %s219, %s221
    %p228 = scmp.eq.s32.totalorder %s28, 1
    %p229 = por %p227, %p228
    %p230 = scmp.ne.s32.totalorder %s221, %s222
    %p231 = scmp.eq.s32.totalorder %s28, 0
    %p232 = por %p230, %p231
    %p233 = scmp.ne.s32.totalorder %s221, %s222
    %p234 = scmp.eq.s32.totalorder %s29, 1
    %p235 = por %p233, %p234
    %p237 = scmp.ne.s32.totalorder %s222, %s236
    %p238 = scmp.eq.s32.totalorder %s29, 0
    %p239 = por %p237, %p238
    %s241 = sadd.s32 %s240, 1
    %p244 = scmp.eq.s32.totalorder %s23, 1
    %p245 = scmp.ne.s32.totalorder %s240, %s242
    %p246 = scmp.eq.s32.totalorder %s23, 0
    %p247 = por %p245, %p246
    %p248 = scmp.ne.s32.totalorder %s240, %s242
    %p249 = scmp.eq.s32.totalorder %s28, 1
    %p250 = por %p248, %p249
    %p251 = scmp.ne.s32.totalorder %s242, %s243
    %p252 = scmp.eq.s32.totalorder %s28, 0
    %p253 = por %p251, %p252
    %p254 = scmp.ne.s32.totalorder %s242, %s243
    %p255 = scmp.eq.s32.totalorder %s29, 1
    %p256 = por %p254, %p255
    %p258 = scmp.ne.s32.totalorder %s243, %s257
    %p259 = scmp.eq.s32.totalorder %s29, 0
    %p260 = por %p258, %p259
    %s262 = sadd.s32 %s261, 1
    %p265 = scmp.eq.s32.totalorder %s23, 1
    %p266 = scmp.ne.s32.totalorder %s261, %s263
    %p267 = scmp.eq.s32.totalorder %s23, 0
    %p268 = por %p266, %p267
    %p269 = scmp.ne.s32.totalorder %s261, %s263
    %p270 = scmp.eq.s32.totalorder %s28, 1
    %p271 = por %p269, %p270
    %p272 = scmp.ne.s32.totalorder %s263, %s264
    %p273 = scmp.eq.s32.totalorder %s28, 0
    %p274 = por %p272, %p273
    %p275 = scmp.ne.s32.totalorder %s263, %s264
    %p276 = scmp.eq.s32.totalorder %s29, 1
    %p277 = por %p275, %p276
    %p279 = scmp.ne.s32.totalorder %s264, %s278
    %p280 = scmp.eq.s32.totalorder %s29, 0
    %p281 = por %p279, %p280
    %s283 = sadd.s32 %s282, 1
    %p286 = scmp.eq.s32.totalorder %s23, 1
    %p287 = scmp.ne.s32.totalorder %s282, %s284
    %p288 = scmp.eq.s32.totalorder %s23, 0
    %p289 = por %p287, %p288
    %p290 = scmp.ne.s32.totalorder %s282, %s284
    %p291 = scmp.eq.s32.totalorder %s28, 1
    %p292 = por %p290, %p291
    %p293 = scmp.ne.s32.totalorder %s284, %s285
    %p294 = scmp.eq.s32.totalorder %s28, 0
    %p295 = por %p293, %p294
    %p296 = scmp.ne.s32.totalorder %s284, %s285
    %p297 = scmp.eq.s32.totalorder %s29, 1
    %p298 = por %p296, %p297
    %p300 = scmp.ne.s32.totalorder %s285, %s299
    %p301 = scmp.eq.s32.totalorder %s29, 0
    %p302 = por %p300, %p301
    %s304 = sadd.s32 %s303, 1
    %p307 = scmp.eq.s32.totalorder %s23, 1
    %p308 = scmp.ne.s32.totalorder %s303, %s305
    %p309 = scmp.eq.s32.totalorder %s23, 0
    %p310 = por %p308, %p309
    %p311 = scmp.ne.s32.totalorder %s303, %s305
    %p312 = scmp.eq.s32.totalorder %s28, 1
    %p313 = por %p311, %p312
    %p314 = scmp.ne.s32.totalorder %s305, %s306
    %p315 = scmp.eq.s32.totalorder %s28, 0
    %p316 = por %p314, %p315
    %p317 = scmp.ne.s32.totalorder %s305, %s306
    %p318 = scmp.eq.s32.totalorder %s29, 1
    %p319 = por %p317, %p318
    %p321 = scmp.ne.s32.totalorder %s306, %s320
    %p322 = scmp.eq.s32.totalorder %s29, 0
    %p323 = por %p321, %p322
    %s325 = sadd.s32 %s324, 1
    %p328 = scmp.eq.s32.totalorder %s23, 1
    %p329 = scmp.ne.s32.totalorder %s324, %s326
    %p330 = scmp.eq.s32.totalorder %s23, 0
    %p331 = por %p329, %p330
    %p332 = scmp.ne.s32.totalorder %s324, %s326
    %p333 = scmp.eq.s32.totalorder %s28, 1
    %p334 = por %p332, %p333
    %p335 = scmp.ne.s32.totalorder %s326, %s327
    %p336 = scmp.eq.s32.totalorder %s28, 0
    %p337 = por %p335, %p336
    %p338 = scmp.ne.s32.totalorder %s326, %s327
    %p339 = scmp.eq.s32.totalorder %s29, 1
    %p340 = por %p338, %p339
    %p342 = scmp.ne.s32.totalorder %s327, %s341
    %p343 = scmp.eq.s32.totalorder %s29, 0
    %p344 = por %p342, %p343
    %s346 = sadd.s32 %s345, 1
    %p349 = scmp.eq.s32.totalorder %s23, 1
    %p350 = scmp.ne.s32.totalorder %s345, %s347
    %p351 = scmp.eq.s32.totalorder %s23, 0
    %p352 = por %p350, %p351
    %p353 = scmp.ne.s32.totalorder %s345, %s347
    %p354 = scmp.eq.s32.totalorder %s28, 1
    %p355 = por %p353, %p354
    %p356 = scmp.ne.s32.totalorder %s347, %s348
    %p357 = scmp.eq.s32.totalorder %s28, 0
    %p358 = por %p356, %p357
    %p359 = scmp.ne.s32.totalorder %s347, %s348
    %p360 = scmp.eq.s32.totalorder %s29, 1
    %p361 = por %p359, %p360
    %p363 = scmp.ne.s32.totalorder %s348, %s362
    %p364 = scmp.eq.s32.totalorder %s29, 0
    %p365 = por %p363, %p364
    %s366 = ssub.s32 %s23, %s30
    %p367 = scmp.eq.s32.totalorder %s366, 0
    %s369 = sadd.s32 %s368, 1
    %s370 = scalar_select %p367, %s368, %s369
    %p373 = pneg %p367
    %p374 = scmp.eq.s32.totalorder %s23, 1
    %p375 = por %p373, %p374
    %p376 = scmp.ne.s32.totalorder %s368, %s371
    %p377 = scmp.eq.s32.totalorder %s23, 0
    %p378 = por %p376, %p377
    %p379 = scmp.ne.s32.totalorder %s368, %s371
    %p380 = scmp.eq.s32.totalorder %s28, 1
    %p381 = por %p379, %p380
    %p382 = scmp.ne.s32.totalorder %s371, %s372
    %p383 = scmp.eq.s32.totalorder %s28, 0
    %p384 = por %p382, %p383
    %p385 = scmp.ne.s32.totalorder %s371, %s372
    %p386 = scmp.eq.s32.totalorder %s29, 1
    %p387 = por %p385, %p386
    %p389 = scmp.ne.s32.totalorder %s372, %s388
    %p390 = scmp.eq.s32.totalorder %s29, 0
    %p391 = por %p389, %p390
    %s392 = ssub.s32 %s23, %s30
    %p393 = scmp.eq.s32.totalorder %s392, 0
    %s395 = sadd.s32 %s394, 1
    %s396 = scalar_select %p393, %s394, %s395
    %p399 = pneg %p393
    %p400 = scmp.eq.s32.totalorder %s23, 1
    %p401 = por %p399, %p400
    %p402 = scmp.ne.s32.totalorder %s394, %s397
    %p403 = scmp.eq.s32.totalorder %s23, 0
    %p404 = por %p402, %p403
    %p405 = scmp.ne.s32.totalorder %s394, %s397
    %p406 = scmp.eq.s32.totalorder %s28, 1
    %p407 = por %p405, %p406
    %p408 = scmp.ne.s32.totalorder %s397, %s398
    %p409 = scmp.eq.s32.totalorder %s28, 0
    %p410 = por %p408, %p409
    %p411 = scmp.ne.s32.totalorder %s397, %s398
    %p412 = scmp.eq.s32.totalorder %s29, 1
    %p413 = por %p411, %p412
    %p415 = scmp.ne.s32.totalorder %s398, %s414
    %p416 = scmp.eq.s32.totalorder %s29, 0
    %p417 = por %p415, %p416
    %p418 = scmp.le.s32.totalorder 1, %s23
    %p419 = scmp.lt.s32.totalorder %s23, 3
    %p420 = pnand %p418, %p419
    %p421 = pneg %p420
    // Predicated region
    $region9: #{_lambda_.5} parent=5 // pred_check
      _
    $region10: #{_lambda_.5} parent=5 // pred_check_branch
      %423 = sbr.rel (%p420) target = $region12
    $region11: #{_lambda_.5} parent=5 // pred_region
      %s424 = ssub.s32 %s23, 1
      // Predicated region
      $region13: #{_lambda_.5} parent=11 // pred_check
        %p425 = pneg %p148
      $region14: #{_lambda_.5} parent=11 // pred_check_branch
        %427 = sbr.rel (%p425) target = $region16
      $region15: #{_lambda_.5} parent=11 // pred_region
        _
      $region16: #{_lambda_.5} parent=11 // pred_fallthru
        _
      // Predicated region
      $region17: #{_lambda_.5} parent=11 // pred_check
        %p428 = pneg %p169
      $region18: #{_lambda_.5} parent=11 // pred_check_branch
        %430 = sbr.rel (%p428) target = $region20
      $region19: #{_lambda_.5} parent=11 // pred_region
        _
      $region20: #{_lambda_.5} parent=11 // pred_fallthru
        _
      // Predicated region
      $region21: #{_lambda_.5} parent=11 // pred_check
        %p431 = pneg %p190
      $region22: #{_lambda_.5} parent=11 // pred_check_branch
        %433 = sbr.rel (%p431) target = $region24
      $region23: #{_lambda_.5} parent=11 // pred_region
        _
      $region24: #{_lambda_.5} parent=11 // pred_fallthru
        _
      // Predicated region
      $region25: #{_lambda_.5} parent=11 // pred_check
        %p434 = pneg %p211
      $region26: #{_lambda_.5} parent=11 // pred_check_branch
        %436 = sbr.rel (%p434) target = $region28
      $region27: #{_lambda_.5} parent=11 // pred_region
        _
      $region28: #{_lambda_.5} parent=11 // pred_fallthru
        _
      // Predicated region
      $region29: #{_lambda_.5} parent=11 // pred_check
        %p437 = pneg %p232
      $region30: #{_lambda_.5} parent=11 // pred_check_branch
        %439 = sbr.rel (%p437) target = $region32
      $region31: #{_lambda_.5} parent=11 // pred_region
        _
      $region32: #{_lambda_.5} parent=11 // pred_fallthru
        _
      // Predicated region
      $region33: #{_lambda_.5} parent=11 // pred_check
        %p440 = pneg %p253
      $region34: #{_lambda_.5} parent=11 // pred_check_branch
        %442 = sbr.rel (%p440) target = $region36
      $region35: #{_lambda_.5} parent=11 // pred_region
        _
      $region36: #{_lambda_.5} parent=11 // pred_fallthru
        _
      // Predicated region
      $region37: #{_lambda_.5} parent=11 // pred_check
        %p443 = pneg %p274
      $region38: #{_lambda_.5} parent=11 // pred_check_branch
        %445 = sbr.rel (%p443) target = $region40
      $region39: #{_lambda_.5} parent=11 // pred_region
        _
      $region40: #{_lambda_.5} parent=11 // pred_fallthru
        _
      // Predicated region
      $region41: #{_lambda_.5} parent=11 // pred_check
        %p446 = pneg %p295
      $region42: #{_lambda_.5} parent=11 // pred_check_branch
        %448 = sbr.rel (%p446) target = $region44
      $region43: #{_lambda_.5} parent=11 // pred_region
        _
      $region44: #{_lambda_.5} parent=11 // pred_fallthru
        _
      // Predicated region
      $region45: #{_lambda_.5} parent=11 // pred_check
        %p449 = pneg %p316
      $region46: #{_lambda_.5} parent=11 // pred_check_branch
        %451 = sbr.rel (%p449) target = $region48
      $region47: #{_lambda_.5} parent=11 // pred_region
        _
      $region48: #{_lambda_.5} parent=11 // pred_fallthru
        _
      // Predicated region
      $region49: #{_lambda_.5} parent=11 // pred_check
        %p452 = pneg %p337
      $region50: #{_lambda_.5} parent=11 // pred_check_branch
        %454 = sbr.rel (%p452) target = $region52
      $region51: #{_lambda_.5} parent=11 // pred_region
        _
      $region52: #{_lambda_.5} parent=11 // pred_fallthru
        _
      // Predicated region
      $region53: #{_lambda_.5} parent=11 // pred_check
        %p455 = pneg %p358
      $region54: #{_lambda_.5} parent=11 // pred_check_branch
        %457 = sbr.rel (%p455) target = $region56
      $region55: #{_lambda_.5} parent=11 // pred_region
        _
      $region56: #{_lambda_.5} parent=11 // pred_fallthru
        _
    $region12: #{_lambda_.5} parent=5 // pred_fallthru
      _
    %p458 = scmp.lt.s32.totalorder %s23, 2
    // Predicated region
    $region57: #{_lambda_.5} parent=5 // pred_check
      %p459 = pneg %p458
    $region58: #{_lambda_.5} parent=5 // pred_check_branch
      %461 = sbr.rel (%p459) target = $region60
    $region59: #{_lambda_.5} parent=5 // pred_region
      // Predicated region
      $region61: #{_lambda_.5} parent=59 // pred_check
        %p462 = pneg %p43
      $region62: #{_lambda_.5} parent=59 // pred_check_branch
        %464 = sbr.rel (%p462) target = $region64
      $region63: #{_lambda_.5} parent=59 // pred_region
        %p465 = scmp.lt.s32.totalorder %s23, 1
        %s466 = scalar_select %p465, %s23, 1
        %s467 = smul.addr %s466, 8
        %s468 = smul.addr %s467, 8
        %s469 = scalar_lea.vmem %s0, %s468
      $region64: #{_lambda_.5} parent=59 // pred_fallthru
        _
      // Predicated region
      $region65: #{_lambda_.5} parent=59 // pred_check
        %p470 = pneg %p69
      $region66: #{_lambda_.5} parent=59 // pred_check_branch
        %472 = sbr.rel (%p470) target = $region68
      $region67: #{_lambda_.5} parent=59 // pred_region
        %p473 = scmp.lt.s32.totalorder %s23, 1
        %s474 = scalar_select %p473, %s23, 1
        %s475 = smul.addr %s474, 8
        %s476 = smul.addr %s475, 8
        %s477 = scalar_lea.vmem %s1, %s476
      $region68: #{_lambda_.5} parent=59 // pred_fallthru
        _
      // Predicated region
      $region69: #{_lambda_.5} parent=59 // pred_check
        %p478 = pneg %p95
      $region70: #{_lambda_.5} parent=59 // pred_check_branch
        %480 = sbr.rel (%p478) target = $region72
      $region71: #{_lambda_.5} parent=59 // pred_region
        %p481 = scmp.lt.s32.totalorder %s23, 1
        %s482 = scalar_select %p481, %s23, 1
        %s483 = scalar_lea.vmem %s2, %s482
      $region72: #{_lambda_.5} parent=59 // pred_fallthru
        _
      // Predicated region
      $region73: #{_lambda_.5} parent=59 // pred_check
        %p484 = pneg %p121
      $region74: #{_lambda_.5} parent=59 // pred_check_branch
        %486 = sbr.rel (%p484) target = $region76
      $region75: #{_lambda_.5} parent=59 // pred_region
        %p487 = scmp.lt.s32.totalorder %s23, 1
        %s488 = scalar_select %p487, %s23, 1
        %s489 = scalar_lea.vmem %s3, %s488
      $region76: #{_lambda_.5} parent=59 // pred_fallthru
        _
    $region60: #{_lambda_.5} parent=5 // pred_fallthru
      _
    %p490 = scmp.le.s32.totalorder 1, %s23
    %p491 = scmp.lt.s32.totalorder %s23, 3
    %p492 = pnand %p490, %p491
    %p493 = pneg %p492
    // Predicated region
    $region77: #{_lambda_.5} parent=5 // pred_check
      _
    $region78: #{_lambda_.5} parent=5 // pred_check_branch
      %495 = sbr.rel (%p492) target = $region80
    $region79: #{_lambda_.5} parent=5 // pred_region
      %s496 = ssub.s32 %s23, 1
      %p497 = scmp.lt.s32.totalorder %s28, 1
      %s498 = scalar_select %p497, %s28, 1
      %s499 = smul.addr %s498, 8
      %s500 = smul.addr %s499, 8
      %s501 = scalar_lea.vmem %s0, %s500
      %p502 = pneg %p49
      %p503 = pneg %p46
      %p504 = scmp.lt.s32.totalorder %s28, 1
      %s505 = scalar_select %p504, %s28, 1
      %s506 = smul.addr %s505, 8
      %s507 = smul.addr %s506, 8
      %s508 = scalar_lea.vmem %s1, %s507
      %p509 = pneg %p75
      %p510 = pneg %p72
      %p511 = scmp.lt.s32.totalorder %s28, 1
      %s512 = scalar_select %p511, %s28, 1
      %s513 = scalar_lea.vmem %s2, %s512
      %p514 = pneg %p101
      %p515 = pneg %p98
      %p516 = scmp.lt.s32.totalorder %s28, 1
      %s517 = scalar_select %p516, %s28, 1
      %s518 = scalar_lea.vmem %s3, %s517
      %p519 = pneg %p127
      %p520 = pneg %p124
      %p521 = pneg %p148
      %p522 = pneg %p145
      %p523 = pneg %p169
      %p524 = pneg %p166
      %p525 = pneg %p190
      %p526 = pneg %p187
      %p527 = pneg %p211
      %p528 = pneg %p208
      %p529 = pneg %p232
      %p530 = pneg %p229
      %p531 = pneg %p253
      %p532 = pneg %p250
      %p533 = pneg %p274
      %p534 = pneg %p271
      %p535 = pneg %p295
      %p536 = pneg %p292
      %p537 = pneg %p316
      %p538 = pneg %p313
      %p539 = pneg %p337
      %p540 = pneg %p334
      %p541 = pneg %p358
      %p542 = pneg %p355
      %p543 = pneg %p384
      %p544 = pneg %p381
      %p545 = scmp.lt.s32.totalorder %s28, 1
      %s546 = scalar_select %p545, %s28, 1
      %s547 = smul.addr %s546, 8
      %s548 = smul.addr %s547, 8
      %s549 = scalar_lea.vmem %s15, %s548
      %p550 = pneg %p410
      %p551 = pneg %p407
      %p552 = scmp.lt.s32.totalorder %s28, 1
      %s553 = scalar_select %p552, %s28, 1
      %s554 = smul.addr %s553, 8
      %s555 = smul.addr %s554, 8
      %s556 = scalar_lea.vmem %s16, %s555
      %p557 = scmp.lt.s32.totalorder %s28, 1
      %s558 = scalar_select %p557, %s28, 1
      %s559 = smul.addr %s558, 8
      %s560 = smul.addr %s559, 8
      %s561 = scalar_lea.vmem %s0, %s560
      %p562 = scmp.lt.s32.totalorder %s28, 1
      %s563 = scalar_select %p562, %s28, 1
      %s564 = smul.addr %s563, 8
      %s565 = smul.addr %s564, 8
      %s566 = scalar_lea.vmem %s1, %s565
      %p567 = scmp.lt.s32.totalorder %s28, 1
      %s568 = scalar_select %p567, %s28, 1
      %s569 = scalar_lea.vmem %s2, %s568
      %p570 = scmp.lt.s32.totalorder %s28, 1
      %s571 = scalar_select %p570, %s28, 1
      %s572 = scalar_lea.vmem %s3, %s571
      %p573 = scmp.lt.s32.totalorder %s28, 1
      %s574 = scalar_select %p573, %s28, 1
      %s575 = smul.addr %s574, 8
      %s576 = smul.addr %s575, 8
      %s577 = scalar_lea.vmem %s15, %s576
      %p578 = scmp.lt.s32.totalorder %s28, 1
      %s579 = scalar_select %p578, %s28, 1
      %s580 = smul.addr %s579, 8
      %s581 = smul.addr %s580, 8
      %s582 = scalar_lea.vmem %s16, %s581
      %v584 = vld [vmem:[%s561] sm:$0xff]
      %v585 = vld [vmem:[%s561 + $0x8] sm:$0xff]
      %v586 = vld [vmem:[%s561 + $0x10] sm:$0xff]
      %v587 = vld [vmem:[%s561 + $0x18] sm:$0xff]
      %v588 = vld [vmem:[%s561 + $0x20] sm:$0xff]
      %v589 = vld [vmem:[%s561 + $0x28] sm:$0xff]
      %v590 = vld [vmem:[%s561 + $0x30] sm:$0xff]
      %v591 = vld [vmem:[%s561 + $0x38] sm:$0xff]
      %v592 = vld [vmem:[%s566] sm:$0xff]
      %v593 = vld [vmem:[%s566 + $0x8] sm:$0xff]
      %v594 = vld [vmem:[%s566 + $0x10] sm:$0xff]
      %v595 = vld [vmem:[%s566 + $0x18] sm:$0xff]
      %v596 = vld [vmem:[%s566 + $0x20] sm:$0xff]
      %v597 = vld [vmem:[%s566 + $0x28] sm:$0xff]
      %v598 = vld [vmem:[%s566 + $0x30] sm:$0xff]
      %v599 = vld [vmem:[%s566 + $0x38] sm:$0xff]
      %v600 = vadd.f32 %v584, %v592
      %v601 = vadd.f32 %v585, %v593
      %v602 = vadd.f32 %v586, %v594
      %v603 = vadd.f32 %v587, %v595
      %v604 = vadd.f32 %v588, %v596
      %v605 = vadd.f32 %v589, %v597
      %v606 = vadd.f32 %v590, %v598
      %v607 = vadd.f32 %v591, %v599
      %v608 = vld [vmem:[%s4] sm:$0x1]
      %v610 = vlaneseq
      %v611 = vshrl.u32 %v610, 7
      %v612 = vsub.s32 0, %v611
      %v613 = vrot.slane %v608, %v612
      %v615 = vadd.f32 %v600, %v613
      %v616 = vadd.f32 %v601, %v613
      %v617 = vadd.f32 %v602, %v613
      %v618 = vadd.f32 %v603, %v613
      %v619 = vadd.f32 %v604, %v613
      %v620 = vadd.f32 %v605, %v613
      %v621 = vadd.f32 %v606, %v613
      %v622 = vadd.f32 %v607, %v613
      %vm623 = vcmask 261120
      %v624 = vsel %vm623, %v615, 0.0
      %v625 = vsel %vm623, %v616, 0.0
      %v626 = vadd.f32 %v624, %v625
      %v627 = vsel %vm623, %v617, 0.0
      %v628 = vadd.f32 %v626, %v627
      %v629 = vsel %vm623, %v618, 0.0
      %v630 = vadd.f32 %v628, %v629
      %v631 = vsel %vm623, %v619, 0.0
      %v632 = vadd.f32 %v630, %v631
      %v633 = vsel %vm623, %v620, 0.0
      %v634 = vadd.f32 %v632, %v633
      %v635 = vsel %vm623, %v621, 0.0
      %v636 = vadd.f32 %v634, %v635
      %v637 = vsel %vm623, %v622, 0.0
      %v638 = vadd.f32 %v636, %v637
      %v639 = vrot.slane %v638, 4
      %v640 = vadd.f32 %v638, %v639
      %v641 = vrot.slane %v640, 2
      %v642 = vadd.f32 %v640, %v641
      %v643 = vrot.slane %v642, 1
      %v644 = vadd.f32 %v642, %v643
      %v645 = vrcp.pop 64.0
      %v646 = vmul.f32 %v644, %v645
      %v647 = vsub.f32 %v615, %v646
      %v648 = vsub.f32 %v616, %v646
      %v649 = vsub.f32 %v617, %v646
      %v650 = vsub.f32 %v618, %v646
      %v651 = vsub.f32 %v619, %v646
      %v652 = vsub.f32 %v620, %v646
      %v653 = vsub.f32 %v621, %v646
      %v654 = vsub.f32 %v622, %v646
      %v655 = vmul.f32 %v647, %v647
      %v656 = vmul.f32 %v648, %v648
      %v657 = vmul.f32 %v649, %v649
      %v658 = vmul.f32 %v650, %v650
      %v659 = vmul.f32 %v651, %v651
      %v660 = vmul.f32 %v652, %v652
      %v661 = vmul.f32 %v653, %v653
      %v662 = vmul.f32 %v654, %v654
      %v663 = vsel %vm623, %v655, 0.0
      %v664 = vsel %vm623, %v656, 0.0
      %v665 = vadd.f32 %v663, %v664
      %v666 = vsel %vm623, %v657, 0.0
      %v667 = vadd.f32 %v665, %v666
      %v668 = vsel %vm623, %v658, 0.0
      %v669 = vadd.f32 %v667, %v668
      %v670 = vsel %vm623, %v659, 0.0
      %v671 = vadd.f32 %v669, %v670
      %v672 = vsel %vm623, %v660, 0.0
      %v673 = vadd.f32 %v671, %v672
      %v674 = vsel %vm623, %v661, 0.0
      %v675 = vadd.f32 %v673, %v674
      %v676 = vsel %vm623, %v662, 0.0
      %v677 = vadd.f32 %v675, %v676
      %v678 = vrot.slane %v677, 4
      %v679 = vadd.f32 %v677, %v678
      %v680 = vrot.slane %v679, 2
      %v681 = vadd.f32 %v679, %v680
      %v682 = vrot.slane %v681, 1
      %v683 = vadd.f32 %v681, %v682
      %v684 = vmul.f32 %v683, %v645
      %v685 = vld [vmem:[%s569] sm:$0x1]
      %v686 = vadd.f32 %v684, 1e-05
      %v687 = vrsqrt.pop %v686
      %v688 = vmul.f32 %v647, %v687
      %v689 = vmul.f32 %v648, %v687
      %v690 = vmul.f32 %v649, %v687
      %v691 = vmul.f32 %v650, %v687
      %v692 = vmul.f32 %v651, %v687
      %v693 = vmul.f32 %v652, %v687
      %v694 = vmul.f32 %v653, %v687
      %v695 = vmul.f32 %v654, %v687
      %v697 = vlaneseq
      %v698 = vshrl.u32 %v697, 7
      %v699 = vsub.s32 0, %v698
      %v700 = vrot.slane %v685, %v699
      %v702 = vmul.f32 %v700, %v688
      %v703 = vmul.f32 %v700, %v689
      %v704 = vmul.f32 %v700, %v690
      %v705 = vmul.f32 %v700, %v691
      %v706 = vmul.f32 %v700, %v692
      %v707 = vmul.f32 %v700, %v693
      %v708 = vmul.f32 %v700, %v694
      %v709 = vmul.f32 %v700, %v695
      %v710 = vld [vmem:[%s572] sm:$0x1]
      %v712 = vlaneseq
      %v713 = vshrl.u32 %v712, 7
      %v714 = vsub.s32 0, %v713
      %v715 = vrot.slane %v710, %v714
      %v717 = vadd.f32 %v702, %v715
      %v718 = vadd.f32 %v703, %v715
      %v719 = vadd.f32 %v704, %v715
      %v720 = vadd.f32 %v705, %v715
      %v721 = vadd.f32 %v706, %v715
      %v722 = vadd.f32 %v707, %v715
      %v723 = vadd.f32 %v708, %v715
      %v724 = vadd.f32 %v709, %v715
      %v725 = vpack.c.bf16 %v718, %v717
      %v726 = vpack.c.bf16 %v720, %v719
      %v727 = vpack.c.bf16 %v722, %v721
      %v728 = vpack.c.bf16 %v724, %v723
      %v729 = vld [vmem:[%s5] sm:$0xf]
      %v730 = vld [vmem:[%s5 + $0x4] sm:$0xf]
      %v731 = vld [vmem:[%s5 + $0x8] sm:$0xf]
      %v732 = vld [vmem:[%s5 + $0xc] sm:$0xf]
      %v733 = vld [vmem:[%s6] sm:$0x1]
      %v735 = vlaneseq
      %v736 = vshrl.u32 %v735, 7
      %v737 = vsub.s32 0, %v736
      %v738 = vrot.slane %v733, %v737
      %v744 = vunpack.c.l.b16 %v729
      %v745 = vunpack.c.l.b16 %v730
      %v746 = vunpack.c.l.b16 %v731
      %v747 = vunpack.c.l.b16 %v732
      %v748 = vpack.c.b16 %v745, %v744
      %v749 = vpack.c.b16 %v747, %v746
      %v753 = vsel %vm623, %v725, 0
      %v756 = vsel %vm623, %v726, 0
      %v759 = vsel %vm623, %v727, 0
      %v762 = vsel %vm623, %v728, 0
      %764 = vmatprep.subr.bf16.mxu0 0
      %765 = vmatpush1.bf16.msra.mxu0 0
      %766 = vmatprep.subr.bf16.mxu0 0
      %767 = vmatpush1.bf16.msra.mxu0 0
      %768 = vmatprep.subr.bf16.mxu0 0
      %769 = vmatpush1.bf16.msra.mxu0 0
      %770 = vmatprep.subr.bf16.mxu0 0
      %771 = vmatpush1.bf16.msra.mxu0 0
      %772 = vmatprep.subr.bf16.mxu0 0
      %773 = vmatpush1.bf16.msra.mxu0 0
      %774 = vmatprep.subr.bf16.mxu0 0
      %775 = vmatpush1.bf16.msra.mxu0 0
      %776 = vmatprep.subr.bf16.mxu0 0
      %777 = vmatpush1.bf16.msra.mxu0 %v749
      %778 = vmatprep.subr.bf16.mxu0 0
      %779 = vmatpush1.bf16.msra.mxu0 %v748
      %780 = vmatprep.subr.bf16.mxu0 0
      %781 = vmatpush2.bf16.msra.mxu0 0
      %782 = vmatprep.subr.bf16.mxu0 0
      %783 = vmatpush2.bf16.msra.mxu0 0
      %784 = vmatprep.subr.bf16.mxu0 0
      %785 = vmatpush2.bf16.msra.mxu0 0
      %786 = vmatprep.subr.bf16.mxu0 0
      %787 = vmatpush2.bf16.msra.mxu0 0
      %788 = vmatprep.subr.bf16.mxu0 0
      %789 = vmatpush2.bf16.msra.mxu0 0
      %790 = vmatprep.subr.bf16.mxu0 0
      %791 = vmatpush2.bf16.msra.mxu0 0
      %792 = vmatprep.subr.bf16.mxu0 0
      %793 = vmatpush2.bf16.msra.mxu0 0
      %794 = vmatprep.subr.bf16.mxu0 0
      %795 = vmatpush2.bf16.msra.mxu0 0
      %796 = vmatprep.mubr.bf16.mxu0 0
      %797 = vmatmul.mubr.bf16.gmra.mxu0 %v753
      %v798 = vpop.f32.mrf.mxu0
      %v799 = vadd.f32 %v738, %v798
      %v800 = vpop.f32.mrf.mxu0
      %v801 = vpop.f32.mrf.mxu0
      %v802 = vadd.f32 %v738, %v801
      %v803 = vpop.f32.mrf.mxu0
      %804 = vmatprep.mubr.bf16.mxu0 0
      %805 = vmatmul.mubr.bf16.gmra.mxu0 %v756
      %v806 = vpop.f32.mrf.mxu0
      %v807 = vadd.f32 %v738, %v806
      %v808 = vpop.f32.mrf.mxu0
      %v809 = vpop.f32.mrf.mxu0
      %v810 = vadd.f32 %v738, %v809
      %v811 = vpop.f32.mrf.mxu0
      %812 = vmatprep.mubr.bf16.mxu0 0
      %813 = vmatmul.mubr.bf16.gmra.mxu0 %v759
      %v814 = vpop.f32.mrf.mxu0
      %v815 = vadd.f32 %v738, %v814
      %v816 = vpop.f32.mrf.mxu0
      %v817 = vpop.f32.mrf.mxu0
      %v818 = vadd.f32 %v738, %v817
      %v819 = vpop.f32.mrf.mxu0
      %820 = vmatprep.mubr.bf16.mxu0 0
      %821 = vmatmul.mubr.bf16.gmra.mxu0 %v762
      %v822 = vpop.f32.mrf.mxu0
      %v823 = vadd.f32 %v738, %v822
      %v824 = vpop.f32.mrf.mxu0
      %v825 = vpop.f32.mrf.mxu0
      %v826 = vadd.f32 %v738, %v825
      %v827 = vpop.f32.mrf.mxu0
      %828 = vdwg.mxu0
      %v829 = vmul.f32 %v799, 0.70710677
      %v830 = vmul.f32 %v802, 0.70710677
      %v831 = vmul.f32 %v807, 0.70710677
      %v832 = vmul.f32 %v810, 0.70710677
      %v833 = vmul.f32 %v815, 0.70710677
      %v834 = vmul.f32 %v818, 0.70710677
      %v835 = vmul.f32 %v823, 0.70710677
      %v836 = vmul.f32 %v826, 0.70710677
      %v837 = vand.u32 2147483647, %v829
      %v838 = vand.u32 2147483647, %v830
      %v839 = vand.u32 2147483647, %v831
      %v840 = vand.u32 2147483647, %v832
      %v841 = vand.u32 2147483647, %v833
      %v842 = vand.u32 2147483647, %v834
      %v843 = vand.u32 2147483647, %v835
      %v844 = vand.u32 2147483647, %v836
      %v845 = vmul.f32 %v837, 0.3275911
      %v846 = vmul.f32 %v838, 0.3275911
      %v847 = vmul.f32 %v839, 0.3275911
      %v848 = vmul.f32 %v840, 0.3275911
      %v849 = vmul.f32 %v841, 0.3275911
      %v850 = vmul.f32 %v842, 0.3275911
      %v851 = vmul.f32 %v843, 0.3275911
      %v852 = vmul.f32 %v844, 0.3275911
      %v853 = vadd.f32 %v845, 1.0
      %v854 = vadd.f32 %v846, 1.0
      %v855 = vadd.f32 %v847, 1.0
      %v856 = vadd.f32 %v848, 1.0
      %v857 = vadd.f32 %v849, 1.0
      %v858 = vadd.f32 %v850, 1.0
      %v859 = vadd.f32 %v851, 1.0
      %v860 = vadd.f32 %v852, 1.0
      %v861 = vrcp.pop %v853
      %v862 = vmul.f32 1.0, %v861
      %v863 = vrcp.pop %v854
      %v864 = vmul.f32 1.0, %v863
      %v865 = vrcp.pop %v855
      %v866 = vmul.f32 1.0, %v865
      %v867 = vrcp.pop %v856
      %v868 = vmul.f32 1.0, %v867
      %v869 = vrcp.pop %v857
      %v870 = vmul.f32 1.0, %v869
      %v871 = vrcp.pop %v858
      %v872 = vmul.f32 1.0, %v871
      %v873 = vrcp.pop %v859
      %v874 = vmul.f32 1.0, %v873
      %v875 = vrcp.pop %v860
      %v876 = vmul.f32 1.0, %v875
      %v877 = vmul.f32 %v862, 1.0614054
      %v878 = vmul.f32 %v864, 1.0614054
      %v879 = vmul.f32 %v866, 1.0614054
      %v880 = vmul.f32 %v868, 1.0614054
      %v881 = vmul.f32 %v870, 1.0614054
      %v882 = vmul.f32 %v872, 1.0614054
      %v883 = vmul.f32 %v874, 1.0614054
      %v884 = vmul.f32 %v876, 1.0614054
      %v885 = vsub.f32 %v877, 1.4531521
      %v886 = vsub.f32 %v878, 1.4531521
      %v887 = vsub.f32 %v879, 1.4531521
      %v888 = vsub.f32 %v880, 1.4531521
      %v889 = vsub.f32 %v881, 1.4531521
      %v890 = vsub.f32 %v882, 1.4531521
      %v891 = vsub.f32 %v883, 1.4531521
      %v892 = vsub.f32 %v884, 1.4531521
      %v893 = vmul.f32 %v885, %v862
      %v894 = vmul.f32 %v886, %v864
      %v895 = vmul.f32 %v887, %v866
      %v896 = vmul.f32 %v888, %v868
      %v897 = vmul.f32 %v889, %v870
      %v898 = vmul.f32 %v890, %v872
      %v899 = vmul.f32 %v891, %v874
      %v900 = vmul.f32 %v892, %v876
      %v901 = vadd.f32 %v893, 1.4214138
      %v902 = vadd.f32 %v894, 1.4214138
      %v903 = vadd.f32 %v895, 1.4214138
      %v904 = vadd.f32 %v896, 1.4214138
      %v905 = vadd.f32 %v897, 1.4214138
      %v906 = vadd.f32 %v898, 1.4214138
      %v907 = vadd.f32 %v899, 1.4214138
      %v908 = vadd.f32 %v900, 1.4214138
      %v909 = vmul.f32 %v901, %v862
      %v910 = vmul.f32 %v902, %v864
      %v911 = vmul.f32 %v903, %v866
      %v912 = vmul.f32 %v904, %v868
      %v913 = vmul.f32 %v905, %v870
      %v914 = vmul.f32 %v906, %v872
      %v915 = vmul.f32 %v907, %v874
      %v916 = vmul.f32 %v908, %v876
      %v917 = vsub.f32 %v909, 0.28449672
      %v918 = vsub.f32 %v910, 0.28449672
      %v919 = vsub.f32 %v911, 0.28449672
      %v920 = vsub.f32 %v912, 0.28449672
      %v921 = vsub.f32 %v913, 0.28449672
      %v922 = vsub.f32 %v914, 0.28449672
      %v923 = vsub.f32 %v915, 0.28449672
      %v924 = vsub.f32 %v916, 0.28449672
      %v925 = vmul.f32 %v917, %v862
      %v926 = vmul.f32 %v918, %v864
      %v927 = vmul.f32 %v919, %v866
      %v928 = vmul.f32 %v920, %v868
      %v929 = vmul.f32 %v921, %v870
      %v930 = vmul.f32 %v922, %v872
      %v931 = vmul.f32 %v923, %v874
      %v932 = vmul.f32 %v924, %v876
      %v933 = vadd.f32 %v925, 0.2548296
      %v934 = vadd.f32 %v926, 0.2548296
      %v935 = vadd.f32 %v927, 0.2548296
      %v936 = vadd.f32 %v928, 0.2548296
      %v937 = vadd.f32 %v929, 0.2548296
      %v938 = vadd.f32 %v930, 0.2548296
      %v939 = vadd.f32 %v931, 0.2548296
      %v940 = vadd.f32 %v932, 0.2548296
      %v941 = vmul.f32 %v933, %v862
      %v942 = vmul.f32 %v934, %v864
      %v943 = vmul.f32 %v935, %v866
      %v944 = vmul.f32 %v936, %v868
      %v945 = vmul.f32 %v937, %v870
      %v946 = vmul.f32 %v938, %v872
      %v947 = vmul.f32 %v939, %v874
      %v948 = vmul.f32 %v940, %v876
      %v949 = vsub.f32 0.0, %v837
      %v950 = vsub.f32 0.0, %v838
      %v951 = vsub.f32 0.0, %v839
      %v952 = vsub.f32 0.0, %v840
      %v953 = vsub.f32 0.0, %v841
      %v954 = vsub.f32 0.0, %v842
      %v955 = vsub.f32 0.0, %v843
      %v956 = vsub.f32 0.0, %v844
      %v957 = vmul.f32 %v949, %v837
      %v958 = vmul.f32 %v950, %v838
      %v959 = vmul.f32 %v951, %v839
      %v960 = vmul.f32 %v952, %v840
      %v961 = vmul.f32 %v953, %v841
      %v962 = vmul.f32 %v954, %v842
      %v963 = vmul.f32 %v955, %v843
      %v964 = vmul.f32 %v956, %v844
      %v965 = vmul.f32 %v957, 1.442695
      %v966 = vpow.pop %v965
      %v967 = vmul.f32 %v958, 1.442695
      %v968 = vpow.pop %v967
      %v969 = vmul.f32 %v959, 1.442695
      %v970 = vpow.pop %v969
      %v971 = vmul.f32 %v960, 1.442695
      %v972 = vpow.pop %v971
      %v973 = vmul.f32 %v961, 1.442695
      %v974 = vpow.pop %v973
      %v975 = vmul.f32 %v962, 1.442695
      %v976 = vpow.pop %v975
      %v977 = vmul.f32 %v963, 1.442695
      %v978 = vpow.pop %v977
      %v979 = vmul.f32 %v964, 1.442695
      %v980 = vpow.pop %v979
      %v981 = vmul.f32 %v941, %v966
      %v982 = vmul.f32 %v942, %v968
      %v983 = vmul.f32 %v943, %v970
      %v984 = vmul.f32 %v944, %v972
      %v985 = vmul.f32 %v945, %v974
      %v986 = vmul.f32 %v946, %v976
      %v987 = vmul.f32 %v947, %v978
      %v988 = vmul.f32 %v948, %v980
      %v989 = vsub.f32 1.0, %v981
      %v990 = vsub.f32 1.0, %v982
      %v991 = vsub.f32 1.0, %v983
      %v992 = vsub.f32 1.0, %v984
      %v993 = vsub.f32 1.0, %v985
      %v994 = vsub.f32 1.0, %v986
      %v995 = vsub.f32 1.0, %v987
      %v996 = vsub.f32 1.0, %v988
      %vm997 = vcmp.ge.f32.partialorder %v829, 0.0
      %vm998 = vcmp.ge.f32.partialorder %v830, 0.0
      %vm999 = vcmp.ge.f32.partialorder %v831, 0.0
      %vm1000 = vcmp.ge.f32.partialorder %v832, 0.0
      %vm1001 = vcmp.ge.f32.partialorder %v833, 0.0
      %vm1002 = vcmp.ge.f32.partialorder %v834, 0.0
      %vm1003 = vcmp.ge.f32.partialorder %v835, 0.0
      %vm1004 = vcmp.ge.f32.partialorder %v836, 0.0
      %v1005 = vsub.f32 0.0, %v989
      %v1006 = vsub.f32 0.0, %v990
      %v1007 = vsub.f32 0.0, %v991
      %v1008 = vsub.f32 0.0, %v992
      %v1009 = vsub.f32 0.0, %v993
      %v1010 = vsub.f32 0.0, %v994
      %v1011 = vsub.f32 0.0, %v995
      %v1012 = vsub.f32 0.0, %v996
      %v1013 = vsel %vm997, %v989, %v1005
      %v1014 = vsel %vm998, %v990, %v1006
      %v1015 = vsel %vm999, %v991, %v1007
      %v1016 = vsel %vm1000, %v992, %v1008
      %v1017 = vsel %vm1001, %v993, %v1009
      %v1018 = vsel %vm1002, %v994, %v1010
      %v1019 = vsel %vm1003, %v995, %v1011
      %v1020 = vsel %vm1004, %v996, %v1012
      %v1021 = vmul.f32 %v799, 0.5
      %v1022 = vmul.f32 %v802, 0.5
      %v1023 = vmul.f32 %v807, 0.5
      %v1024 = vmul.f32 %v810, 0.5
      %v1025 = vmul.f32 %v815, 0.5
      %v1026 = vmul.f32 %v818, 0.5
      %v1027 = vmul.f32 %v823, 0.5
      %v1028 = vmul.f32 %v826, 0.5
      %v1029 = vadd.f32 %v1013, 1.0
      %v1030 = vadd.f32 %v1014, 1.0
      %v1031 = vadd.f32 %v1015, 1.0
      %v1032 = vadd.f32 %v1016, 1.0
      %v1033 = vadd.f32 %v1017, 1.0
      %v1034 = vadd.f32 %v1018, 1.0
      %v1035 = vadd.f32 %v1019, 1.0
      %v1036 = vadd.f32 %v1020, 1.0
      %v1037 = vmul.f32 %v1021, %v1029
      %v1038 = vmul.f32 %v1022, %v1030
      %v1039 = vmul.f32 %v1023, %v1031
      %v1040 = vmul.f32 %v1024, %v1032
      %v1041 = vmul.f32 %v1025, %v1033
      %v1042 = vmul.f32 %v1026, %v1034
      %v1043 = vmul.f32 %v1027, %v1035
      %v1044 = vmul.f32 %v1028, %v1036
      %v1045 = vpack.c.bf16 %v1038, %v1037
      %v1046 = vpack.c.bf16 %v1040, %v1039
      %v1047 = vpack.c.bf16 %v1042, %v1041
      %v1048 = vpack.c.bf16 %v1044, %v1043
      %v1049 = vld [vmem:[%s7] sm:$0xf]
      %v1050 = vld [vmem:[%s7 + $0x4] sm:$0xf]
      %v1051 = vld [vmem:[%s7 + $0x8] sm:$0xf]
      %v1052 = vld [vmem:[%s7 + $0xc] sm:$0xf]
      %v1053 = vld [vmem:[%s7 + $0x10] sm:$0xf]
      %v1054 = vld [vmem:[%s7 + $0x14] sm:$0xf]
      %v1055 = vld [vmem:[%s7 + $0x18] sm:$0xf]
      %v1056 = vld [vmem:[%s7 + $0x1c] sm:$0xf]
      %v1057 = vld [vmem:[%s7 + $0x20] sm:$0xf]
      %v1058 = vld [vmem:[%s7 + $0x24] sm:$0xf]
      %v1059 = vld [vmem:[%s7 + $0x28] sm:$0xf]
      %v1060 = vld [vmem:[%s7 + $0x2c] sm:$0xf]
      %v1061 = vld [vmem:[%s7 + $0x30] sm:$0xf]
      %v1062 = vld [vmem:[%s7 + $0x34] sm:$0xf]
      %v1063 = vld [vmem:[%s7 + $0x38] sm:$0xf]
      %v1064 = vld [vmem:[%s7 + $0x3c] sm:$0xf]
      %v1065 = vld [vmem:[%s8] sm:$0x1]
      %v1067 = vlaneseq
      %v1068 = vshrl.u32 %v1067, 7
      %v1069 = vsub.s32 0, %v1068
      %v1070 = vrot.slane %v1065, %v1069
      %v1088 = vunpack.c.l.b16 %v1049
      %v1089 = vunpack.c.l.b16 %v1050
      %v1090 = vunpack.c.l.b16 %v1051
      %v1091 = vunpack.c.l.b16 %v1052
      %v1092 = vunpack.c.l.b16 %v1053
      %v1093 = vunpack.c.l.b16 %v1054
      %v1094 = vunpack.c.l.b16 %v1055
      %v1095 = vunpack.c.l.b16 %v1056
      %v1096 = vunpack.c.l.b16 %v1057
      %v1097 = vunpack.c.l.b16 %v1058
      %v1098 = vunpack.c.l.b16 %v1059
      %v1099 = vunpack.c.l.b16 %v1060
      %v1100 = vunpack.c.l.b16 %v1061
      %v1101 = vunpack.c.l.b16 %v1062
      %v1102 = vunpack.c.l.b16 %v1063
      %v1103 = vunpack.c.l.b16 %v1064
      %v1104 = vpack.c.b16 %v1089, %v1088
      %v1105 = vpack.c.b16 %v1091, %v1090
      %v1106 = vpack.c.b16 %v1093, %v1092
      %v1107 = vpack.c.b16 %v1095, %v1094
      %v1108 = vpack.c.b16 %v1097, %v1096
      %v1109 = vpack.c.b16 %v1099, %v1098
      %v1110 = vpack.c.b16 %v1101, %v1100
      %v1111 = vpack.c.b16 %v1103, %v1102
      %1120 = vmatprep.subr.bf16.mxu0 0
      %1121 = vmatpush1.bf16.msra.mxu0 %v1111
      %1122 = vmatprep.subr.bf16.mxu0 0
      %1123 = vmatpush1.bf16.msra.mxu0 %v1110
      %1124 = vmatprep.subr.bf16.mxu0 0
      %1125 = vmatpush1.bf16.msra.mxu0 %v1109
      %1126 = vmatprep.subr.bf16.mxu0 0
      %1127 = vmatpush1.bf16.msra.mxu0 %v1108
      %1128 = vmatprep.subr.bf16.mxu0 0
      %1129 = vmatpush1.bf16.msra.mxu0 %v1107
      %1130 = vmatprep.subr.bf16.mxu0 0
      %1131 = vmatpush1.bf16.msra.mxu0 %v1106
      %1132 = vmatprep.subr.bf16.mxu0 0
      %1133 = vmatpush1.bf16.msra.mxu0 %v1105
      %1134 = vmatprep.subr.bf16.mxu0 0
      %1135 = vmatpush1.bf16.msra.mxu0 %v1104
      %1136 = vmatprep.subr.bf16.mxu0 0
      %1137 = vmatpush2.bf16.msra.mxu0 0
      %1138 = vmatprep.subr.bf16.mxu0 0
      %1139 = vmatpush2.bf16.msra.mxu0 0
      %1140 = vmatprep.subr.bf16.mxu0 0
      %1141 = vmatpush2.bf16.msra.mxu0 0
      %1142 = vmatprep.subr.bf16.mxu0 0
      %1143 = vmatpush2.bf16.msra.mxu0 0
      %1144 = vmatprep.subr.bf16.mxu0 0
      %1145 = vmatpush2.bf16.msra.mxu0 0
      %1146 = vmatprep.subr.bf16.mxu0 0
      %1147 = vmatpush2.bf16.msra.mxu0 0
      %1148 = vmatprep.subr.bf16.mxu0 0
      %1149 = vmatpush2.bf16.msra.mxu0 0
      %1150 = vmatprep.subr.bf16.mxu0 0
      %1151 = vmatpush2.bf16.msra.mxu0 0
      %1152 = vmatprep.mubr.bf16.mxu0 0
      %1153 = vmatmul.mubr.bf16.gmra.mxu0 %v1045
      %v1154 = vpop.f32.mrf.mxu0
      %v1155 = vadd.f32 %v1070, %v1154
      %v1156 = vpop.f32.mrf.mxu0
      %v1157 = vpop.f32.mrf.mxu0
      %v1158 = vadd.f32 %v1070, %v1157
      %v1159 = vpop.f32.mrf.mxu0
      %1160 = vmatprep.mubr.bf16.mxu0 0
      %1161 = vmatmul.mubr.bf16.gmra.mxu0 %v1046
      %v1162 = vpop.f32.mrf.mxu0
      %v1163 = vadd.f32 %v1070, %v1162
      %v1164 = vpop.f32.mrf.mxu0
      %v1165 = vpop.f32.mrf.mxu0
      %v1166 = vadd.f32 %v1070, %v1165
      %v1167 = vpop.f32.mrf.mxu0
      %1168 = vmatprep.mubr.bf16.mxu0 0
      %1169 = vmatmul.mubr.bf16.gmra.mxu0 %v1047
      %v1170 = vpop.f32.mrf.mxu0
      %v1171 = vadd.f32 %v1070, %v1170
      %v1172 = vpop.f32.mrf.mxu0
      %v1173 = vpop.f32.mrf.mxu0
      %v1174 = vadd.f32 %v1070, %v1173
      %v1175 = vpop.f32.mrf.mxu0
      %1176 = vmatprep.mubr.bf16.mxu0 0
      %1177 = vmatmul.mubr.bf16.gmra.mxu0 %v1048
      %v1178 = vpop.f32.mrf.mxu0
      %v1179 = vadd.f32 %v1070, %v1178
      %v1180 = vpop.f32.mrf.mxu0
      %v1181 = vpop.f32.mrf.mxu0
      %v1182 = vadd.f32 %v1070, %v1181
      %v1183 = vpop.f32.mrf.mxu0
      %1184 = vdwg.mxu0
      %v1185 = vadd.f32 %v615, %v1155
      %v1186 = vadd.f32 %v616, %v1158
      %v1187 = vadd.f32 %v617, %v1163
      %v1188 = vadd.f32 %v618, %v1166
      %v1189 = vadd.f32 %v619, %v1171
      %v1190 = vadd.f32 %v620, %v1174
      %v1191 = vadd.f32 %v621, %v1179
      %v1192 = vadd.f32 %v622, %v1182
      %v1193 = vpack.c.bf16 %v1186, %v1185
      %v1194 = vpack.c.bf16 %v1188, %v1187
      %v1195 = vpack.c.bf16 %v1190, %v1189
      %v1196 = vpack.c.bf16 %v1192, %v1191
      %v1197 = vld [vmem:[%s13] sm:$0xf]
      %v1198 = vld [vmem:[%s13 + $0x4] sm:$0xf]
      %v1199 = vld [vmem:[%s13 + $0x8] sm:$0xf]
      %v1200 = vld [vmem:[%s13 + $0xc] sm:$0xf]
      %v1201 = vld [vmem:[%s14] sm:$0x1]
      %v1203 = vlaneseq
      %v1204 = vshrl.u32 %v1203, 7
      %v1205 = vsub.s32 0, %v1204
      %v1206 = vrot.slane %v1201, %v1205
      %v1212 = vunpack.c.l.b16 %v1197
      %v1213 = vunpack.c.l.b16 %v1198
      %v1214 = vunpack.c.l.b16 %v1199
      %v1215 = vunpack.c.l.b16 %v1200
      %v1216 = vpack.c.b16 %v1213, %v1212
      %v1217 = vpack.c.b16 %v1215, %v1214
      %v1221 = vsel %vm623, %v1193, 0
      %v1224 = vsel %vm623, %v1194, 0
      %v1227 = vsel %vm623, %v1195, 0
      %v1230 = vsel %vm623, %v1196, 0
      %1232 = vmatprep.subr.bf16.mxu0 0
      %1233 = vmatpush1.bf16.msra.mxu0 0
      %1234 = vmatprep.subr.bf16.mxu0 0
      %1235 = vmatpush1.bf16.msra.mxu0 0
      %1236 = vmatprep.subr.bf16.mxu0 0
      %1237 = vmatpush1.bf16.msra.mxu0 0
      %1238 = vmatprep.subr.bf16.mxu0 0
      %1239 = vmatpush1.bf16.msra.mxu0 0
      %1240 = vmatprep.subr.bf16.mxu0 0
      %1241 = vmatpush1.bf16.msra.mxu0 0
      %1242 = vmatprep.subr.bf16.mxu0 0
      %1243 = vmatpush1.bf16.msra.mxu0 0
      %1244 = vmatprep.subr.bf16.mxu0 0
      %1245 = vmatpush1.bf16.msra.mxu0 %v1217
      %1246 = vmatprep.subr.bf16.mxu0 0
      %1247 = vmatpush1.bf16.msra.mxu0 %v1216
      %1248 = vmatprep.subr.bf16.mxu0 0
      %1249 = vmatpush2.bf16.msra.mxu0 0
      %1250 = vmatprep.subr.bf16.mxu0 0
      %1251 = vmatpush2.bf16.msra.mxu0 0
      %1252 = vmatprep.subr.bf16.mxu0 0
      %1253 = vmatpush2.bf16.msra.mxu0 0
      %1254 = vmatprep.subr.bf16.mxu0 0
      %1255 = vmatpush2.bf16.msra.mxu0 0
      %1256 = vmatprep.subr.bf16.mxu0 0
      %1257 = vmatpush2.bf16.msra.mxu0 0
      %1258 = vmatprep.subr.bf16.mxu0 0
      %1259 = vmatpush2.bf16.msra.mxu0 0
      %1260 = vmatprep.subr.bf16.mxu0 0
      %1261 = vmatpush2.bf16.msra.mxu0 0
      %1262 = vmatprep.subr.bf16.mxu0 0
      %1263 = vmatpush2.bf16.msra.mxu0 0
      %1264 = vmatprep.mubr.bf16.mxu0 0
      %1265 = vmatmul.mubr.bf16.gmra.mxu0 %v1221
      %v1266 = vpop.f32.mrf.mxu0
      %v1267 = vadd.f32 %v1206, %v1266
      %v1268 = vpop.f32.mrf.mxu0
      %v1269 = vpop.f32.mrf.mxu0
      %v1270 = vadd.f32 %v1206, %v1269
      %v1271 = vpop.f32.mrf.mxu0
      %1272 = vmatprep.mubr.bf16.mxu0 0
      %1273 = vmatmul.mubr.bf16.gmra.mxu0 %v1224
      %v1274 = vpop.f32.mrf.mxu0
      %v1275 = vadd.f32 %v1206, %v1274
      %v1276 = vpop.f32.mrf.mxu0
      %v1277 = vpop.f32.mrf.mxu0
      %v1278 = vadd.f32 %v1206, %v1277
      %v1279 = vpop.f32.mrf.mxu0
      %1280 = vmatprep.mubr.bf16.mxu0 0
      %1281 = vmatmul.mubr.bf16.gmra.mxu0 %v1227
      %v1282 = vpop.f32.mrf.mxu0
      %v1283 = vadd.f32 %v1206, %v1282
      %v1284 = vpop.f32.mrf.mxu0
      %v1285 = vpop.f32.mrf.mxu0
      %v1286 = vadd.f32 %v1206, %v1285
      %v1287 = vpop.f32.mrf.mxu0
      %1288 = vmatprep.mubr.bf16.mxu0 0
      %1289 = vmatmul.mubr.bf16.gmra.mxu0 %v1230
      %v1290 = vpop.f32.mrf.mxu0
      %v1291 = vadd.f32 %v1206, %v1290
      %v1292 = vpop.f32.mrf.mxu0
      %v1293 = vpop.f32.mrf.mxu0
      %v1294 = vadd.f32 %v1206, %v1293
      %v1295 = vpop.f32.mrf.mxu0
      %1296 = vdwg.mxu0
      %1297 = vst [vmem:[%s582] sm:$0xff] %v1267
      %1298 = vst [vmem:[%s582 + $0x8] sm:$0xff] %v1270
      %1299 = vst [vmem:[%s582 + $0x10] sm:$0xff] %v1275
      %1300 = vst [vmem:[%s582 + $0x18] sm:$0xff] %v1278
      %1301 = vst [vmem:[%s582 + $0x20] sm:$0xff] %v1283
      %1302 = vst [vmem:[%s582 + $0x28] sm:$0xff] %v1286
      %1303 = vst [vmem:[%s582 + $0x30] sm:$0xff] %v1291
      %1304 = vst [vmem:[%s582 + $0x38] sm:$0xff] %v1294
      %v1305 = vsel %vm623, %v1185, 0.0
      %1306 = vadd.xlane.f32.xlu0 %v1305
      %v1307 = vpop.xlane.xlu0 %1306
      %v1308 = vsel %vm623, %v1186, 0.0
      %1309 = vadd.xlane.f32.xlu0 %v1308
      %v1310 = vpop.xlane.xlu0 %1309
      %v1311 = vsel %vm623, %v1187, 0.0
      %1312 = vadd.xlane.f32.xlu0 %v1311
      %v1313 = vpop.xlane.xlu0 %1312
      %v1314 = vsel %vm623, %v1188, 0.0
      %1315 = vadd.xlane.f32.xlu0 %v1314
      %v1316 = vpop.xlane.xlu0 %1315
      %v1317 = vsel %vm623, %v1189, 0.0
      %1318 = vadd.xlane.f32.xlu0 %v1317
      %v1319 = vpop.xlane.xlu0 %1318
      %v1320 = vsel %vm623, %v1190, 0.0
      %1321 = vadd.xlane.f32.xlu0 %v1320
      %v1322 = vpop.xlane.xlu0 %1321
      %v1323 = vsel %vm623, %v1191, 0.0
      %1324 = vadd.xlane.f32.xlu0 %v1323
      %v1325 = vpop.xlane.xlu0 %1324
      %v1326 = vsel %vm623, %v1192, 0.0
      %1327 = vadd.xlane.f32.xlu0 %v1326
      %v1328 = vpop.xlane.xlu0 %1327
      %v1329 = vrcp.pop 32.0
      %v1330 = vmul.f32 %v1307, %v1329
      %v1331 = vmul.f32 %v1310, %v1329
      %v1332 = vmul.f32 %v1313, %v1329
      %v1333 = vmul.f32 %v1316, %v1329
      %v1334 = vmul.f32 %v1319, %v1329
      %v1335 = vmul.f32 %v1322, %v1329
      %v1336 = vmul.f32 %v1325, %v1329
      %v1337 = vmul.f32 %v1328, %v1329
      %v1338 = vsub.f32 %v1185, %v1330
      %v1339 = vsub.f32 %v1186, %v1331
      %v1340 = vsub.f32 %v1187, %v1332
      %v1341 = vsub.f32 %v1188, %v1333
      %v1342 = vsub.f32 %v1189, %v1334
      %v1343 = vsub.f32 %v1190, %v1335
      %v1344 = vsub.f32 %v1191, %v1336
      %v1345 = vsub.f32 %v1192, %v1337
      %v1346 = vmul.f32 %v1338, %v1338
      %v1347 = vmul.f32 %v1339, %v1339
      %v1348 = vmul.f32 %v1340, %v1340
      %v1349 = vmul.f32 %v1341, %v1341
      %v1350 = vmul.f32 %v1342, %v1342
      %v1351 = vmul.f32 %v1343, %v1343
      %v1352 = vmul.f32 %v1344, %v1344
      %v1353 = vmul.f32 %v1345, %v1345
      %v1354 = vsel %vm623, %v1346, 0.0
      %1355 = vadd.xlane.f32.xlu0 %v1354
      %v1356 = vpop.xlane.xlu0 %1355
      %v1357 = vsel %vm623, %v1347, 0.0
      %1358 = vadd.xlane.f32.xlu0 %v1357
      %v1359 = vpop.xlane.xlu0 %1358
      %v1360 = vsel %vm623, %v1348, 0.0
      %1361 = vadd.xlane.f32.xlu0 %v1360
      %v1362 = vpop.xlane.xlu0 %1361
      %v1363 = vsel %vm623, %v1349, 0.0
      %1364 = vadd.xlane.f32.xlu0 %v1363
      %v1365 = vpop.xlane.xlu0 %1364
      %v1366 = vsel %vm623, %v1350, 0.0
      %1367 = vadd.xlane.f32.xlu0 %v1366
      %v1368 = vpop.xlane.xlu0 %1367
      %v1369 = vsel %vm623, %v1351, 0.0
      %1370 = vadd.xlane.f32.xlu0 %v1369
      %v1371 = vpop.xlane.xlu0 %1370
      %v1372 = vsel %vm623, %v1352, 0.0
      %1373 = vadd.xlane.f32.xlu0 %v1372
      %v1374 = vpop.xlane.xlu0 %1373
      %v1375 = vsel %vm623, %v1353, 0.0
      %1376 = vadd.xlane.f32.xlu0 %v1375
      %v1377 = vpop.xlane.xlu0 %1376
      %v1378 = vmul.f32 %v1356, %v1329
      %v1379 = vmul.f32 %v1359, %v1329
      %v1380 = vmul.f32 %v1362, %v1329
      %v1381 = vmul.f32 %v1365, %v1329
      %v1382 = vmul.f32 %v1368, %v1329
      %v1383 = vmul.f32 %v1371, %v1329
      %v1384 = vmul.f32 %v1374, %v1329
      %v1385 = vmul.f32 %v1377, %v1329
      %v1386 = vadd.f32 %v1378, 1e-05
      %v1387 = vadd.f32 %v1379, 1e-05
      %v1388 = vadd.f32 %v1380, 1e-05
      %v1389 = vadd.f32 %v1381, 1e-05
      %v1390 = vadd.f32 %v1382, 1e-05
      %v1391 = vadd.f32 %v1383, 1e-05
      %v1392 = vadd.f32 %v1384, 1e-05
      %v1393 = vadd.f32 %v1385, 1e-05
      %v1394 = vrsqrt.pop %v1386
      %v1395 = vrsqrt.pop %v1387
      %v1396 = vrsqrt.pop %v1388
      %v1397 = vrsqrt.pop %v1389
      %v1398 = vrsqrt.pop %v1390
      %v1399 = vrsqrt.pop %v1391
      %v1400 = vrsqrt.pop %v1392
      %v1401 = vrsqrt.pop %v1393
      %v1402 = vmul.f32 %v1338, %v1394
      %v1403 = vmul.f32 %v1339, %v1395
      %v1404 = vmul.f32 %v1340, %v1396
      %v1405 = vmul.f32 %v1341, %v1397
      %v1406 = vmul.f32 %v1342, %v1398
      %v1407 = vmul.f32 %v1343, %v1399
      %v1408 = vmul.f32 %v1344, %v1400
      %v1409 = vmul.f32 %v1345, %v1401
      %v1410 = vld [vmem:[%s9] sm:$0x1]
      %v1412 = vlaneseq
      %v1413 = vshrl.u32 %v1412, 7
      %v1414 = vsub.s32 0, %v1413
      %v1415 = vrot.slane %v1410, %v1414
      %v1417 = vmul.f32 %v1402, %v1415
      %v1418 = vmul.f32 %v1403, %v1415
      %v1419 = vmul.f32 %v1404, %v1415
      %v1420 = vmul.f32 %v1405, %v1415
      %v1421 = vmul.f32 %v1406, %v1415
      %v1422 = vmul.f32 %v1407, %v1415
      %v1423 = vmul.f32 %v1408, %v1415
      %v1424 = vmul.f32 %v1409, %v1415
      %v1425 = vld [vmem:[%s10] sm:$0x1]
      %v1427 = vlaneseq
      %v1428 = vshrl.u32 %v1427, 7
      %v1429 = vsub.s32 0, %v1428
      %v1430 = vrot.slane %v1425, %v1429
      %v1432 = vadd.f32 %v1417, %v1430
      %v1433 = vadd.f32 %v1418, %v1430
      %v1434 = vadd.f32 %v1419, %v1430
      %v1435 = vadd.f32 %v1420, %v1430
      %v1436 = vadd.f32 %v1421, %v1430
      %v1437 = vadd.f32 %v1422, %v1430
      %v1438 = vadd.f32 %v1423, %v1430
      %v1439 = vadd.f32 %v1424, %v1430
      %v1440 = vpack.c.bf16 %v1433, %v1432
      %v1441 = vpack.c.bf16 %v1435, %v1434
      %v1442 = vpack.c.bf16 %v1437, %v1436
      %v1443 = vpack.c.bf16 %v1439, %v1438
      %v1444 = vld [vmem:[%s11] sm:$0xf]
      %v1445 = vld [vmem:[%s11 + $0x4] sm:$0xf]
      %v1446 = vld [vmem:[%s11 + $0x8] sm:$0xf]
      %v1447 = vld [vmem:[%s11 + $0xc] sm:$0xf]
      %v1448 = vld [vmem:[%s12] sm:$0x1]
      %v1450 = vlaneseq
      %v1451 = vshrl.u32 %v1450, 7
      %v1452 = vsub.s32 0, %v1451
      %v1453 = vrot.slane %v1448, %v1452
      %v1459 = vunpack.c.l.b16 %v1444
      %v1460 = vunpack.c.l.b16 %v1445
      %v1461 = vunpack.c.l.b16 %v1446
      %v1462 = vunpack.c.l.b16 %v1447
      %v1463 = vpack.c.b16 %v1460, %v1459
      %v1464 = vpack.c.b16 %v1462, %v1461
      %v1468 = vsel %vm623, %v1440, 0
      %v1471 = vsel %vm623, %v1441, 0
      %v1474 = vsel %vm623, %v1442, 0
      %v1477 = vsel %vm623, %v1443, 0
      %1479 = vmatprep.subr.bf16.mxu0 0
      %1480 = vmatpush1.bf16.msra.mxu0 0
      %1481 = vmatprep.subr.bf16.mxu0 0
      %1482 = vmatpush1.bf16.msra.mxu0 0
      %1483 = vmatprep.subr.bf16.mxu0 0
      %1484 = vmatpush1.bf16.msra.mxu0 0
      %1485 = vmatprep.subr.bf16.mxu0 0
      %1486 = vmatpush1.bf16.msra.mxu0 0
      %1487 = vmatprep.subr.bf16.mxu0 0
      %1488 = vmatpush1.bf16.msra.mxu0 0
      %1489 = vmatprep.subr.bf16.mxu0 0
      %1490 = vmatpush1.bf16.msra.mxu0 0
      %1491 = vmatprep.subr.bf16.mxu0 0
      %1492 = vmatpush1.bf16.msra.mxu0 %v1464
      %1493 = vmatprep.subr.bf16.mxu0 0
      %1494 = vmatpush1.bf16.msra.mxu0 %v1463
      %1495 = vmatprep.subr.bf16.mxu0 0
      %1496 = vmatpush2.bf16.msra.mxu0 0
      %1497 = vmatprep.subr.bf16.mxu0 0
      %1498 = vmatpush2.bf16.msra.mxu0 0
      %1499 = vmatprep.subr.bf16.mxu0 0
      %1500 = vmatpush2.bf16.msra.mxu0 0
      %1501 = vmatprep.subr.bf16.mxu0 0
      %1502 = vmatpush2.bf16.msra.mxu0 0
      %1503 = vmatprep.subr.bf16.mxu0 0
      %1504 = vmatpush2.bf16.msra.mxu0 0
      %1505 = vmatprep.subr.bf16.mxu0 0
      %1506 = vmatpush2.bf16.msra.mxu0 0
      %1507 = vmatprep.subr.bf16.mxu0 0
      %1508 = vmatpush2.bf16.msra.mxu0 0
      %1509 = vmatprep.subr.bf16.mxu0 0
      %1510 = vmatpush2.bf16.msra.mxu0 0
      %1511 = vmatprep.mubr.bf16.mxu0 0
      %1512 = vmatmul.mubr.bf16.gmra.mxu0 %v1468
      %v1513 = vpop.f32.mrf.mxu0
      %v1514 = vadd.f32 %v1453, %v1513
      %v1515 = vpop.f32.mrf.mxu0
      %v1516 = vpop.f32.mrf.mxu0
      %v1517 = vadd.f32 %v1453, %v1516
      %v1518 = vpop.f32.mrf.mxu0
      %1519 = vmatprep.mubr.bf16.mxu0 0
      %1520 = vmatmul.mubr.bf16.gmra.mxu0 %v1471
      %v1521 = vpop.f32.mrf.mxu0
      %v1522 = vadd.f32 %v1453, %v1521
      %v1523 = vpop.f32.mrf.mxu0
      %v1524 = vpop.f32.mrf.mxu0
      %v1525 = vadd.f32 %v1453, %v1524
      %v1526 = vpop.f32.mrf.mxu0
      %1527 = vmatprep.mubr.bf16.mxu0 0
      %1528 = vmatmul.mubr.bf16.gmra.mxu0 %v1474
      %v1529 = vpop.f32.mrf.mxu0
      %v1530 = vadd.f32 %v1453, %v1529
      %v1531 = vpop.f32.mrf.mxu0
      %v1532 = vpop.f32.mrf.mxu0
      %v1533 = vadd.f32 %v1453, %v1532
      %v1534 = vpop.f32.mrf.mxu0
      %1535 = vmatprep.mubr.bf16.mxu0 0
      %1536 = vmatmul.mubr.bf16.gmra.mxu0 %v1477
      %v1537 = vpop.f32.mrf.mxu0
      %v1538 = vadd.f32 %v1453, %v1537
      %v1539 = vpop.f32.mrf.mxu0
      %v1540 = vpop.f32.mrf.mxu0
      %v1541 = vadd.f32 %v1453, %v1540
      %v1542 = vpop.f32.mrf.mxu0
      %1543 = vdwg.mxu0
      %1544 = vst [vmem:[%s577] sm:$0xff] %v1514
      %1545 = vst [vmem:[%s577 + $0x8] sm:$0xff] %v1517
      %1546 = vst [vmem:[%s577 + $0x10] sm:$0xff] %v1522
      %1547 = vst [vmem:[%s577 + $0x18] sm:$0xff] %v1525
      %1548 = vst [vmem:[%s577 + $0x20] sm:$0xff] %v1530
      %1549 = vst [vmem:[%s577 + $0x28] sm:$0xff] %v1533
      %1550 = vst [vmem:[%s577 + $0x30] sm:$0xff] %v1538
      %1551 = vst [vmem:[%s577 + $0x38] sm:$0xff] %v1541
      %p1552 = scmp.lt.s32.totalorder %s28, 1
      %s1553 = scalar_select %p1552, %s28, 1
      %s1554 = smul.addr %s1553, 8
      %s1555 = smul.addr %s1554, 8
      %s1556 = scalar_lea.vmem %s15, %s1555
      %p1557 = scmp.lt.s32.totalorder %s28, 1
      %s1558 = scalar_select %p1557, %s28, 1
      %s1559 = smul.addr %s1558, 8
      %s1560 = smul.addr %s1559, 8
      %s1561 = scalar_lea.vmem %s16, %s1560
      // Predicated region
      $region81: #{_lambda_.5} parent=79 // pred_check
        %p1562 = pneg %p381
      $region82: #{_lambda_.5} parent=79 // pred_check_branch
        %1564 = sbr.rel (%p1562) target = $region84
      $region83: #{_lambda_.5} parent=79 // pred_region
        _
      $region84: #{_lambda_.5} parent=79 // pred_fallthru
        _
      // Predicated region
      $region85: #{_lambda_.5} parent=79 // pred_check
        %p1565 = pneg %p407
      $region86: #{_lambda_.5} parent=79 // pred_check_branch
        %1567 = sbr.rel (%p1565) target = $region88
      $region87: #{_lambda_.5} parent=79 // pred_region
        _
      $region88: #{_lambda_.5} parent=79 // pred_fallthru
        _
    $region80: #{_lambda_.5} parent=5 // pred_fallthru
      _
    %p1568 = scmp.le.s32.totalorder 2, %s23
    // Predicated region
    $region89: #{_lambda_.5} parent=5 // pred_check
      %p1569 = pneg %p1568
    $region90: #{_lambda_.5} parent=5 // pred_check_branch
      %1571 = sbr.rel (%p1569) target = $region92
    $region91: #{_lambda_.5} parent=5 // pred_region
      %s1572 = ssub.s32 %s23, 2
      // Predicated region
      $region93: #{_lambda_.5} parent=91 // pred_check
        %p1573 = pneg %p387
      $region94: #{_lambda_.5} parent=91 // pred_check_branch
        %1575 = sbr.rel (%p1573) target = $region96
      $region95: #{_lambda_.5} parent=91 // pred_region
        %p1576 = scmp.lt.s32.totalorder %s29, 1
        %s1577 = scalar_select %p1576, %s29, 1
        %s1578 = smul.addr %s1577, 8
        %s1579 = smul.addr %s1578, 8
        %s1580 = scalar_lea.vmem %s15, %s1579
      $region96: #{_lambda_.5} parent=91 // pred_fallthru
        _
      // Predicated region
      $region97: #{_lambda_.5} parent=91 // pred_check
        %p1581 = pneg %p413
      $region98: #{_lambda_.5} parent=91 // pred_check_branch
        %1583 = sbr.rel (%p1581) target = $region100
      $region99: #{_lambda_.5} parent=91 // pred_region
        %p1584 = scmp.lt.s32.totalorder %s29, 1
        %s1585 = scalar_select %p1584, %s29, 1
        %s1586 = smul.addr %s1585, 8
        %s1587 = smul.addr %s1586, 8
        %s1588 = scalar_lea.vmem %s16, %s1587
      $region100: #{_lambda_.5} parent=91 // pred_fallthru
        _
    $region92: #{_lambda_.5} parent=5 // pred_fallthru
      _
  $region6: #{_lambda_.5} parent=0 // loop_footer
    %s27 = sadd.s32 1, %s23
  $region7: #{_lambda_.5} parent=0 // loop_footer_branch
    %22 = sbr.rel target = $region3
  $region8: #{_lambda_.5} parent=0 // loop_exit
    _

// kernel: _lambda_.4
$region0: #{_lambda_.4}
  #allocation0 [shape = 'u32[]', space=smem, size = 0x4, offset = 0x4, fixed_abs, tag = 'smem constant byte address 0x4 - core index']
  #allocation1 [shape = 'u32[144,128]{1,0:T(1,128)}', space=vmem, size = 0x12000, scoped, tag = 'internal scratch']
  %s0 = inlined_call_operand.vmem [shape: bf16[2,8,8,32], index: 0, kind: input, shape index: {}]
  %s1 = inlined_call_operand.vmem [shape: bf16[2,8,8,32], index: 1, kind: input, shape index: {}]
  %s2 = inlined_call_operand.vmem [shape: bf16[2,8,8,32], index: 2, kind: input, shape index: {}]
  %s3 = inlined_call_operand.vmem [shape: f32[4,64,64], index: 3, kind: input, shape index: {}]
  %s4 = inlined_call_operand.hbm [shape: bf16[32,32], index: 4, kind: input, shape index: {}]
  %s5 = inlined_call_operand.vmem [shape: f32[2,8,8,32], index: 5, kind: output, shape index: {}]
  %s6 = sld [smem:[#allocation0]]
  $region57: #{_lambda_.4} parent=0
    _
  %s8 = ssub.s32 1, %s6
  %s9 = scalar_select 0, %s8, %s6
  $region1: #{_lambda_.4} parent=0
    #allocation2 [shape = 'u8[8192]{0}', space=vmem, size = 0x2000, scoped, tag = 'input window, operand 4, single buffered']
    #allocation3 [shape = 's32[2]{0}', space=sflag, size = 0x8, scoped, tag = 'scoped memory for _lambda_.4']
    %10 = vsyncpa [#allocation3], 0
    loop: start=0, step=1, limit=4
    $region2: #{_lambda_.4} parent=1 // loop_pre_header
      _
    $region3: #{_lambda_.4} parent=1 // loop_header
      %s12 = sphi 0, %s16
      %p13 = scmp.ge.s32.totalorder %s12, 4
      %s19 = sphi 0, %s31
      %s20 = sphi 0, %s27
      %s21 = sphi 0, %s19
      %s22 = sphi 0, %s20
      %s23 = sphi 0, %s21
      %s24 = sphi 0, %s22
      %s36 = sphi 0, %s38
      %s39 = sphi 0, %s36
      %s40 = sphi 0, %s39
      %s56 = sphi 0, %s40
      %s64 = sphi 0, %s66
      %s67 = sphi 0, %s64
      %s68 = sphi 0, %s67
      %s84 = sphi 0, %s68
      %s92 = sphi 0, %s94
      %s95 = sphi 0, %s92
      %s96 = sphi 0, %s95
      %s112 = sphi 0, %s96
      %s116 = sphi 0, %s116
      %s118 = sphi 0, %s116
      %s119 = sphi 0, %s118
      %s133 = sphi 0, %s119
      %s137 = sphi 0, %s137
      %s139 = sphi 0, %s137
      %s140 = sphi 0, %s139
      %s154 = sphi 0, %s140
      %s162 = sphi 0, %s164
      %s165 = sphi 0, %s162
      %s166 = sphi 0, %s165
      %s182 = sphi 0, %s166
    $region4: #{_lambda_.4} parent=1 // loop_header_branch
      %15 = sbr.rel (%p13) target = $region8
    $region5: #{_lambda_.4} parent=1 // loop_body
      %s17 = ssub.s32 %s12, 1
      %s18 = ssub.s32 %s12, 2
      %s25 = sadd.s32 1, %s20
      %p26 = scmp.ge.s32.totalorder %s25, 1
      %s27 = scalar_select %p26, 0, %s25
      %s28 = sadd.s32 1, %s19
      %s29 = scalar_select %p26, %s28, %s19
      %p30 = scmp.ge.s32.totalorder %s29, 2
      %s31 = scalar_select %p30, 0, %s29
      %s32 = ssub.s32 %s19, %s31
      %s33 = ssub.s32 %s20, %s27
      %s34 = sor.u32 %s32, %s33
      %p35 = scmp.eq.s32.totalorder %s34, 0
      %s37 = sadd.s32 %s36, 1
      %s38 = scalar_select %p35, %s36, %s37
      %p41 = pneg %p35
      %p42 = scmp.eq.s32.totalorder %s12, 1
      %p43 = por %p41, %p42
      %p44 = scmp.ne.s32.totalorder %s36, %s39
      %p45 = scmp.eq.s32.totalorder %s12, 0
      %p46 = por %p44, %p45
      %p47 = scmp.ne.s32.totalorder %s36, %s39
      %p48 = scmp.eq.s32.totalorder %s17, 1
      %p49 = por %p47, %p48
      %p50 = scmp.ne.s32.totalorder %s39, %s40
      %p51 = scmp.eq.s32.totalorder %s17, 0
      %p52 = por %p50, %p51
      %p53 = scmp.ne.s32.totalorder %s39, %s40
      %p54 = scmp.eq.s32.totalorder %s18, 1
      %p55 = por %p53, %p54
      %p57 = scmp.ne.s32.totalorder %s40, %s56
      %p58 = scmp.eq.s32.totalorder %s18, 0
      %p59 = por %p57, %p58
      %s60 = ssub.s32 %s19, %s31
      %s61 = ssub.s32 %s20, %s27
      %s62 = sor.u32 %s60, %s61
      %p63 = scmp.eq.s32.totalorder %s62, 0
      %s65 = sadd.s32 %s64, 1
      %s66 = scalar_select %p63, %s64, %s65
      %p69 = pneg %p63
      %p70 = scmp.eq.s32.totalorder %s12, 1
      %p71 = por %p69, %p70
      %p72 = scmp.ne.s32.totalorder %s64, %s67
      %p73 = scmp.eq.s32.totalorder %s12, 0
      %p74 = por %p72, %p73
      %p75 = scmp.ne.s32.totalorder %s64, %s67
      %p76 = scmp.eq.s32.totalorder %s17, 1
      %p77 = por %p75, %p76
      %p78 = scmp.ne.s32.totalorder %s67, %s68
      %p79 = scmp.eq.s32.totalorder %s17, 0
      %p80 = por %p78, %p79
      %p81 = scmp.ne.s32.totalorder %s67, %s68
      %p82 = scmp.eq.s32.totalorder %s18, 1
      %p83 = por %p81, %p82
      %p85 = scmp.ne.s32.totalorder %s68, %s84
      %p86 = scmp.eq.s32.totalorder %s18, 0
      %p87 = por %p85, %p86
      %s88 = ssub.s32 %s19, %s31
      %s89 = ssub.s32 %s20, %s27
      %s90 = sor.u32 %s88, %s89
      %p91 = scmp.eq.s32.totalorder %s90, 0
      %s93 = sadd.s32 %s92, 1
      %s94 = scalar_select %p91, %s92, %s93
      %p97 = pneg %p91
      %p98 = scmp.eq.s32.totalorder %s12, 1
      %p99 = por %p97, %p98
      %p100 = scmp.ne.s32.totalorder %s92, %s95
      %p101 = scmp.eq.s32.totalorder %s12, 0
      %p102 = por %p100, %p101
      %p103 = scmp.ne.s32.totalorder %s92, %s95
      %p104 = scmp.eq.s32.totalorder %s17, 1
      %p105 = por %p103, %p104
      %p106 = scmp.ne.s32.totalorder %s95, %s96
      %p107 = scmp.eq.s32.totalorder %s17, 0
      %p108 = por %p106, %p107
      %p109 = scmp.ne.s32.totalorder %s95, %s96
      %p110 = scmp.eq.s32.totalorder %s18, 1
      %p111 = por %p109, %p110
      %p113 = scmp.ne.s32.totalorder %s96, %s112
      %p114 = scmp.eq.s32.totalorder %s18, 0
      %p115 = por %p113, %p114
      %s117 = sadd.s32 %s116, 1
      %p120 = scmp.eq.s32.totalorder %s12, 1
      %p121 = scmp.ne.s32.totalorder %s116, %s118
      %p122 = scmp.eq.s32.totalorder %s12, 0
      %p123 = por %p121, %p122
      %p124 = scmp.ne.s32.totalorder %s116, %s118
      %p125 = scmp.eq.s32.totalorder %s17, 1
      %p126 = por %p124, %p125
      %p127 = scmp.ne.s32.totalorder %s118, %s119
      %p128 = scmp.eq.s32.totalorder %s17, 0
      %p129 = por %p127, %p128
      %p130 = scmp.ne.s32.totalorder %s118, %s119
      %p131 = scmp.eq.s32.totalorder %s18, 1
      %p132 = por %p130, %p131
      %p134 = scmp.ne.s32.totalorder %s119, %s133
      %p135 = scmp.eq.s32.totalorder %s18, 0
      %p136 = por %p134, %p135
      %s138 = sadd.s32 %s137, 1
      %p141 = scmp.eq.s32.totalorder %s12, 1
      %p142 = scmp.ne.s32.totalorder %s137, %s139
      %p143 = scmp.eq.s32.totalorder %s12, 0
      %p144 = por %p142, %p143
      %p145 = scmp.ne.s32.totalorder %s137, %s139
      %p146 = scmp.eq.s32.totalorder %s17, 1
      %p147 = por %p145, %p146
      %p148 = scmp.ne.s32.totalorder %s139, %s140
      %p149 = scmp.eq.s32.totalorder %s17, 0
      %p150 = por %p148, %p149
      %p151 = scmp.ne.s32.totalorder %s139, %s140
      %p152 = scmp.eq.s32.totalorder %s18, 1
      %p153 = por %p151, %p152
      %p155 = scmp.ne.s32.totalorder %s140, %s154
      %p156 = scmp.eq.s32.totalorder %s18, 0
      %p157 = por %p155, %p156
      %s158 = ssub.s32 %s19, %s31
      %s159 = ssub.s32 %s20, %s27
      %s160 = sor.u32 %s158, %s159
      %p161 = scmp.eq.s32.totalorder %s160, 0
      %s163 = sadd.s32 %s162, 1
      %s164 = scalar_select %p161, %s162, %s163
      %p167 = pneg %p161
      %p168 = scmp.eq.s32.totalorder %s12, 1
      %p169 = por %p167, %p168
      %p170 = scmp.ne.s32.totalorder %s162, %s165
      %p171 = scmp.eq.s32.totalorder %s12, 0
      %p172 = por %p170, %p171
      %p173 = scmp.ne.s32.totalorder %s162, %s165
      %p174 = scmp.eq.s32.totalorder %s17, 1
      %p175 = por %p173, %p174
      %p176 = scmp.ne.s32.totalorder %s165, %s166
      %p177 = scmp.eq.s32.totalorder %s17, 0
      %p178 = por %p176, %p177
      %p179 = scmp.ne.s32.totalorder %s165, %s166
      %p180 = scmp.eq.s32.totalorder %s18, 1
      %p181 = por %p179, %p180
      %p183 = scmp.ne.s32.totalorder %s166, %s182
      %p184 = scmp.eq.s32.totalorder %s18, 0
      %p185 = por %p183, %p184
      %p186 = scmp.le.s32.totalorder 1, %s12
      %p187 = scmp.lt.s32.totalorder %s12, 3
      %p188 = pnand %p186, %p187
      %p189 = pneg %p188
      // Predicated region
      $region9: #{_lambda_.4} parent=5 // pred_check
        _
      $region10: #{_lambda_.4} parent=5 // pred_check_branch
        %191 = sbr.rel (%p188) target = $region12
      $region11: #{_lambda_.4} parent=5 // pred_region
        %s192 = ssub.s32 %s12, 1
        // Predicated region
        $region13: #{_lambda_.4} parent=11 // pred_check
          %p193 = pneg %p129
        $region14: #{_lambda_.4} parent=11 // pred_check_branch
          %195 = sbr.rel (%p193) target = $region16
        $region15: #{_lambda_.4} parent=11 // pred_region
          _
        $region16: #{_lambda_.4} parent=11 // pred_fallthru
          _
        // Predicated region
        $region17: #{_lambda_.4} parent=11 // pred_check
          %p196 = pneg %p150
        $region18: #{_lambda_.4} parent=11 // pred_check_branch
          %198 = sbr.rel (%p196) target = $region20
        $region19: #{_lambda_.4} parent=11 // pred_region
          %s200 = ssub.s32 256, 256
          %201 = vsyncadd [#allocation3], %s200
          %s202 = sshll.u32 [#allocation2], 4
          %s203 = int_to_ptr.vmem [resolvable:$true] %s202
          %208 = dma.hbm_to_vmem [thread:$0]  %s4, 256, %s203, [#allocation3], 64, 64, 4
        $region20: #{_lambda_.4} parent=11 // pred_fallthru
          _
      $region12: #{_lambda_.4} parent=5 // pred_fallthru
        _
      %p209 = scmp.lt.s32.totalorder %s12, 2
      // Predicated region
      $region21: #{_lambda_.4} parent=5 // pred_check
        %p210 = pneg %p209
      $region22: #{_lambda_.4} parent=5 // pred_check_branch
        %212 = sbr.rel (%p210) target = $region24
      $region23: #{_lambda_.4} parent=5 // pred_region
        // Predicated region
        $region25: #{_lambda_.4} parent=23 // pred_check
          %p213 = pneg %p46
        $region26: #{_lambda_.4} parent=23 // pred_check_branch
          %215 = sbr.rel (%p213) target = $region28
        $region27: #{_lambda_.4} parent=23 // pred_region
          %s216 = smul.u32 8, %s20
          %p217 = scmp.lt.s32.totalorder %s19, 1
          %s218 = scalar_select %p217, %s19, 1
          %p219 = scmp.lt.s32.totalorder %s216, 7
          %s220 = scalar_select %p219, %s216, 7
          %s221 = smul.addr %s218, 8
          %s222 = sadd.s32 %s220, %s221
          %s223 = smul.addr %s222, 4
          %s224 = scalar_lea.vmem %s0, %s223
          %s225 = smul.u32 8, %s20
        $region28: #{_lambda_.4} parent=23 // pred_fallthru
          _
        // Predicated region
        $region29: #{_lambda_.4} parent=23 // pred_check
          %p226 = pneg %p74
        $region30: #{_lambda_.4} parent=23 // pred_check_branch
          %228 = sbr.rel (%p226) target = $region32
        $region31: #{_lambda_.4} parent=23 // pred_region
          %s229 = smul.u32 8, %s20
          %p230 = scmp.lt.s32.totalorder %s19, 1
          %s231 = scalar_select %p230, %s19, 1
          %p232 = scmp.lt.s32.totalorder %s229, 7
          %s233 = scalar_select %p232, %s229, 7
          %s234 = smul.addr %s231, 8
          %s235 = sadd.s32 %s233, %s234
          %s236 = smul.addr %s235, 4
          %s237 = scalar_lea.vmem %s1, %s236
          %s238 = smul.u32 8, %s20
        $region32: #{_lambda_.4} parent=23 // pred_fallthru
          _
        // Predicated region
        $region33: #{_lambda_.4} parent=23 // pred_check
          %p239 = pneg %p102
        $region34: #{_lambda_.4} parent=23 // pred_check_branch
          %241 = sbr.rel (%p239) target = $region36
        $region35: #{_lambda_.4} parent=23 // pred_region
          %s242 = smul.u32 8, %s20
          %p243 = scmp.lt.s32.totalorder %s19, 1
          %s244 = scalar_select %p243, %s19, 1
          %p245 = scmp.lt.s32.totalorder %s242, 7
          %s246 = scalar_select %p245, %s242, 7
          %s247 = smul.addr %s244, 8
          %s248 = sadd.s32 %s246, %s247
          %s249 = smul.addr %s248, 4
          %s250 = scalar_lea.vmem %s2, %s249
          %s251 = smul.u32 8, %s20
        $region36: #{_lambda_.4} parent=23 // pred_fallthru
          _
      $region24: #{_lambda_.4} parent=5 // pred_fallthru
        _
      %p252 = scmp.le.s32.totalorder 1, %s12
      %p253 = scmp.lt.s32.totalorder %s12, 3
      %p254 = pnand %p252, %p253
      %p255 = pneg %p254
      // Predicated region
      $region37: #{_lambda_.4} parent=5 // pred_check
        _
      $region38: #{_lambda_.4} parent=5 // pred_check_branch
        %257 = sbr.rel (%p254) target = $region40
      $region39: #{_lambda_.4} parent=5 // pred_region
        %s258 = ssub.s32 %s12, 1
        // Predicated region
        $region41: #{_lambda_.4} parent=39 // pred_check
          %p259 = pneg %p150
        $region42: #{_lambda_.4} parent=39 // pred_check_branch
          %261 = sbr.rel (%p259) target = $region44
        $region43: #{_lambda_.4} parent=39 // pred_region
          %262 = dma.done [#allocation3], 256
        $region44: #{_lambda_.4} parent=39 // pred_fallthru
          _
        %s263 = smul.u32 8, %s22
        %p264 = scmp.lt.s32.totalorder %s21, 1
        %s265 = scalar_select %p264, %s21, 1
        %p266 = scmp.lt.s32.totalorder %s263, 7
        %s267 = scalar_select %p266, %s263, 7
        %s268 = smul.addr %s265, 8
        %s269 = sadd.s32 %s267, %s268
        %s270 = smul.addr %s269, 4
        %s271 = scalar_lea.vmem %s0, %s270
        %p272 = pneg %p52
        %p273 = pneg %p49
        %s274 = smul.u32 8, %s22
        %p275 = scmp.lt.s32.totalorder %s21, 1
        %s276 = scalar_select %p275, %s21, 1
        %p277 = scmp.lt.s32.totalorder %s274, 7
        %s278 = scalar_select %p277, %s274, 7
        %s279 = smul.addr %s276, 8
        %s280 = sadd.s32 %s278, %s279
        %s281 = smul.addr %s280, 4
        %s282 = scalar_lea.vmem %s1, %s281
        %p283 = pneg %p80
        %p284 = pneg %p77
        %s285 = smul.u32 8, %s22
        %p286 = scmp.lt.s32.totalorder %s21, 1
        %s287 = scalar_select %p286, %s21, 1
        %p288 = scmp.lt.s32.totalorder %s285, 7
        %s289 = scalar_select %p288, %s285, 7
        %s290 = smul.addr %s287, 8
        %s291 = sadd.s32 %s289, %s290
        %s292 = smul.addr %s291, 4
        %s293 = scalar_lea.vmem %s2, %s292
        %p294 = pneg %p108
        %p295 = pneg %p105
        %p296 = pneg %p129
        %p297 = pneg %p126
        %p298 = pneg %p150
        %p299 = pneg %p147
        %p300 = pneg %p178
        %p301 = pneg %p175
        %s302 = smul.u32 8, %s22
        %p303 = scmp.lt.s32.totalorder %s21, 1
        %s304 = scalar_select %p303, %s21, 1
        %p305 = scmp.lt.s32.totalorder %s302, 7
        %s306 = scalar_select %p305, %s302, 7
        %s307 = smul.addr %s304, 8
        %s308 = sadd.s32 %s306, %s307
        %s309 = smul.addr %s308, 8
        %s310 = scalar_lea.vmem %s5, %s309
        %s311 = smul.u32 8, %s22
        %p312 = scmp.lt.s32.totalorder %s21, 1
        %s313 = scalar_select %p312, %s21, 1
        %p314 = scmp.lt.s32.totalorder %s311, 7
        %s315 = scalar_select %p314, %s311, 7
        %s316 = smul.addr %s313, 8
        %s317 = sadd.s32 %s315, %s316
        %s318 = smul.addr %s317, 4
        %s319 = scalar_lea.vmem %s0, %s318
        %s320 = smul.u32 8, %s22
        %s321 = smul.u32 8, %s22
        %p322 = scmp.lt.s32.totalorder %s21, 1
        %s323 = scalar_select %p322, %s21, 1
        %p324 = scmp.lt.s32.totalorder %s321, 7
        %s325 = scalar_select %p324, %s321, 7
        %s326 = smul.addr %s323, 8
        %s327 = sadd.s32 %s325, %s326
        %s328 = smul.addr %s327, 4
        %s329 = scalar_lea.vmem %s1, %s328
        %s330 = smul.u32 8, %s22
        %s331 = smul.u32 8, %s22
        %p332 = scmp.lt.s32.totalorder %s21, 1
        %s333 = scalar_select %p332, %s21, 1
        %p334 = scmp.lt.s32.totalorder %s331, 7
        %s335 = scalar_select %p334, %s331, 7
        %s336 = smul.addr %s333, 8
        %s337 = sadd.s32 %s335, %s336
        %s338 = smul.addr %s337, 4
        %s339 = scalar_lea.vmem %s2, %s338
        %s340 = smul.u32 8, %s22
        %s341 = smul.u32 8, %s22
        %p342 = scmp.lt.s32.totalorder %s21, 1
        %s343 = scalar_select %p342, %s21, 1
        %p344 = scmp.lt.s32.totalorder %s341, 7
        %s345 = scalar_select %p344, %s341, 7
        %s346 = smul.addr %s343, 8
        %s347 = sadd.s32 %s345, %s346
        %s348 = smul.addr %s347, 8
        %s349 = scalar_lea.vmem %s5, %s348
        %s350 = smul.u32 8, %s22
        %v352 = vld [vmem:[%s319] sm:$0xf]
        %v353 = vld [vmem:[%s319 + $0x4] sm:$0xf]
        %v354 = vld [vmem:[%s319 + $0x8] sm:$0xf]
        %v355 = vld [vmem:[%s319 + $0xc] sm:$0xf]
        %v356 = vld [vmem:[%s319 + $0x10] sm:$0xf]
        %v357 = vld [vmem:[%s319 + $0x14] sm:$0xf]
        %v358 = vld [vmem:[%s319 + $0x18] sm:$0xf]
        %v359 = vld [vmem:[%s319 + $0x1c] sm:$0xf]
        %v360 = vunpack.c.l.bf16 %v352
        %v361 = vunpack.c.l.bf16 %v353
        %v362 = vunpack.c.l.bf16 %v354
        %v363 = vunpack.c.l.bf16 %v355
        %v364 = vunpack.c.l.bf16 %v356
        %v365 = vunpack.c.l.bf16 %v357
        %v366 = vunpack.c.l.bf16 %v358
        %v367 = vunpack.c.l.bf16 %v359
        %v368 = vpack.c.bf16 %v361, %v360
        %v369 = vpack.c.bf16 %v363, %v362
        %v370 = vpack.c.bf16 %v365, %v364
        %v371 = vpack.c.bf16 %v367, %v366
        %v372 = vld [vmem:[%s329] sm:$0xf]
        %v373 = vld [vmem:[%s329 + $0x4] sm:$0xf]
        %v374 = vld [vmem:[%s329 + $0x8] sm:$0xf]
        %v375 = vld [vmem:[%s329 + $0xc] sm:$0xf]
        %v376 = vld [vmem:[%s329 + $0x10] sm:$0xf]
        %v377 = vld [vmem:[%s329 + $0x14] sm:$0xf]
        %v378 = vld [vmem:[%s329 + $0x18] sm:$0xf]
        %v379 = vld [vmem:[%s329 + $0x1c] sm:$0xf]
        %v380 = vunpack.c.l.bf16 %v372
        %v381 = vunpack.c.l.bf16 %v373
        %v382 = vunpack.c.l.bf16 %v374
        %v383 = vunpack.c.l.bf16 %v375
        %v384 = vunpack.c.l.bf16 %v376
        %v385 = vunpack.c.l.bf16 %v377
        %v386 = vunpack.c.l.bf16 %v378
        %v387 = vunpack.c.l.bf16 %v379
        %v388 = vpack.c.bf16 %v381, %v380
        %v389 = vpack.c.bf16 %v383, %v382
        %v390 = vpack.c.bf16 %v385, %v384
        %v391 = vpack.c.bf16 %v387, %v386
        %v392 = vld [vmem:[%s339] sm:$0xf]
        %v393 = vld [vmem:[%s339 + $0x4] sm:$0xf]
        %v394 = vld [vmem:[%s339 + $0x8] sm:$0xf]
        %v395 = vld [vmem:[%s339 + $0xc] sm:$0xf]
        %v396 = vld [vmem:[%s339 + $0x10] sm:$0xf]
        %v397 = vld [vmem:[%s339 + $0x14] sm:$0xf]
        %v398 = vld [vmem:[%s339 + $0x18] sm:$0xf]
        %v399 = vld [vmem:[%s339 + $0x1c] sm:$0xf]
        %v400 = vunpack.c.l.bf16 %v392
        %v401 = vunpack.c.l.bf16 %v393
        %v402 = vunpack.c.l.bf16 %v394
        %v403 = vunpack.c.l.bf16 %v395
        %v404 = vunpack.c.l.bf16 %v396
        %v405 = vunpack.c.l.bf16 %v397
        %v406 = vunpack.c.l.bf16 %v398
        %v407 = vunpack.c.l.bf16 %v399
        %v408 = vpack.c.bf16 %v401, %v400
        %v409 = vpack.c.bf16 %v403, %v402
        %v410 = vpack.c.bf16 %v405, %v404
        %v411 = vpack.c.bf16 %v407, %v406
        %vm412 = vcmask 64512
        %v414 = vsel %vm412, %v368, 0
        %v417 = vsel %vm412, %v369, 0
        %v420 = vsel %vm412, %v370, 0
        %v423 = vsel %vm412, %v371, 0
        %v426 = vsel %vm412, %v388, 0
        %v429 = vsel %vm412, %v389, 0
        %v432 = vsel %vm412, %v390, 0
        %v435 = vsel %vm412, %v391, 0
        %437 = vmatprep.subr.bf16.mxu0 0
        %438 = vmatpush1.bf16.xpose.msra.mxu0 0
        %439 = vmatprep.subr.bf16.mxu0 0
        %440 = vmatpush1.bf16.xpose.msra.mxu0 0
        %441 = vmatprep.subr.bf16.mxu0 0
        %442 = vmatpush1.bf16.xpose.msra.mxu0 0
        %443 = vmatprep.subr.bf16.mxu0 0
        %444 = vmatpush1.bf16.xpose.msra.mxu0 0
        %445 = vmatprep.subr.bf16.mxu0 0
        %446 = vmatpush1.bf16.xpose.msra.mxu0 %v435
        %447 = vmatprep.subr.bf16.mxu0 0
        %448 = vmatpush1.bf16.xpose.msra.mxu0 %v432
        %449 = vmatprep.subr.bf16.mxu0 0
        %450 = vmatpush1.bf16.xpose.msra.mxu0 %v429
        %451 = vmatprep.subr.bf16.mxu0 0
        %452 = vmatpush1.bf16.xpose.msra.mxu0 %v426
        %453 = vmatprep.subr.bf16.mxu0 0
        %454 = vmatpush2.bf16.xpose.msra.mxu0 0
        %455 = vmatprep.subr.bf16.mxu0 0
        %456 = vmatpush2.bf16.xpose.msra.mxu0 0
        %457 = vmatprep.subr.bf16.mxu0 0
        %458 = vmatpush2.bf16.xpose.msra.mxu0 0
        %459 = vmatprep.subr.bf16.mxu0 0
        %460 = vmatpush2.bf16.xpose.msra.mxu0 0
        %461 = vmatprep.subr.bf16.mxu0 0
        %462 = vmatpush2.bf16.xpose.msra.mxu0 0
        %463 = vmatprep.subr.bf16.mxu0 0
        %464 = vmatpush2.bf16.xpose.msra.mxu0 0
        %465 = vmatprep.subr.bf16.mxu0 0
        %466 = vmatpush2.bf16.xpose.msra.mxu0 0
        %467 = vmatprep.subr.bf16.mxu0 0
        %468 = vmatpush2.bf16.xpose.msra.mxu0 0
        %469 = vmatprep.mubr.bf16.mxu0 0
        %470 = vmatmul.mubr.bf16.gmra.mxu0 %v414
        %v471 = vpop.f32.mrf.mxu0
        %v472 = vadd.f32 0.0, %v471
        %v473 = vpop.f32.mrf.mxu0
        %v474 = vpop.f32.mrf.mxu0
        %v475 = vadd.f32 0.0, %v474
        %v476 = vpop.f32.mrf.mxu0
        %477 = vmatprep.mubr.bf16.mxu0 0
        %478 = vmatmul.mubr.bf16.gmra.mxu0 %v417
        %v479 = vpop.f32.mrf.mxu0
        %v480 = vadd.f32 0.0, %v479
        %v481 = vpop.f32.mrf.mxu0
        %v482 = vpop.f32.mrf.mxu0
        %v483 = vadd.f32 0.0, %v482
        %v484 = vpop.f32.mrf.mxu0
        %485 = vmatprep.mubr.bf16.mxu0 0
        %486 = vmatmul.mubr.bf16.gmra.mxu0 %v420
        %v487 = vpop.f32.mrf.mxu0
        %v488 = vadd.f32 0.0, %v487
        %v489 = vpop.f32.mrf.mxu0
        %v490 = vpop.f32.mrf.mxu0
        %v491 = vadd.f32 0.0, %v490
        %v492 = vpop.f32.mrf.mxu0
        %493 = vmatprep.mubr.bf16.mxu0 0
        %494 = vmatmul.mubr.bf16.gmra.mxu0 %v423
        %v495 = vpop.f32.mrf.mxu0
        %v496 = vadd.f32 0.0, %v495
        %v497 = vpop.f32.mrf.mxu0
        %v498 = vpop.f32.mrf.mxu0
        %v499 = vadd.f32 0.0, %v498
        %v500 = vpop.f32.mrf.mxu0
        %501 = vdwg.mxu0
        %v502 = vmul.f32 %v472, 0.35355338
        %v503 = vmul.f32 %v475, 0.35355338
        %v504 = vmul.f32 %v480, 0.35355338
        %v505 = vmul.f32 %v483, 0.35355338
        %v506 = vmul.f32 %v488, 0.35355338
        %v507 = vmul.f32 %v491, 0.35355338
        %v508 = vmul.f32 %v496, 0.35355338
        %v509 = vmul.f32 %v499, 0.35355338
        %v510 = vld [vmem:[%s3] sm:$0xff]
        %v511 = vld [vmem:[%s3 + $0x8] sm:$0xff]
        %v512 = vld [vmem:[%s3 + $0x10] sm:$0xff]
        %v513 = vld [vmem:[%s3 + $0x18] sm:$0xff]
        %v514 = vld [vmem:[%s3 + $0x20] sm:$0xff]
        %v515 = vld [vmem:[%s3 + $0x28] sm:$0xff]
        %v516 = vld [vmem:[%s3 + $0x30] sm:$0xff]
        %v517 = vld [vmem:[%s3 + $0x38] sm:$0xff]
        %v518 = vadd.f32 %v502, %v510
        %v519 = vadd.f32 %v503, %v511
        %v520 = vadd.f32 %v504, %v512
        %v521 = vadd.f32 %v505, %v513
        %v522 = vadd.f32 %v506, %v514
        %v523 = vadd.f32 %v507, %v515
        %v524 = vadd.f32 %v508, %v516
        %v525 = vadd.f32 %v509, %v517
        %vm526 = vcmask 523264
        %v527 = vsel %vm526, %v518, -inf
        %528 = vmax.xlane.f32.xlu0 %v527
        %v529 = vpop.xlane.xlu0 %528
        %v530 = vsel %vm526, %v519, -inf
        %531 = vmax.xlane.f32.xlu0 %v530
        %v532 = vpop.xlane.xlu0 %531
        %v533 = vsel %vm526, %v520, -inf
        %534 = vmax.xlane.f32.xlu0 %v533
        %v535 = vpop.xlane.xlu0 %534
        %v536 = vsel %vm526, %v521, -inf
        %537 = vmax.xlane.f32.xlu0 %v536
        %v538 = vpop.xlane.xlu0 %537
        %v539 = vsel %vm526, %v522, -inf
        %540 = vmax.xlane.f32.xlu0 %v539
        %v541 = vpop.xlane.xlu0 %540
        %v542 = vsel %vm526, %v523, -inf
        %543 = vmax.xlane.f32.xlu0 %v542
        %v544 = vpop.xlane.xlu0 %543
        %v545 = vsel %vm526, %v524, -inf
        %546 = vmax.xlane.f32.xlu0 %v545
        %v547 = vpop.xlane.xlu0 %546
        %v548 = vsel %vm526, %v525, -inf
        %549 = vmax.xlane.f32.xlu0 %v548
        %v550 = vpop.xlane.xlu0 %549
        %v551 = vsub.f32 %v518, %v529
        %v552 = vsub.f32 %v519, %v532
        %v553 = vsub.f32 %v520, %v535
        %v554 = vsub.f32 %v521, %v538
        %v555 = vsub.f32 %v522, %v541
        %v556 = vsub.f32 %v523, %v544
        %v557 = vsub.f32 %v524, %v547
        %v558 = vsub.f32 %v525, %v550
        %v559 = vmul.f32 %v551, 1.442695
        %v560 = vpow.pop %v559
        %v561 = vmul.f32 %v552, 1.442695
        %v562 = vpow.pop %v561
        %v563 = vmul.f32 %v553, 1.442695
        %v564 = vpow.pop %v563
        %v565 = vmul.f32 %v554, 1.442695
        %v566 = vpow.pop %v565
        %v567 = vmul.f32 %v555, 1.442695
        %v568 = vpow.pop %v567
        %v569 = vmul.f32 %v556, 1.442695
        %v570 = vpow.pop %v569
        %v571 = vmul.f32 %v557, 1.442695
        %v572 = vpow.pop %v571
        %v573 = vmul.f32 %v558, 1.442695
        %v574 = vpow.pop %v573
        %v575 = vsel %vm526, %v560, 0.0
        %576 = vadd.xlane.f32.xlu0 %v575
        %v577 = vpop.xlane.xlu0 %576
        %v578 = vsel %vm526, %v562, 0.0
        %579 = vadd.xlane.f32.xlu0 %v578
        %v580 = vpop.xlane.xlu0 %579
        %v581 = vsel %vm526, %v564, 0.0
        %582 = vadd.xlane.f32.xlu0 %v581
        %v583 = vpop.xlane.xlu0 %582
        %v584 = vsel %vm526, %v566, 0.0
        %585 = vadd.xlane.f32.xlu0 %v584
        %v586 = vpop.xlane.xlu0 %585
        %v587 = vsel %vm526, %v568, 0.0
        %588 = vadd.xlane.f32.xlu0 %v587
        %v589 = vpop.xlane.xlu0 %588
        %v590 = vsel %vm526, %v570, 0.0
        %591 = vadd.xlane.f32.xlu0 %v590
        %v592 = vpop.xlane.xlu0 %591
        %v593 = vsel %vm526, %v572, 0.0
        %594 = vadd.xlane.f32.xlu0 %v593
        %v595 = vpop.xlane.xlu0 %594
        %v596 = vsel %vm526, %v574, 0.0
        %597 = vadd.xlane.f32.xlu0 %v596
        %v598 = vpop.xlane.xlu0 %597
        %v599 = vrcp.pop %v577
        %v600 = vrcp.pop %v580
        %v601 = vrcp.pop %v583
        %v602 = vrcp.pop %v586
        %v603 = vrcp.pop %v589
        %v604 = vrcp.pop %v592
        %v605 = vrcp.pop %v595
        %v606 = vrcp.pop %v598
        %v607 = vmul.f32 %v560, %v599
        %v608 = vmul.f32 %v562, %v600
        %v609 = vmul.f32 %v564, %v601
        %v610 = vmul.f32 %v566, %v602
        %v611 = vmul.f32 %v568, %v603
        %v612 = vmul.f32 %v570, %v604
        %v613 = vmul.f32 %v572, %v605
        %v614 = vmul.f32 %v574, %v606
        %v615 = vpack.c.bf16 %v608, %v607
        %v616 = vpack.c.bf16 %v610, %v609
        %v617 = vpack.c.bf16 %v612, %v611
        %v618 = vpack.c.bf16 %v614, %v613
        %v620 = vsel %vm526, %v615, 0
        %v623 = vsel %vm526, %v616, 0
        %v626 = vsel %vm526, %v617, 0
        %v629 = vsel %vm526, %v618, 0
        %631 = vmatprep.subr.bf16.mxu0 0
        %632 = vmatpush1.bf16.msra.mxu0 0
        %633 = vmatprep.subr.bf16.mxu0 0
        %634 = vmatpush1.bf16.msra.mxu0 0
        %635 = vmatprep.subr.bf16.mxu0 0
        %636 = vmatpush1.bf16.msra.mxu0 0
        %637 = vmatprep.subr.bf16.mxu0 0
        %638 = vmatpush1.bf16.msra.mxu0 0
        %639 = vmatprep.subr.bf16.mxu0 0
        %640 = vmatpush1.bf16.msra.mxu0 %v411
        %641 = vmatprep.subr.bf16.mxu0 0
        %642 = vmatpush1.bf16.msra.mxu0 %v410
        %643 = vmatprep.subr.bf16.mxu0 0
        %644 = vmatpush1.bf16.msra.mxu0 %v409
        %645 = vmatprep.subr.bf16.mxu0 0
        %646 = vmatpush1.bf16.msra.mxu0 %v408
        %647 = vmatprep.subr.bf16.mxu0 0
        %648 = vmatpush2.bf16.msra.mxu0 0
        %649 = vmatprep.subr.bf16.mxu0 0
        %650 = vmatpush2.bf16.msra.mxu0 0
        %651 = vmatprep.subr.bf16.mxu0 0
        %652 = vmatpush2.bf16.msra.mxu0 0
        %653 = vmatprep.subr.bf16.mxu0 0
        %654 = vmatpush2.bf16.msra.mxu0 0
        %655 = vmatprep.subr.bf16.mxu0 0
        %656 = vmatpush2.bf16.msra.mxu0 0
        %657 = vmatprep.subr.bf16.mxu0 0
        %658 = vmatpush2.bf16.msra.mxu0 0
        %659 = vmatprep.subr.bf16.mxu0 0
        %660 = vmatpush2.bf16.msra.mxu0 0
        %661 = vmatprep.subr.bf16.mxu0 0
        %662 = vmatpush2.bf16.msra.mxu0 0
        %663 = vmatprep.mubr.bf16.mxu0 0
        %664 = vmatmul.mubr.bf16.gmra.mxu0 %v620
        %v665 = vpop.f32.mrf.mxu0
        %v666 = vadd.f32 0.0, %v665
        %v667 = vpop.f32.mrf.mxu0
        %v668 = vpop.f32.mrf.mxu0
        %v669 = vadd.f32 0.0, %v668
        %v670 = vpop.f32.mrf.mxu0
        %671 = vmatprep.mubr.bf16.mxu0 0
        %672 = vmatmul.mubr.bf16.gmra.mxu0 %v623
        %v673 = vpop.f32.mrf.mxu0
        %v674 = vadd.f32 0.0, %v673
        %v675 = vpop.f32.mrf.mxu0
        %v676 = vpop.f32.mrf.mxu0
        %v677 = vadd.f32 0.0, %v676
        %v678 = vpop.f32.mrf.mxu0
        %679 = vmatprep.mubr.bf16.mxu0 0
        %680 = vmatmul.mubr.bf16.gmra.mxu0 %v626
        %v681 = vpop.f32.mrf.mxu0
        %v682 = vadd.f32 0.0, %v681
        %v683 = vpop.f32.mrf.mxu0
        %v684 = vpop.f32.mrf.mxu0
        %v685 = vadd.f32 0.0, %v684
        %v686 = vpop.f32.mrf.mxu0
        %687 = vmatprep.mubr.bf16.mxu0 0
        %688 = vmatmul.mubr.bf16.gmra.mxu0 %v629
        %v689 = vpop.f32.mrf.mxu0
        %v690 = vadd.f32 0.0, %v689
        %v691 = vpop.f32.mrf.mxu0
        %v692 = vpop.f32.mrf.mxu0
        %v693 = vadd.f32 0.0, %v692
        %v694 = vpop.f32.mrf.mxu0
        %695 = vdwg.mxu0
        %700 = vrot.lane.b32.xlu0 %v368, 120
        %v701 = vpop.permute.xlu0 %700
        %702 = vrot.lane.b32.xlu0 %v369, 120
        %v703 = vpop.permute.xlu0 %702
        %704 = vrot.lane.b32.xlu0 %v370, 120
        %v705 = vpop.permute.xlu0 %704
        %706 = vrot.lane.b32.xlu0 %v371, 120
        %v707 = vpop.permute.xlu0 %706
        %712 = vrot.lane.b32.xlu0 %v388, 120
        %v713 = vpop.permute.xlu0 %712
        %714 = vrot.lane.b32.xlu0 %v389, 120
        %v715 = vpop.permute.xlu0 %714
        %716 = vrot.lane.b32.xlu0 %v390, 120
        %v717 = vpop.permute.xlu0 %716
        %718 = vrot.lane.b32.xlu0 %v391, 120
        %v719 = vpop.permute.xlu0 %718
        %v721 = vsel %vm412, %v701, 0
        %v724 = vsel %vm412, %v703, 0
        %v727 = vsel %vm412, %v705, 0
        %v730 = vsel %vm412, %v707, 0
        %v733 = vsel %vm412, %v713, 0
        %v736 = vsel %vm412, %v715, 0
        %v739 = vsel %vm412, %v717, 0
        %v742 = vsel %vm412, %v719, 0
        %744 = vmatprep.subr.bf16.mxu0 0
        %745 = vmatpush1.bf16.xpose.msra.mxu0 0
        %746 = vmatprep.subr.bf16.mxu0 0
        %747 = vmatpush1.bf16.xpose.msra.mxu0 0
        %748 = vmatprep.subr.bf16.mxu0 0
        %749 = vmatpush1.bf16.xpose.msra.mxu0 0
        %750 = vmatprep.subr.bf16.mxu0 0
        %751 = vmatpush1.bf16.xpose.msra.mxu0 0
        %752 = vmatprep.subr.bf16.mxu0 0
        %753 = vmatpush1.bf16.xpose.msra.mxu0 %v742
        %754 = vmatprep.subr.bf16.mxu0 0
        %755 = vmatpush1.bf16.xpose.msra.mxu0 %v739
        %756 = vmatprep.subr.bf16.mxu0 0
        %757 = vmatpush1.bf16.xpose.msra.mxu0 %v736
        %758 = vmatprep.subr.bf16.mxu0 0
        %759 = vmatpush1.bf16.xpose.msra.mxu0 %v733
        %760 = vmatprep.subr.bf16.mxu0 0
        %761 = vmatpush2.bf16.xpose.msra.mxu0 0
        %762 = vmatprep.subr.bf16.mxu0 0
        %763 = vmatpush2.bf16.xpose.msra.mxu0 0
        %764 = vmatprep.subr.bf16.mxu0 0
        %765 = vmatpush2.bf16.xpose.msra.mxu0 0
        %766 = vmatprep.subr.bf16.mxu0 0
        %767 = vmatpush2.bf16.xpose.msra.mxu0 0
        %768 = vmatprep.subr.bf16.mxu0 0
        %769 = vmatpush2.bf16.xpose.msra.mxu0 0
        %770 = vmatprep.subr.bf16.mxu0 0
        %771 = vmatpush2.bf16.xpose.msra.mxu0 0
        %772 = vmatprep.subr.bf16.mxu0 0
        %773 = vmatpush2.bf16.xpose.msra.mxu0 0
        %774 = vmatprep.subr.bf16.mxu0 0
        %775 = vmatpush2.bf16.xpose.msra.mxu0 0
        %776 = vmatprep.mubr.bf16.mxu0 0
        %777 = vmatmul.mubr.bf16.gmra.mxu0 %v721
        %v778 = vpop.f32.mrf.mxu0
        %v779 = vadd.f32 0.0, %v778
        %v780 = vpop.f32.mrf.mxu0
        %v781 = vpop.f32.mrf.mxu0
        %v782 = vadd.f32 0.0, %v781
        %v783 = vpop.f32.mrf.mxu0
        %784 = vmatprep.mubr.bf16.mxu0 0
        %785 = vmatmul.mubr.bf16.gmra.mxu0 %v724
        %v786 = vpop.f32.mrf.mxu0
        %v787 = vadd.f32 0.0, %v786
        %v788 = vpop.f32.mrf.mxu0
        %v789 = vpop.f32.mrf.mxu0
        %v790 = vadd.f32 0.0, %v789
        %v791 = vpop.f32.mrf.mxu0
        %792 = vmatprep.mubr.bf16.mxu0 0
        %793 = vmatmul.mubr.bf16.gmra.mxu0 %v727
        %v794 = vpop.f32.mrf.mxu0
        %v795 = vadd.f32 0.0, %v794
        %v796 = vpop.f32.mrf.mxu0
        %v797 = vpop.f32.mrf.mxu0
        %v798 = vadd.f32 0.0, %v797
        %v799 = vpop.f32.mrf.mxu0
        %800 = vmatprep.mubr.bf16.mxu0 0
        %801 = vmatmul.mubr.bf16.gmra.mxu0 %v730
        %v802 = vpop.f32.mrf.mxu0
        %v803 = vadd.f32 0.0, %v802
        %v804 = vpop.f32.mrf.mxu0
        %v805 = vpop.f32.mrf.mxu0
        %v806 = vadd.f32 0.0, %v805
        %v807 = vpop.f32.mrf.mxu0
        %808 = vdwg.mxu0
        %v809 = vmul.f32 %v779, 0.35355338
        %v810 = vmul.f32 %v782, 0.35355338
        %v811 = vmul.f32 %v787, 0.35355338
        %v812 = vmul.f32 %v790, 0.35355338
        %v813 = vmul.f32 %v795, 0.35355338
        %v814 = vmul.f32 %v798, 0.35355338
        %v815 = vmul.f32 %v803, 0.35355338
        %v816 = vmul.f32 %v806, 0.35355338
        %s817 = scalar_lea.vmem %s3, 64
        %v818 = vld [vmem:[%s817] sm:$0xff]
        %v819 = vld [vmem:[%s817 + $0x8] sm:$0xff]
        %v820 = vld [vmem:[%s817 + $0x10] sm:$0xff]
        %v821 = vld [vmem:[%s817 + $0x18] sm:$0xff]
        %v822 = vld [vmem:[%s817 + $0x20] sm:$0xff]
        %v823 = vld [vmem:[%s817 + $0x28] sm:$0xff]
        %v824 = vld [vmem:[%s817 + $0x30] sm:$0xff]
        %v825 = vld [vmem:[%s817 + $0x38] sm:$0xff]
        %v826 = vadd.f32 %v809, %v818
        %v827 = vadd.f32 %v810, %v819
        %v828 = vadd.f32 %v811, %v820
        %v829 = vadd.f32 %v812, %v821
        %v830 = vadd.f32 %v813, %v822
        %v831 = vadd.f32 %v814, %v823
        %v832 = vadd.f32 %v815, %v824
        %v833 = vadd.f32 %v816, %v825
        %v834 = vsel %vm526, %v826, -inf
        %835 = vmax.xlane.f32.xlu0 %v834
        %v836 = vpop.xlane.xlu0 %835
        %v837 = vsel %vm526, %v827, -inf
        %838 = vmax.xlane.f32.xlu0 %v837
        %v839 = vpop.xlane.xlu0 %838
        %v840 = vsel %vm526, %v828, -inf
        %841 = vmax.xlane.f32.xlu0 %v840
        %v842 = vpop.xlane.xlu0 %841
        %v843 = vsel %vm526, %v829, -inf
        %844 = vmax.xlane.f32.xlu0 %v843
        %v845 = vpop.xlane.xlu0 %844
        %v846 = vsel %vm526, %v830, -inf
        %847 = vmax.xlane.f32.xlu0 %v846
        %v848 = vpop.xlane.xlu0 %847
        %v849 = vsel %vm526, %v831, -inf
        %850 = vmax.xlane.f32.xlu0 %v849
        %v851 = vpop.xlane.xlu0 %850
        %v852 = vsel %vm526, %v832, -inf
        %853 = vmax.xlane.f32.xlu0 %v852
        %v854 = vpop.xlane.xlu0 %853
        %v855 = vsel %vm526, %v833, -inf
        %856 = vmax.xlane.f32.xlu0 %v855
        %v857 = vpop.xlane.xlu0 %856
        %v858 = vsub.f32 %v826, %v836
        %v859 = vsub.f32 %v827, %v839
        %v860 = vsub.f32 %v828, %v842
        %v861 = vsub.f32 %v829, %v845
        %v862 = vsub.f32 %v830, %v848
        %v863 = vsub.f32 %v831, %v851
        %v864 = vsub.f32 %v832, %v854
        %v865 = vsub.f32 %v833, %v857
        %v866 = vmul.f32 %v858, 1.442695
        %v867 = vpow.pop %v866
        %v868 = vmul.f32 %v859, 1.442695
        %v869 = vpow.pop %v868
        %v870 = vmul.f32 %v860, 1.442695
        %v871 = vpow.pop %v870
        %v872 = vmul.f32 %v861, 1.442695
        %v873 = vpow.pop %v872
        %v874 = vmul.f32 %v862, 1.442695
        %v875 = vpow.pop %v874
        %v876 = vmul.f32 %v863, 1.442695
        %v877 = vpow.pop %v876
        %v878 = vmul.f32 %v864, 1.442695
        %v879 = vpow.pop %v878
        %v880 = vmul.f32 %v865, 1.442695
        %v881 = vpow.pop %v880
        %v882 = vsel %vm526, %v867, 0.0
        %883 = vadd.xlane.f32.xlu0 %v882
        %v884 = vpop.xlane.xlu0 %883
        %v885 = vsel %vm526, %v869, 0.0
        %886 = vadd.xlane.f32.xlu0 %v885
        %v887 = vpop.xlane.xlu0 %886
        %v888 = vsel %vm526, %v871, 0.0
        %889 = vadd.xlane.f32.xlu0 %v888
        %v890 = vpop.xlane.xlu0 %889
        %v891 = vsel %vm526, %v873, 0.0
        %892 = vadd.xlane.f32.xlu0 %v891
        %v893 = vpop.xlane.xlu0 %892
        %v894 = vsel %vm526, %v875, 0.0
        %895 = vadd.xlane.f32.xlu0 %v894
        %v896 = vpop.xlane.xlu0 %895
        %v897 = vsel %vm526, %v877, 0.0
        %898 = vadd.xlane.f32.xlu0 %v897
        %v899 = vpop.xlane.xlu0 %898
        %v900 = vsel %vm526, %v879, 0.0
        %901 = vadd.xlane.f32.xlu0 %v900
        %v902 = vpop.xlane.xlu0 %901
        %v903 = vsel %vm526, %v881, 0.0
        %904 = vadd.xlane.f32.xlu0 %v903
        %v905 = vpop.xlane.xlu0 %904
        %v906 = vrcp.pop %v884
        %v907 = vrcp.pop %v887
        %v908 = vrcp.pop %v890
        %v909 = vrcp.pop %v893
        %v910 = vrcp.pop %v896
        %v911 = vrcp.pop %v899
        %v912 = vrcp.pop %v902
        %v913 = vrcp.pop %v905
        %v914 = vmul.f32 %v867, %v906
        %v915 = vmul.f32 %v869, %v907
        %v916 = vmul.f32 %v871, %v908
        %v917 = vmul.f32 %v873, %v909
        %v918 = vmul.f32 %v875, %v910
        %v919 = vmul.f32 %v877, %v911
        %v920 = vmul.f32 %v879, %v912
        %v921 = vmul.f32 %v881, %v913
        %v922 = vpack.c.bf16 %v915, %v914
        %v923 = vpack.c.bf16 %v917, %v916
        %v924 = vpack.c.bf16 %v919, %v918
        %v925 = vpack.c.bf16 %v921, %v920
        %930 = vrot.lane.b32.xlu0 %v408, 120
        %v931 = vpop.permute.xlu0 %930
        %932 = vrot.lane.b32.xlu0 %v409, 120
        %v933 = vpop.permute.xlu0 %932
        %934 = vrot.lane.b32.xlu0 %v410, 120
        %v935 = vpop.permute.xlu0 %934
        %936 = vrot.lane.b32.xlu0 %v411, 120
        %v937 = vpop.permute.xlu0 %936
        %v943 = vsel %vm526, %v922, 0
        %v946 = vsel %vm526, %v923, 0
        %v949 = vsel %vm526, %v924, 0
        %v952 = vsel %vm526, %v925, 0
        %954 = vmatprep.subr.bf16.mxu0 0
        %955 = vmatpush1.bf16.msra.mxu0 0
        %956 = vmatprep.subr.bf16.mxu0 0
        %957 = vmatpush1.bf16.msra.mxu0 0
        %958 = vmatprep.subr.bf16.mxu0 0
        %959 = vmatpush1.bf16.msra.mxu0 0
        %960 = vmatprep.subr.bf16.mxu0 0
        %961 = vmatpush1.bf16.msra.mxu0 0
        %962 = vmatprep.subr.bf16.mxu0 0
        %963 = vmatpush1.bf16.msra.mxu0 %v937
        %964 = vmatprep.subr.bf16.mxu0 0
        %965 = vmatpush1.bf16.msra.mxu0 %v935
        %966 = vmatprep.subr.bf16.mxu0 0
        %967 = vmatpush1.bf16.msra.mxu0 %v933
        %968 = vmatprep.subr.bf16.mxu0 0
        %969 = vmatpush1.bf16.msra.mxu0 %v931
        %970 = vmatprep.subr.bf16.mxu0 0
        %971 = vmatpush2.bf16.msra.mxu0 0
        %972 = vmatprep.subr.bf16.mxu0 0
        %973 = vmatpush2.bf16.msra.mxu0 0
        %974 = vmatprep.subr.bf16.mxu0 0
        %975 = vmatpush2.bf16.msra.mxu0 0
        %976 = vmatprep.subr.bf16.mxu0 0
        %977 = vmatpush2.bf16.msra.mxu0 0
        %978 = vmatprep.subr.bf16.mxu0 0
        %979 = vmatpush2.bf16.msra.mxu0 0
        %980 = vmatprep.subr.bf16.mxu0 0
        %981 = vmatpush2.bf16.msra.mxu0 0
        %982 = vmatprep.subr.bf16.mxu0 0
        %983 = vmatpush2.bf16.msra.mxu0 0
        %984 = vmatprep.subr.bf16.mxu0 0
        %985 = vmatpush2.bf16.msra.mxu0 0
        %986 = vmatprep.mubr.bf16.mxu0 0
        %987 = vmatmul.mubr.bf16.gmra.mxu0 %v943
        %v988 = vpop.f32.mrf.mxu0
        %v989 = vadd.f32 0.0, %v988
        %v990 = vpop.f32.mrf.mxu0
        %v991 = vpop.f32.mrf.mxu0
        %v992 = vadd.f32 0.0, %v991
        %v993 = vpop.f32.mrf.mxu0
        %994 = vmatprep.mubr.bf16.mxu0 0
        %995 = vmatmul.mubr.bf16.gmra.mxu0 %v946
        %v996 = vpop.f32.mrf.mxu0
        %v997 = vadd.f32 0.0, %v996
        %v998 = vpop.f32.mrf.mxu0
        %v999 = vpop.f32.mrf.mxu0
        %v1000 = vadd.f32 0.0, %v999
        %v1001 = vpop.f32.mrf.mxu0
        %1002 = vmatprep.mubr.bf16.mxu0 0
        %1003 = vmatmul.mubr.bf16.gmra.mxu0 %v949
        %v1004 = vpop.f32.mrf.mxu0
        %v1005 = vadd.f32 0.0, %v1004
        %v1006 = vpop.f32.mrf.mxu0
        %v1007 = vpop.f32.mrf.mxu0
        %v1008 = vadd.f32 0.0, %v1007
        %v1009 = vpop.f32.mrf.mxu0
        %1010 = vmatprep.mubr.bf16.mxu0 0
        %1011 = vmatmul.mubr.bf16.gmra.mxu0 %v952
        %v1012 = vpop.f32.mrf.mxu0
        %v1013 = vadd.f32 0.0, %v1012
        %v1014 = vpop.f32.mrf.mxu0
        %v1015 = vpop.f32.mrf.mxu0
        %v1016 = vadd.f32 0.0, %v1015
        %v1017 = vpop.f32.mrf.mxu0
        %1018 = vdwg.mxu0
        %1019 = vrot.lane.b32.xlu0 %v368, 112
        %v1020 = vpop.permute.xlu0 %1019
        %1021 = vrot.lane.b32.xlu0 %v369, 112
        %v1022 = vpop.permute.xlu0 %1021
        %1023 = vrot.lane.b32.xlu0 %v370, 112
        %v1024 = vpop.permute.xlu0 %1023
        %1025 = vrot.lane.b32.xlu0 %v371, 112
        %v1026 = vpop.permute.xlu0 %1025
        %1027 = vrot.lane.b32.xlu0 %v388, 112
        %v1028 = vpop.permute.xlu0 %1027
        %1029 = vrot.lane.b32.xlu0 %v389, 112
        %v1030 = vpop.permute.xlu0 %1029
        %1031 = vrot.lane.b32.xlu0 %v390, 112
        %v1032 = vpop.permute.xlu0 %1031
        %1033 = vrot.lane.b32.xlu0 %v391, 112
        %v1034 = vpop.permute.xlu0 %1033
        %v1036 = vsel %vm412, %v1020, 0
        %v1039 = vsel %vm412, %v1022, 0
        %v1042 = vsel %vm412, %v1024, 0
        %v1045 = vsel %vm412, %v1026, 0
        %v1048 = vsel %vm412, %v1028, 0
        %v1051 = vsel %vm412, %v1030, 0
        %v1054 = vsel %vm412, %v1032, 0
        %v1057 = vsel %vm412, %v1034, 0
        %1059 = vmatprep.subr.bf16.mxu0 0
        %1060 = vmatpush1.bf16.xpose.msra.mxu0 0
        %1061 = vmatprep.subr.bf16.mxu0 0
        %1062 = vmatpush1.bf16.xpose.msra.mxu0 0
        %1063 = vmatprep.subr.bf16.mxu0 0
        %1064 = vmatpush1.bf16.xpose.msra.mxu0 0
        %1065 = vmatprep.subr.bf16.mxu0 0
        %1066 = vmatpush1.bf16.xpose.msra.mxu0 0
        %1067 = vmatprep.subr.bf16.mxu0 0
        %1068 = vmatpush1.bf16.xpose.msra.mxu0 %v1057
        %1069 = vmatprep.subr.bf16.mxu0 0
        %1070 = vmatpush1.bf16.xpose.msra.mxu0 %v1054
        %1071 = vmatprep.subr.bf16.mxu0 0
        %1072 = vmatpush1.bf16.xpose.msra.mxu0 %v1051
        %1073 = vmatprep.subr.bf16.mxu0 0
        %1074 = vmatpush1.bf16.xpose.msra.mxu0 %v1048
        %1075 = vmatprep.subr.bf16.mxu0 0
        %1076 = vmatpush2.bf16.xpose.msra.mxu0 0
        %1077 = vmatprep.subr.bf16.mxu0 0
        %1078 = vmatpush2.bf16.xpose.msra.mxu0 0
        %1079 = vmatprep.subr.bf16.mxu0 0
        %1080 = vmatpush2.bf16.xpose.msra.mxu0 0
        %1081 = vmatprep.subr.bf16.mxu0 0
        %1082 = vmatpush2.bf16.xpose.msra.mxu0 0
        %1083 = vmatprep.subr.bf16.mxu0 0
        %1084 = vmatpush2.bf16.xpose.msra.mxu0 0
        %1085 = vmatprep.subr.bf16.mxu0 0
        %1086 = vmatpush2.bf16.xpose.msra.mxu0 0
        %1087 = vmatprep.subr.bf16.mxu0 0
        %1088 = vmatpush2.bf16.xpose.msra.mxu0 0
        %1089 = vmatprep.subr.bf16.mxu0 0
        %1090 = vmatpush2.bf16.xpose.msra.mxu0 0
        %1091 = vmatprep.mubr.bf16.mxu0 0
        %1092 = vmatmul.mubr.bf16.gmra.mxu0 %v1036
        %v1093 = vpop.f32.mrf.mxu0
        %v1094 = vadd.f32 0.0, %v1093
        %v1095 = vpop.f32.mrf.mxu0
        %v1096 = vpop.f32.mrf.mxu0
        %v1097 = vadd.f32 0.0, %v1096
        %v1098 = vpop.f32.mrf.mxu0
        %1099 = vmatprep.mubr.bf16.mxu0 0
        %1100 = vmatmul.mubr.bf16.gmra.mxu0 %v1039
        %v1101 = vpop.f32.mrf.mxu0
        %v1102 = vadd.f32 0.0, %v1101
        %v1103 = vpop.f32.mrf.mxu0
        %v1104 = vpop.f32.mrf.mxu0
        %v1105 = vadd.f32 0.0, %v1104
        %v1106 = vpop.f32.mrf.mxu0
        %1107 = vmatprep.mubr.bf16.mxu0 0
        %1108 = vmatmul.mubr.bf16.gmra.mxu0 %v1042
        %v1109 = vpop.f32.mrf.mxu0
        %v1110 = vadd.f32 0.0, %v1109
        %v1111 = vpop.f32.mrf.mxu0
        %v1112 = vpop.f32.mrf.mxu0
        %v1113 = vadd.f32 0.0, %v1112
        %v1114 = vpop.f32.mrf.mxu0
        %1115 = vmatprep.mubr.bf16.mxu0 0
        %1116 = vmatmul.mubr.bf16.gmra.mxu0 %v1045
        %v1117 = vpop.f32.mrf.mxu0
        %v1118 = vadd.f32 0.0, %v1117
        %v1119 = vpop.f32.mrf.mxu0
        %v1120 = vpop.f32.mrf.mxu0
        %v1121 = vadd.f32 0.0, %v1120
        %v1122 = vpop.f32.mrf.mxu0
        %1123 = vdwg.mxu0
        %v1124 = vmul.f32 %v1094, 0.35355338
        %v1125 = vmul.f32 %v1097, 0.35355338
        %v1126 = vmul.f32 %v1102, 0.35355338
        %v1127 = vmul.f32 %v1105, 0.35355338
        %v1128 = vmul.f32 %v1110, 0.35355338
        %v1129 = vmul.f32 %v1113, 0.35355338
        %v1130 = vmul.f32 %v1118, 0.35355338
        %v1131 = vmul.f32 %v1121, 0.35355338
        %s1132 = scalar_lea.vmem %s3, 128
        %v1133 = vld [vmem:[%s1132] sm:$0xff]
        %v1134 = vld [vmem:[%s1132 + $0x8] sm:$0xff]
        %v1135 = vld [vmem:[%s1132 + $0x10] sm:$0xff]
        %v1136 = vld [vmem:[%s1132 + $0x18] sm:$0xff]
        %v1137 = vld [vmem:[%s1132 + $0x20] sm:$0xff]
        %v1138 = vld [vmem:[%s1132 + $0x28] sm:$0xff]
        %v1139 = vld [vmem:[%s1132 + $0x30] sm:$0xff]
        %v1140 = vld [vmem:[%s1132 + $0x38] sm:$0xff]
        %v1141 = vadd.f32 %v1124, %v1133
        %v1142 = vadd.f32 %v1125, %v1134
        %v1143 = vadd.f32 %v1126, %v1135
        %v1144 = vadd.f32 %v1127, %v1136
        %v1145 = vadd.f32 %v1128, %v1137
        %v1146 = vadd.f32 %v1129, %v1138
        %v1147 = vadd.f32 %v1130, %v1139
        %v1148 = vadd.f32 %v1131, %v1140
        %v1149 = vsel %vm526, %v1141, -inf
        %1150 = vmax.xlane.f32.xlu0 %v1149
        %v1151 = vpop.xlane.xlu0 %1150
        %v1152 = vsel %vm526, %v1142, -inf
        %1153 = vmax.xlane.f32.xlu0 %v1152
        %v1154 = vpop.xlane.xlu0 %1153
        %v1155 = vsel %vm526, %v1143, -inf
        %1156 = vmax.xlane.f32.xlu0 %v1155
        %v1157 = vpop.xlane.xlu0 %1156
        %v1158 = vsel %vm526, %v1144, -inf
        %1159 = vmax.xlane.f32.xlu0 %v1158
        %v1160 = vpop.xlane.xlu0 %1159
        %v1161 = vsel %vm526, %v1145, -inf
        %1162 = vmax.xlane.f32.xlu0 %v1161
        %v1163 = vpop.xlane.xlu0 %1162
        %v1164 = vsel %vm526, %v1146, -inf
        %1165 = vmax.xlane.f32.xlu0 %v1164
        %v1166 = vpop.xlane.xlu0 %1165
        %v1167 = vsel %vm526, %v1147, -inf
        %1168 = vmax.xlane.f32.xlu0 %v1167
        %v1169 = vpop.xlane.xlu0 %1168
        %v1170 = vsel %vm526, %v1148, -inf
        %1171 = vmax.xlane.f32.xlu0 %v1170
        %v1172 = vpop.xlane.xlu0 %1171
        %v1173 = vsub.f32 %v1141, %v1151
        %v1174 = vsub.f32 %v1142, %v1154
        %v1175 = vsub.f32 %v1143, %v1157
        %v1176 = vsub.f32 %v1144, %v1160
        %v1177 = vsub.f32 %v1145, %v1163
        %v1178 = vsub.f32 %v1146, %v1166
        %v1179 = vsub.f32 %v1147, %v1169
        %v1180 = vsub.f32 %v1148, %v1172
        %v1181 = vmul.f32 %v1173, 1.442695
        %v1182 = vpow.pop %v1181
        %v1183 = vmul.f32 %v1174, 1.442695
        %v1184 = vpow.pop %v1183
        %v1185 = vmul.f32 %v1175, 1.442695
        %v1186 = vpow.pop %v1185
        %v1187 = vmul.f32 %v1176, 1.442695
        %v1188 = vpow.pop %v1187
        %v1189 = vmul.f32 %v1177, 1.442695
        %v1190 = vpow.pop %v1189
        %v1191 = vmul.f32 %v1178, 1.442695
        %v1192 = vpow.pop %v1191
        %v1193 = vmul.f32 %v1179, 1.442695
        %v1194 = vpow.pop %v1193
        %v1195 = vmul.f32 %v1180, 1.442695
        %v1196 = vpow.pop %v1195
        %v1197 = vsel %vm526, %v1182, 0.0
        %1198 = vadd.xlane.f32.xlu0 %v1197
        %v1199 = vpop.xlane.xlu0 %1198
        %v1200 = vsel %vm526, %v1184, 0.0
        %1201 = vadd.xlane.f32.xlu0 %v1200
        %v1202 = vpop.xlane.xlu0 %1201
        %v1203 = vsel %vm526, %v1186, 0.0
        %1204 = vadd.xlane.f32.xlu0 %v1203
        %v1205 = vpop.xlane.xlu0 %1204
        %v1206 = vsel %vm526, %v1188, 0.0
        %1207 = vadd.xlane.f32.xlu0 %v1206
        %v1208 = vpop.xlane.xlu0 %1207
        %v1209 = vsel %vm526, %v1190, 0.0
        %1210 = vadd.xlane.f32.xlu0 %v1209
        %v1211 = vpop.xlane.xlu0 %1210
        %v1212 = vsel %vm526, %v1192, 0.0
        %1213 = vadd.xlane.f32.xlu0 %v1212
        %v1214 = vpop.xlane.xlu0 %1213
        %v1215 = vsel %vm526, %v1194, 0.0
        %1216 = vadd.xlane.f32.xlu0 %v1215
        %v1217 = vpop.xlane.xlu0 %1216
        %v1218 = vsel %vm526, %v1196, 0.0
        %1219 = vadd.xlane.f32.xlu0 %v1218
        %v1220 = vpop.xlane.xlu0 %1219
        %v1221 = vrcp.pop %v1199
        %v1222 = vrcp.pop %v1202
        %v1223 = vrcp.pop %v1205
        %v1224 = vrcp.pop %v1208
        %v1225 = vrcp.pop %v1211
        %v1226 = vrcp.pop %v1214
        %v1227 = vrcp.pop %v1217
        %v1228 = vrcp.pop %v1220
        %v1229 = vmul.f32 %v1182, %v1221
        %v1230 = vmul.f32 %v1184, %v1222
        %v1231 = vmul.f32 %v1186, %v1223
        %v1232 = vmul.f32 %v1188, %v1224
        %v1233 = vmul.f32 %v1190, %v1225
        %v1234 = vmul.f32 %v1192, %v1226
        %v1235 = vmul.f32 %v1194, %v1227
        %v1236 = vmul.f32 %v1196, %v1228
        %v1237 = vpack.c.bf16 %v1230, %v1229
        %v1238 = vpack.c.bf16 %v1232, %v1231
        %v1239 = vpack.c.bf16 %v1234, %v1233
        %v1240 = vpack.c.bf16 %v1236, %v1235
        %1241 = vrot.lane.b32.xlu0 %v408, 112
        %v1242 = vpop.permute.xlu0 %1241
        %1243 = vrot.lane.b32.xlu0 %v409, 112
        %v1244 = vpop.permute.xlu0 %1243
        %1245 = vrot.lane.b32.xlu0 %v410, 112
        %v1246 = vpop.permute.xlu0 %1245
        %1247 = vrot.lane.b32.xlu0 %v411, 112
        %v1248 = vpop.permute.xlu0 %1247
        %v1254 = vsel %vm526, %v1237, 0
        %v1257 = vsel %vm526, %v1238, 0
        %v1260 = vsel %vm526, %v1239, 0
        %v1263 = vsel %vm526, %v1240, 0
        %1265 = vmatprep.subr.bf16.mxu0 0
        %1266 = vmatpush1.bf16.msra.mxu0 0
        %1267 = vmatprep.subr.bf16.mxu0 0
        %1268 = vmatpush1.bf16.msra.mxu0 0
        %1269 = vmatprep.subr.bf16.mxu0 0
        %1270 = vmatpush1.bf16.msra.mxu0 0
        %1271 = vmatprep.subr.bf16.mxu0 0
        %1272 = vmatpush1.bf16.msra.mxu0 0
        %1273 = vmatprep.subr.bf16.mxu0 0
        %1274 = vmatpush1.bf16.msra.mxu0 %v1248
        %1275 = vmatprep.subr.bf16.mxu0 0
        %1276 = vmatpush1.bf16.msra.mxu0 %v1246
        %1277 = vmatprep.subr.bf16.mxu0 0
        %1278 = vmatpush1.bf16.msra.mxu0 %v1244
        %1279 = vmatprep.subr.bf16.mxu0 0
        %1280 = vmatpush1.bf16.msra.mxu0 %v1242
        %1281 = vmatprep.subr.bf16.mxu0 0
        %1282 = vmatpush2.bf16.msra.mxu0 0
        %1283 = vmatprep.subr.bf16.mxu0 0
        %1284 = vmatpush2.bf16.msra.mxu0 0
        %1285 = vmatprep.subr.bf16.mxu0 0
        %1286 = vmatpush2.bf16.msra.mxu0 0
        %1287 = vmatprep.subr.bf16.mxu0 0
        %1288 = vmatpush2.bf16.msra.mxu0 0
        %1289 = vmatprep.subr.bf16.mxu0 0
        %1290 = vmatpush2.bf16.msra.mxu0 0
        %1291 = vmatprep.subr.bf16.mxu0 0
        %1292 = vmatpush2.bf16.msra.mxu0 0
        %1293 = vmatprep.subr.bf16.mxu0 0
        %1294 = vmatpush2.bf16.msra.mxu0 0
        %1295 = vmatprep.subr.bf16.mxu0 0
        %1296 = vmatpush2.bf16.msra.mxu0 0
        %1297 = vmatprep.mubr.bf16.mxu0 0
        %1298 = vmatmul.mubr.bf16.gmra.mxu0 %v1254
        %v1299 = vpop.f32.mrf.mxu0
        %v1300 = vadd.f32 0.0, %v1299
        %v1301 = vpop.f32.mrf.mxu0
        %v1302 = vpop.f32.mrf.mxu0
        %v1303 = vadd.f32 0.0, %v1302
        %v1304 = vpop.f32.mrf.mxu0
        %1305 = vmatprep.mubr.bf16.mxu0 0
        %1306 = vmatmul.mubr.bf16.gmra.mxu0 %v1257
        %v1307 = vpop.f32.mrf.mxu0
        %v1308 = vadd.f32 0.0, %v1307
        %v1309 = vpop.f32.mrf.mxu0
        %v1310 = vpop.f32.mrf.mxu0
        %v1311 = vadd.f32 0.0, %v1310
        %v1312 = vpop.f32.mrf.mxu0
        %1313 = vmatprep.mubr.bf16.mxu0 0
        %1314 = vmatmul.mubr.bf16.gmra.mxu0 %v1260
        %v1315 = vpop.f32.mrf.mxu0
        %v1316 = vadd.f32 0.0, %v1315
        %v1317 = vpop.f32.mrf.mxu0
        %v1318 = vpop.f32.mrf.mxu0
        %v1319 = vadd.f32 0.0, %v1318
        %v1320 = vpop.f32.mrf.mxu0
        %1321 = vmatprep.mubr.bf16.mxu0 0
        %1322 = vmatmul.mubr.bf16.gmra.mxu0 %v1263
        %v1323 = vpop.f32.mrf.mxu0
        %v1324 = vadd.f32 0.0, %v1323
        %v1325 = vpop.f32.mrf.mxu0
        %v1326 = vpop.f32.mrf.mxu0
        %v1327 = vadd.f32 0.0, %v1326
        %v1328 = vpop.f32.mrf.mxu0
        %1329 = vdwg.mxu0
        %1330 = vrot.lane.b32.xlu0 %v368, 104
        %v1331 = vpop.permute.xlu0 %1330
        %1332 = vrot.lane.b32.xlu0 %v369, 104
        %v1333 = vpop.permute.xlu0 %1332
        %1334 = vrot.lane.b32.xlu0 %v370, 104
        %v1335 = vpop.permute.xlu0 %1334
        %1336 = vrot.lane.b32.xlu0 %v371, 104
        %v1337 = vpop.permute.xlu0 %1336
        %1338 = vrot.lane.b32.xlu0 %v388, 104
        %v1339 = vpop.permute.xlu0 %1338
        %1340 = vrot.lane.b32.xlu0 %v389, 104
        %v1341 = vpop.permute.xlu0 %1340
        %1342 = vrot.lane.b32.xlu0 %v390, 104
        %v1343 = vpop.permute.xlu0 %1342
        %1344 = vrot.lane.b32.xlu0 %v391, 104
        %v1345 = vpop.permute.xlu0 %1344
        %v1347 = vsel %vm412, %v1331, 0
        %v1350 = vsel %vm412, %v1333, 0
        %v1353 = vsel %vm412, %v1335, 0
        %v1356 = vsel %vm412, %v1337, 0
        %v1359 = vsel %vm412, %v1339, 0
        %v1362 = vsel %vm412, %v1341, 0
        %v1365 = vsel %vm412, %v1343, 0
        %v1368 = vsel %vm412, %v1345, 0
        %1370 = vmatprep.subr.bf16.mxu0 0
        %1371 = vmatpush1.bf16.xpose.msra.mxu0 0
        %1372 = vmatprep.subr.bf16.mxu0 0
        %1373 = vmatpush1.bf16.xpose.msra.mxu0 0
        %1374 = vmatprep.subr.bf16.mxu0 0
        %1375 = vmatpush1.bf16.xpose.msra.mxu0 0
        %1376 = vmatprep.subr.bf16.mxu0 0
        %1377 = vmatpush1.bf16.xpose.msra.mxu0 0
        %1378 = vmatprep.subr.bf16.mxu0 0
        %1379 = vmatpush1.bf16.xpose.msra.mxu0 %v1368
        %1380 = vmatprep.subr.bf16.mxu0 0
        %1381 = vmatpush1.bf16.xpose.msra.mxu0 %v1365
        %1382 = vmatprep.subr.bf16.mxu0 0
        %1383 = vmatpush1.bf16.xpose.msra.mxu0 %v1362
        %1384 = vmatprep.subr.bf16.mxu0 0
        %1385 = vmatpush1.bf16.xpose.msra.mxu0 %v1359
        %1386 = vmatprep.subr.bf16.mxu0 0
        %1387 = vmatpush2.bf16.xpose.msra.mxu0 0
        %1388 = vmatprep.subr.bf16.mxu0 0
        %1389 = vmatpush2.bf16.xpose.msra.mxu0 0
        %1390 = vmatprep.subr.bf16.mxu0 0
        %1391 = vmatpush2.bf16.xpose.msra.mxu0 0
        %1392 = vmatprep.subr.bf16.mxu0 0
        %1393 = vmatpush2.bf16.xpose.msra.mxu0 0
        %1394 = vmatprep.subr.bf16.mxu0 0
        %1395 = vmatpush2.bf16.xpose.msra.mxu0 0
        %1396 = vmatprep.subr.bf16.mxu0 0
        %1397 = vmatpush2.bf16.xpose.msra.mxu0 0
        %1398 = vmatprep.subr.bf16.mxu0 0
        %1399 = vmatpush2.bf16.xpose.msra.mxu0 0
        %1400 = vmatprep.subr.bf16.mxu0 0
        %1401 = vmatpush2.bf16.xpose.msra.mxu0 0
        %1402 = vmatprep.mubr.bf16.mxu0 0
        %1403 = vmatmul.mubr.bf16.gmra.mxu0 %v1347
        %v1404 = vpop.f32.mrf.mxu0
        %v1405 = vadd.f32 0.0, %v1404
        %v1406 = vpop.f32.mrf.mxu0
        %v1407 = vpop.f32.mrf.mxu0
        %v1408 = vadd.f32 0.0, %v1407
        %v1409 = vpop.f32.mrf.mxu0
        %1410 = vmatprep.mubr.bf16.mxu0 0
        %1411 = vmatmul.mubr.bf16.gmra.mxu0 %v1350
        %v1412 = vpop.f32.mrf.mxu0
        %v1413 = vadd.f32 0.0, %v1412
        %v1414 = vpop.f32.mrf.mxu0
        %v1415 = vpop.f32.mrf.mxu0
        %v1416 = vadd.f32 0.0, %v1415
        %v1417 = vpop.f32.mrf.mxu0
        %1418 = vmatprep.mubr.bf16.mxu0 0
        %1419 = vmatmul.mubr.bf16.gmra.mxu0 %v1353
        %v1420 = vpop.f32.mrf.mxu0
        %v1421 = vadd.f32 0.0, %v1420
        %v1422 = vpop.f32.mrf.mxu0
        %v1423 = vpop.f32.mrf.mxu0
        %v1424 = vadd.f32 0.0, %v1423
        %v1425 = vpop.f32.mrf.mxu0
        %1426 = vmatprep.mubr.bf16.mxu0 0
        %1427 = vmatmul.mubr.bf16.gmra.mxu0 %v1356
        %v1428 = vpop.f32.mrf.mxu0
        %v1429 = vadd.f32 0.0, %v1428
        %v1430 = vpop.f32.mrf.mxu0
        %v1431 = vpop.f32.mrf.mxu0
        %v1432 = vadd.f32 0.0, %v1431
        %v1433 = vpop.f32.mrf.mxu0
        %1434 = vdwg.mxu0
        %v1435 = vmul.f32 %v1405, 0.35355338
        %v1436 = vmul.f32 %v1408, 0.35355338
        %v1437 = vmul.f32 %v1413, 0.35355338
        %v1438 = vmul.f32 %v1416, 0.35355338
        %v1439 = vmul.f32 %v1421, 0.35355338
        %v1440 = vmul.f32 %v1424, 0.35355338
        %v1441 = vmul.f32 %v1429, 0.35355338
        %v1442 = vmul.f32 %v1432, 0.35355338
        %s1443 = scalar_lea.vmem %s3, 192
        %v1444 = vld [vmem:[%s1443] sm:$0xff]
        %v1445 = vld [vmem:[%s1443 + $0x8] sm:$0xff]
        %v1446 = vld [vmem:[%s1443 + $0x10] sm:$0xff]
        %v1447 = vld [vmem:[%s1443 + $0x18] sm:$0xff]
        %v1448 = vld [vmem:[%s1443 + $0x20] sm:$0xff]
        %v1449 = vld [vmem:[%s1443 + $0x28] sm:$0xff]
        %v1450 = vld [vmem:[%s1443 + $0x30] sm:$0xff]
        %v1451 = vld [vmem:[%s1443 + $0x38] sm:$0xff]
        %v1452 = vadd.f32 %v1435, %v1444
        %v1453 = vadd.f32 %v1436, %v1445
        %v1454 = vadd.f32 %v1437, %v1446
        %v1455 = vadd.f32 %v1438, %v1447
        %v1456 = vadd.f32 %v1439, %v1448
        %v1457 = vadd.f32 %v1440, %v1449
        %v1458 = vadd.f32 %v1441, %v1450
        %v1459 = vadd.f32 %v1442, %v1451
        %v1460 = vsel %vm526, %v1452, -inf
        %1461 = vmax.xlane.f32.xlu0 %v1460
        %v1462 = vpop.xlane.xlu0 %1461
        %v1463 = vsel %vm526, %v1453, -inf
        %1464 = vmax.xlane.f32.xlu0 %v1463
        %v1465 = vpop.xlane.xlu0 %1464
        %v1466 = vsel %vm526, %v1454, -inf
        %1467 = vmax.xlane.f32.xlu0 %v1466
        %v1468 = vpop.xlane.xlu0 %1467
        %v1469 = vsel %vm526, %v1455, -inf
        %1470 = vmax.xlane.f32.xlu0 %v1469
        %v1471 = vpop.xlane.xlu0 %1470
        %v1472 = vsel %vm526, %v1456, -inf
        %1473 = vmax.xlane.f32.xlu0 %v1472
        %v1474 = vpop.xlane.xlu0 %1473
        %v1475 = vsel %vm526, %v1457, -inf
        %1476 = vmax.xlane.f32.xlu0 %v1475
        %v1477 = vpop.xlane.xlu0 %1476
        %v1478 = vsel %vm526, %v1458, -inf
        %1479 = vmax.xlane.f32.xlu0 %v1478
        %v1480 = vpop.xlane.xlu0 %1479
        %v1481 = vsel %vm526, %v1459, -inf
        %1482 = vmax.xlane.f32.xlu0 %v1481
        %v1483 = vpop.xlane.xlu0 %1482
        %v1484 = vsub.f32 %v1452, %v1462
        %v1485 = vsub.f32 %v1453, %v1465
        %v1486 = vsub.f32 %v1454, %v1468
        %v1487 = vsub.f32 %v1455, %v1471
        %v1488 = vsub.f32 %v1456, %v1474
        %v1489 = vsub.f32 %v1457, %v1477
        %v1490 = vsub.f32 %v1458, %v1480
        %v1491 = vsub.f32 %v1459, %v1483
        %v1492 = vmul.f32 %v1484, 1.442695
        %v1493 = vpow.pop %v1492
        %v1494 = vmul.f32 %v1485, 1.442695
        %v1495 = vpow.pop %v1494
        %v1496 = vmul.f32 %v1486, 1.442695
        %v1497 = vpow.pop %v1496
        %v1498 = vmul.f32 %v1487, 1.442695
        %v1499 = vpow.pop %v1498
        %v1500 = vmul.f32 %v1488, 1.442695
        %v1501 = vpow.pop %v1500
        %v1502 = vmul.f32 %v1489, 1.442695
        %v1503 = vpow.pop %v1502
        %v1504 = vmul.f32 %v1490, 1.442695
        %v1505 = vpow.pop %v1504
        %v1506 = vmul.f32 %v1491, 1.442695
        %v1507 = vpow.pop %v1506
        %v1508 = vsel %vm526, %v1493, 0.0
        %1509 = vadd.xlane.f32.xlu0 %v1508
        %v1510 = vpop.xlane.xlu0 %1509
        %v1511 = vsel %vm526, %v1495, 0.0
        %1512 = vadd.xlane.f32.xlu0 %v1511
        %v1513 = vpop.xlane.xlu0 %1512
        %v1514 = vsel %vm526, %v1497, 0.0
        %1515 = vadd.xlane.f32.xlu0 %v1514
        %v1516 = vpop.xlane.xlu0 %1515
        %v1517 = vsel %vm526, %v1499, 0.0
        %1518 = vadd.xlane.f32.xlu0 %v1517
        %v1519 = vpop.xlane.xlu0 %1518
        %v1520 = vsel %vm526, %v1501, 0.0
        %1521 = vadd.xlane.f32.xlu0 %v1520
        %v1522 = vpop.xlane.xlu0 %1521
        %v1523 = vsel %vm526, %v1503, 0.0
        %1524 = vadd.xlane.f32.xlu0 %v1523
        %v1525 = vpop.xlane.xlu0 %1524
        %v1526 = vsel %vm526, %v1505, 0.0
        %1527 = vadd.xlane.f32.xlu0 %v1526
        %v1528 = vpop.xlane.xlu0 %1527
        %v1529 = vsel %vm526, %v1507, 0.0
        %1530 = vadd.xlane.f32.xlu0 %v1529
        %v1531 = vpop.xlane.xlu0 %1530
        %v1532 = vrcp.pop %v1510
        %v1533 = vrcp.pop %v1513
        %v1534 = vrcp.pop %v1516
        %v1535 = vrcp.pop %v1519
        %v1536 = vrcp.pop %v1522
        %v1537 = vrcp.pop %v1525
        %v1538 = vrcp.pop %v1528
        %v1539 = vrcp.pop %v1531
        %v1540 = vmul.f32 %v1493, %v1532
        %v1541 = vmul.f32 %v1495, %v1533
        %v1542 = vmul.f32 %v1497, %v1534
        %v1543 = vmul.f32 %v1499, %v1535
        %v1544 = vmul.f32 %v1501, %v1536
        %v1545 = vmul.f32 %v1503, %v1537
        %v1546 = vmul.f32 %v1505, %v1538
        %v1547 = vmul.f32 %v1507, %v1539
        %v1548 = vpack.c.bf16 %v1541, %v1540
        %v1549 = vpack.c.bf16 %v1543, %v1542
        %v1550 = vpack.c.bf16 %v1545, %v1544
        %v1551 = vpack.c.bf16 %v1547, %v1546
        %1552 = vrot.lane.b32.xlu0 %v408, 104
        %v1553 = vpop.permute.xlu0 %1552
        %1554 = vrot.lane.b32.xlu0 %v409, 104
        %v1555 = vpop.permute.xlu0 %1554
        %1556 = vrot.lane.b32.xlu0 %v410, 104
        %v1557 = vpop.permute.xlu0 %1556
        %1558 = vrot.lane.b32.xlu0 %v411, 104
        %v1559 = vpop.permute.xlu0 %1558
        %v1565 = vsel %vm526, %v1548, 0
        %v1568 = vsel %vm526, %v1549, 0
        %v1571 = vsel %vm526, %v1550, 0
        %v1574 = vsel %vm526, %v1551, 0
        %1576 = vmatprep.subr.bf16.mxu0 0
        %1577 = vmatpush1.bf16.msra.mxu0 0
        %1578 = vmatprep.subr.bf16.mxu0 0
        %1579 = vmatpush1.bf16.msra.mxu0 0
        %1580 = vmatprep.subr.bf16.mxu0 0
        %1581 = vmatpush1.bf16.msra.mxu0 0
        %1582 = vmatprep.subr.bf16.mxu0 0
        %1583 = vmatpush1.bf16.msra.mxu0 0
        %1584 = vmatprep.subr.bf16.mxu0 0
        %1585 = vmatpush1.bf16.msra.mxu0 %v1559
        %1586 = vmatprep.subr.bf16.mxu0 0
        %1587 = vmatpush1.bf16.msra.mxu0 %v1557
        %1588 = vmatprep.subr.bf16.mxu0 0
        %1589 = vmatpush1.bf16.msra.mxu0 %v1555
        %1590 = vmatprep.subr.bf16.mxu0 0
        %1591 = vmatpush1.bf16.msra.mxu0 %v1553
        %1592 = vmatprep.subr.bf16.mxu0 0
        %1593 = vmatpush2.bf16.msra.mxu0 0
        %1594 = vmatprep.subr.bf16.mxu0 0
        %1595 = vmatpush2.bf16.msra.mxu0 0
        %1596 = vmatprep.subr.bf16.mxu0 0
        %1597 = vmatpush2.bf16.msra.mxu0 0
        %1598 = vmatprep.subr.bf16.mxu0 0
        %1599 = vmatpush2.bf16.msra.mxu0 0
        %1600 = vmatprep.subr.bf16.mxu0 0
        %1601 = vmatpush2.bf16.msra.mxu0 0
        %1602 = vmatprep.subr.bf16.mxu0 0
        %1603 = vmatpush2.bf16.msra.mxu0 0
        %1604 = vmatprep.subr.bf16.mxu0 0
        %1605 = vmatpush2.bf16.msra.mxu0 0
        %1606 = vmatprep.subr.bf16.mxu0 0
        %1607 = vmatpush2.bf16.msra.mxu0 0
        %1608 = vmatprep.mubr.bf16.mxu0 0
        %1609 = vmatmul.mubr.bf16.gmra.mxu0 %v1565
        %v1610 = vpop.f32.mrf.mxu0
        %v1611 = vadd.f32 0.0, %v1610
        %v1612 = vpop.f32.mrf.mxu0
        %v1613 = vpop.f32.mrf.mxu0
        %v1614 = vadd.f32 0.0, %v1613
        %v1615 = vpop.f32.mrf.mxu0
        %1616 = vmatprep.mubr.bf16.mxu0 0
        %1617 = vmatmul.mubr.bf16.gmra.mxu0 %v1568
        %v1618 = vpop.f32.mrf.mxu0
        %v1619 = vadd.f32 0.0, %v1618
        %v1620 = vpop.f32.mrf.mxu0
        %v1621 = vpop.f32.mrf.mxu0
        %v1622 = vadd.f32 0.0, %v1621
        %v1623 = vpop.f32.mrf.mxu0
        %1624 = vmatprep.mubr.bf16.mxu0 0
        %1625 = vmatmul.mubr.bf16.gmra.mxu0 %v1571
        %v1626 = vpop.f32.mrf.mxu0
        %v1627 = vadd.f32 0.0, %v1626
        %v1628 = vpop.f32.mrf.mxu0
        %v1629 = vpop.f32.mrf.mxu0
        %v1630 = vadd.f32 0.0, %v1629
        %v1631 = vpop.f32.mrf.mxu0
        %1632 = vmatprep.mubr.bf16.mxu0 0
        %1633 = vmatmul.mubr.bf16.gmra.mxu0 %v1574
        %v1634 = vpop.f32.mrf.mxu0
        %v1635 = vadd.f32 0.0, %v1634
        %v1636 = vpop.f32.mrf.mxu0
        %v1637 = vpop.f32.mrf.mxu0
        %v1638 = vadd.f32 0.0, %v1637
        %v1639 = vpop.f32.mrf.mxu0
        %1640 = vdwg.mxu0
        %1649 = vrot.lane.b32.xlu0 %v989, 8
        %v1650 = vpop.permute.xlu0 %1649
        %1651 = vrot.lane.b32.xlu0 %v992, 8
        %v1652 = vpop.permute.xlu0 %1651
        %1653 = vrot.lane.b32.xlu0 %v997, 8
        %v1654 = vpop.permute.xlu0 %1653
        %1655 = vrot.lane.b32.xlu0 %v1000, 8
        %v1656 = vpop.permute.xlu0 %1655
        %1657 = vrot.lane.b32.xlu0 %v1005, 8
        %v1658 = vpop.permute.xlu0 %1657
        %1659 = vrot.lane.b32.xlu0 %v1008, 8
        %v1660 = vpop.permute.xlu0 %1659
        %1661 = vrot.lane.b32.xlu0 %v1013, 8
        %v1662 = vpop.permute.xlu0 %1661
        %1663 = vrot.lane.b32.xlu0 %v1016, 8
        %v1664 = vpop.permute.xlu0 %1663
        %1681 = vrot.lane.b32.xlu0 %v1300, 16
        %v1682 = vpop.permute.xlu0 %1681
        %1683 = vrot.lane.b32.xlu0 %v1303, 16
        %v1684 = vpop.permute.xlu0 %1683
        %1685 = vrot.lane.b32.xlu0 %v1308, 16
        %v1686 = vpop.permute.xlu0 %1685
        %1687 = vrot.lane.b32.xlu0 %v1311, 16
        %v1688 = vpop.permute.xlu0 %1687
        %1689 = vrot.lane.b32.xlu0 %v1316, 16
        %v1690 = vpop.permute.xlu0 %1689
        %1691 = vrot.lane.b32.xlu0 %v1319, 16
        %v1692 = vpop.permute.xlu0 %1691
        %1693 = vrot.lane.b32.xlu0 %v1324, 16
        %v1694 = vpop.permute.xlu0 %1693
        %1695 = vrot.lane.b32.xlu0 %v1327, 16
        %v1696 = vpop.permute.xlu0 %1695
        %1713 = vrot.lane.b32.xlu0 %v1611, 24
        %v1714 = vpop.permute.xlu0 %1713
        %1715 = vrot.lane.b32.xlu0 %v1614, 24
        %v1716 = vpop.permute.xlu0 %1715
        %1717 = vrot.lane.b32.xlu0 %v1619, 24
        %v1718 = vpop.permute.xlu0 %1717
        %1719 = vrot.lane.b32.xlu0 %v1622, 24
        %v1720 = vpop.permute.xlu0 %1719
        %1721 = vrot.lane.b32.xlu0 %v1627, 24
        %v1722 = vpop.permute.xlu0 %1721
        %1723 = vrot.lane.b32.xlu0 %v1630, 24
        %v1724 = vpop.permute.xlu0 %1723
        %1725 = vrot.lane.b32.xlu0 %v1635, 24
        %v1726 = vpop.permute.xlu0 %1725
        %1727 = vrot.lane.b32.xlu0 %v1638, 24
        %v1728 = vpop.permute.xlu0 %1727
        %v1737 = vsel %vm412, %v666, %v1650
        %v1738 = vsel %vm412, %v669, %v1652
        %v1739 = vsel %vm412, %v674, %v1654
        %v1740 = vsel %vm412, %v677, %v1656
        %v1741 = vsel %vm412, %v682, %v1658
        %v1742 = vsel %vm412, %v685, %v1660
        %v1743 = vsel %vm412, %v690, %v1662
        %v1744 = vsel %vm412, %v693, %v1664
        %vm1745 = vcmask 130048
        %v1746 = vsel %vm1745, %v1737, %v1682
        %v1747 = vsel %vm1745, %v1738, %v1684
        %v1748 = vsel %vm1745, %v1739, %v1686
        %v1749 = vsel %vm1745, %v1740, %v1688
        %v1750 = vsel %vm1745, %v1741, %v1690
        %v1751 = vsel %vm1745, %v1742, %v1692
        %v1752 = vsel %vm1745, %v1743, %v1694
        %v1753 = vsel %vm1745, %v1744, %v1696
        %vm1754 = vcmask 195584
        %v1755 = vsel %vm1754, %v1746, %v1714
        %v1756 = vsel %vm1754, %v1747, %v1716
        %v1757 = vsel %vm1754, %v1748, %v1718
        %v1758 = vsel %vm1754, %v1749, %v1720
        %v1759 = vsel %vm1754, %v1750, %v1722
        %v1760 = vsel %vm1754, %v1751, %v1724
        %v1761 = vsel %vm1754, %v1752, %v1726
        %v1762 = vsel %vm1754, %v1753, %v1728
        %v1763 = vpack.c.bf16 %v1756, %v1755
        %v1764 = vpack.c.bf16 %v1758, %v1757
        %v1765 = vpack.c.bf16 %v1760, %v1759
        %v1766 = vpack.c.bf16 %v1762, %v1761
        %v1767 = vld [vmem:[#allocation2] sm:$0xf]
        %v1768 = vld [vmem:[#allocation2 + $0x4] sm:$0xf]
        %v1769 = vld [vmem:[#allocation2 + $0x8] sm:$0xf]
        %v1770 = vld [vmem:[#allocation2 + $0xc] sm:$0xf]
        %v1775 = vunpack.c.l.b16 %v1767
        %v1776 = vunpack.c.l.b16 %v1768
        %v1777 = vunpack.c.l.b16 %v1769
        %v1778 = vunpack.c.l.b16 %v1770
        %v1779 = vpack.c.b16 %v1776, %v1775
        %v1780 = vpack.c.b16 %v1778, %v1777
        %vm1783 = vcmask 261120
        %v1785 = vsel %vm1783, %v1763, 0
        %v1788 = vsel %vm1783, %v1764, 0
        %v1791 = vsel %vm1783, %v1765, 0
        %v1794 = vsel %vm1783, %v1766, 0
        %1796 = vmatprep.subr.bf16.mxu0 0
        %1797 = vmatpush1.bf16.msra.mxu0 0
        %1798 = vmatprep.subr.bf16.mxu0 0
        %1799 = vmatpush1.bf16.msra.mxu0 0
        %1800 = vmatprep.subr.bf16.mxu0 0
        %1801 = vmatpush1.bf16.msra.mxu0 0
        %1802 = vmatprep.subr.bf16.mxu0 0
        %1803 = vmatpush1.bf16.msra.mxu0 0
        %1804 = vmatprep.subr.bf16.mxu0 0
        %1805 = vmatpush1.bf16.msra.mxu0 0
        %1806 = vmatprep.subr.bf16.mxu0 0
        %1807 = vmatpush1.bf16.msra.mxu0 0
        %1808 = vmatprep.subr.bf16.mxu0 0
        %1809 = vmatpush1.bf16.msra.mxu0 %v1780
        %1810 = vmatprep.subr.bf16.mxu0 0
        %1811 = vmatpush1.bf16.msra.mxu0 %v1779
        %1812 = vmatprep.subr.bf16.mxu0 0
        %1813 = vmatpush2.bf16.msra.mxu0 0
        %1814 = vmatprep.subr.bf16.mxu0 0
        %1815 = vmatpush2.bf16.msra.mxu0 0
        %1816 = vmatprep.subr.bf16.mxu0 0
        %1817 = vmatpush2.bf16.msra.mxu0 0
        %1818 = vmatprep.subr.bf16.mxu0 0
        %1819 = vmatpush2.bf16.msra.mxu0 0
        %1820 = vmatprep.subr.bf16.mxu0 0
        %1821 = vmatpush2.bf16.msra.mxu0 0
        %1822 = vmatprep.subr.bf16.mxu0 0
        %1823 = vmatpush2.bf16.msra.mxu0 0
        %1824 = vmatprep.subr.bf16.mxu0 0
        %1825 = vmatpush2.bf16.msra.mxu0 0
        %1826 = vmatprep.subr.bf16.mxu0 0
        %1827 = vmatpush2.bf16.msra.mxu0 0
        %1828 = vmatprep.mubr.bf16.mxu0 0
        %1829 = vmatmul.mubr.bf16.gmra.mxu0 %v1785
        %v1830 = vpop.f32.mrf.mxu0
        %v1831 = vadd.f32 0.0, %v1830
        %v1832 = vpop.f32.mrf.mxu0
        %v1833 = vpop.f32.mrf.mxu0
        %v1834 = vadd.f32 0.0, %v1833
        %v1835 = vpop.f32.mrf.mxu0
        %1836 = vmatprep.mubr.bf16.mxu0 0
        %1837 = vmatmul.mubr.bf16.gmra.mxu0 %v1788
        %v1838 = vpop.f32.mrf.mxu0
        %v1839 = vadd.f32 0.0, %v1838
        %v1840 = vpop.f32.mrf.mxu0
        %v1841 = vpop.f32.mrf.mxu0
        %v1842 = vadd.f32 0.0, %v1841
        %v1843 = vpop.f32.mrf.mxu0
        %1844 = vmatprep.mubr.bf16.mxu0 0
        %1845 = vmatmul.mubr.bf16.gmra.mxu0 %v1791
        %v1846 = vpop.f32.mrf.mxu0
        %v1847 = vadd.f32 0.0, %v1846
        %v1848 = vpop.f32.mrf.mxu0
        %v1849 = vpop.f32.mrf.mxu0
        %v1850 = vadd.f32 0.0, %v1849
        %v1851 = vpop.f32.mrf.mxu0
        %1852 = vmatprep.mubr.bf16.mxu0 0
        %1853 = vmatmul.mubr.bf16.gmra.mxu0 %v1794
        %v1854 = vpop.f32.mrf.mxu0
        %v1855 = vadd.f32 0.0, %v1854
        %v1856 = vpop.f32.mrf.mxu0
        %v1857 = vpop.f32.mrf.mxu0
        %v1858 = vadd.f32 0.0, %v1857
        %v1859 = vpop.f32.mrf.mxu0
        %1860 = vdwg.mxu0
        %1861 = vst.msk [vmem:[%s349] sm:$0xff] %vm1783, %v1831
        %1862 = vst.msk [vmem:[%s349 + $0x8] sm:$0xff] %vm1783, %v1834
        %1863 = vst.msk [vmem:[%s349 + $0x10] sm:$0xff] %vm1783, %v1839
        %1864 = vst.msk [vmem:[%s349 + $0x18] sm:$0xff] %vm1783, %v1842
        %1865 = vst.msk [vmem:[%s349 + $0x20] sm:$0xff] %vm1783, %v1847
        %1866 = vst.msk [vmem:[%s349 + $0x28] sm:$0xff] %vm1783, %v1850
        %1867 = vst.msk [vmem:[%s349 + $0x30] sm:$0xff] %vm1783, %v1855
        %1868 = vst.msk [vmem:[%s349 + $0x38] sm:$0xff] %vm1783, %v1858
        %s1869 = smul.u32 8, %s22
        %p1870 = scmp.lt.s32.totalorder %s21, 1
        %s1871 = scalar_select %p1870, %s21, 1
        %p1872 = scmp.lt.s32.totalorder %s1869, 7
        %s1873 = scalar_select %p1872, %s1869, 7
        %s1874 = smul.addr %s1871, 8
        %s1875 = sadd.s32 %s1873, %s1874
        %s1876 = smul.addr %s1875, 8
        %s1877 = scalar_lea.vmem %s5, %s1876
        // Predicated region
        $region45: #{_lambda_.4} parent=39 // pred_check
          %p1878 = pneg %p175
        $region46: #{_lambda_.4} parent=39 // pred_check_branch
          %1880 = sbr.rel (%p1878) target = $region48
        $region47: #{_lambda_.4} parent=39 // pred_region
          %s1881 = smul.u32 8, %s22
        $region48: #{_lambda_.4} parent=39 // pred_fallthru
          _
      $region40: #{_lambda_.4} parent=5 // pred_fallthru
        _
      %p1882 = scmp.le.s32.totalorder 2, %s12
      // Predicated region
      $region49: #{_lambda_.4} parent=5 // pred_check
        %p1883 = pneg %p1882
      $region50: #{_lambda_.4} parent=5 // pred_check_branch
        %1885 = sbr.rel (%p1883) target = $region52
      $region51: #{_lambda_.4} parent=5 // pred_region
        %s1886 = ssub.s32 %s12, 2
        // Predicated region
        $region53: #{_lambda_.4} parent=51 // pred_check
          %p1887 = pneg %p181
        $region54: #{_lambda_.4} parent=51 // pred_check_branch
          %1889 = sbr.rel (%p1887) target = $region56
        $region55: #{_lambda_.4} parent=51 // pred_region
          %s1890 = smul.u32 8, %s24
          %p1891 = scmp.lt.s32.totalorder %s23, 1
          %s1892 = scalar_select %p1891, %s23, 1
          %p1893 = scmp.lt.s32.totalorder %s1890, 7
          %s1894 = scalar_select %p1893, %s1890, 7
          %s1895 = smul.addr %s1892, 8
          %s1896 = sadd.s32 %s1894, %s1895
          %s1897 = smul.addr %s1896, 8
          %s1898 = scalar_lea.vmem %s5, %s1897
        $region56: #{_lambda_.4} parent=51 // pred_fallthru
          _
      $region52: #{_lambda_.4} parent=5 // pred_fallthru
        _
    $region6: #{_lambda_.4} parent=1 // loop_footer
      %s16 = sadd.s32 1, %s12
    $region7: #{_lambda_.4} parent=1 // loop_footer_branch
      %11 = sbr.rel target = $region3
    $region8: #{_lambda_.4} parent=1 // loop_exit
      _
    %1899 = vsyncpa [#allocation3], 1
    %s1900 = scalar_lea.sflag [#allocation3], 1
    %1901 = vsyncpa %s1900, 1

</llo_original>
